<compile_context>
chip_gen: v5e
topology: v5e:2x2
jax: 0.10.0
libtpu: 0.0.40
codegen_flags: <defaults>
</compile_context>

<pallas_src>
import functools

import jax
import jax.numpy as jnp
from jax.experimental import pallas as pl
from jax.experimental.pallas import tpu as pltpu

LANE = 128


def _fused_gcn_kernel(adj_ref, xw1_ref, dinv_ref, b1_ref, w2_ref, b2_ref, out_ref,
                      *, tile_n, valid_cols):
    """Fused 2-layer GCN for one row tile.

    adj_ref : [n_pad, n_pad]  bf16  unnormalized integer adjacency (exact in bf16)
    xw1_ref : [n_pad, h_pad]  bf16  D^{-1/2} * (X @ W1)
    dinv_ref: [n_pad, 1]      f32   D^{-1/2}
    b1_ref  : [1, h_pad]      f32
    w2_ref  : [h_pad, o_pad]  bf16
    b2_ref  : [1, o_pad]      f32
    out_ref : [tile_n, o_pad] f32   log_softmax(H2) rows for this tile
    """
    i = pl.program_id(0)
    row0 = pl.multiple_of(i * tile_n, tile_n)

    adj = adj_ref[...]                    # [n_pad, n_pad] bf16
    dinv = dinv_ref[...]                  # [n_pad, 1] f32

    # ---- Layer 1 (full graph, recomputed per row tile so the row axis stays
    # "parallel" for v7x megacore; at this size the redundant matmul is negligible).
    agg1 = jnp.dot(adj, xw1_ref[...], preferred_element_type=jnp.float32)
    h1 = jnp.maximum(dinv * agg1 + b1_ref[...], 0.0)
    # Dropout(p=0.5, training=False) is identity at inference.
    # Fold the next layer's source-side D^{-1/2} into H1 before the bf16 cast.
    h1s = (dinv * h1).astype(jnp.bfloat16)            # [n_pad, h_pad]

    # ---- Layer 2, this row tile only: slice the resident adjacency in VMEM.
    adj_rows = adj_ref[pl.ds(row0, tile_n), :]         # [tile_n, n_pad] bf16
    agg2 = jnp.dot(adj_rows, h1s, preferred_element_type=jnp.float32)
    d_rows = dinv_ref[pl.ds(row0, tile_n), :]          # [tile_n, 1] f32
    h2 = d_rows * jnp.dot(agg2.astype(jnp.bfloat16), w2_ref[...],
                          preferred_element_type=jnp.float32) + b2_ref[...]

    # ---- log_softmax over the real output columns (padded columns masked).
    col = jax.lax.broadcasted_iota(jnp.int32, h2.shape, 1)
    h2 = jnp.where(col < valid_cols, h2, -jnp.inf)
    m = jnp.max(h2, axis=1, keepdims=True)
    z = h2 - m
    lse = jnp.log(jnp.sum(jnp.exp(z), axis=1, keepdims=True))
    out_ref[...] = (z - lse).astype(out_ref.dtype)


def gcn_forward(x, edge_index, w1, b1, w2, b2, *, tile_n=256):
    """x: [N, C_in] f32, edge_index: [2, E] int32. Returns [N, C_out] f32."""
    n, c_in = x.shape
    hidden = w1.shape[1]
    c_out = w2.shape[1]

    # --- plain-JAX glue: PyG gcn_norm-style adjacency (kept UNNORMALIZED for the
    # kernel; D^{-1/2} folded in separately for exact bf16 streaming of counts) ---
    src, dst = edge_index[0], edge_index[1]
    adj = jnp.zeros((n, n), jnp.float32).at[dst, src].add(1.0)   # M[dst, src]
    diag = jnp.diagonal(adj)
    adj = adj + jnp.diag(jnp.where(diag > 0.0, 0.0, 1.0))        # add *remaining* self loops
    deg = jnp.sum(adj, axis=1)
    d_inv_sqrt = jnp.where(deg > 0.0, jax.lax.rsqrt(deg), 0.0)

    # Pre-multiply X @ W1 (tiny) and fold the source-side D^{-1/2} into it.
    xw1 = d_inv_sqrt[:, None] * (x @ w1)

    # --- pad to TPU-friendly shapes (zeros do not change the math) ---
    n_pad = max(pl.cdiv(n, tile_n), 1) * tile_n
    hidden_pad = pl.cdiv(hidden, LANE) * LANE
    c_out_pad = pl.cdiv(c_out, LANE) * LANE

    adj_p = jnp.pad(adj, ((0, n_pad - n), (0, n_pad - n))).astype(jnp.bfloat16)
    xw1_p = jnp.pad(xw1, ((0, n_pad - n), (0, hidden_pad - hidden))).astype(jnp.bfloat16)
    dinv_p = jnp.pad(d_inv_sqrt[:, None], ((0, n_pad - n), (0, 0))).astype(jnp.float32)
    b1_p = jnp.pad(b1.reshape(1, -1), ((0, 0), (0, hidden_pad - hidden))).astype(jnp.float32)
    w2_p = jnp.pad(w2, ((0, hidden_pad - hidden), (0, c_out_pad - c_out))).astype(jnp.bfloat16)
    b2_p = jnp.pad(b2.reshape(1, -1), ((0, 0), (0, c_out_pad - c_out))).astype(jnp.float32)

    steps = n_pad // tile_n

    kernel = functools.partial(_fused_gcn_kernel, tile_n=tile_n, valid_cols=c_out)

    flops = (steps * 2 * n_pad * n_pad * hidden_pad      # layer-1 agg (recomputed/tile)
             + 2 * n_pad * n_pad * hidden_pad            # layer-2 agg
             + 2 * n_pad * hidden_pad * c_out_pad)       # W2 epilogue
    transcendentals = n_pad * c_out_pad
    bytes_accessed = (n_pad * n_pad * 2                  # bf16 adjacency (resident, once)
                      + n_pad * hidden_pad * 2           # bf16 XW1 (resident, once)
                      + n_pad * 4 + hidden_pad * 4 + c_out_pad * 4
                      + hidden_pad * c_out_pad * 2
                      + n_pad * c_out_pad * 4)           # f32 output

    out = pl.pallas_call(
        kernel,
        out_shape=jax.ShapeDtypeStruct((n_pad, c_out_pad), jnp.float32),
        grid_spec=pltpu.PrefetchScalarGridSpec(
            num_scalar_prefetch=0,
            grid=(steps,),
            in_specs=[
                pl.BlockSpec((n_pad, n_pad), lambda i: (0, 0)),           # adj (resident)
                pl.BlockSpec((n_pad, hidden_pad), lambda i: (0, 0)),      # D^{-1/2} X W1
                pl.BlockSpec((n_pad, 1), lambda i: (0, 0)),               # D^{-1/2}
                pl.BlockSpec((1, hidden_pad), lambda i: (0, 0)),          # b1
                pl.BlockSpec((hidden_pad, c_out_pad), lambda i: (0, 0)),  # W2 (bf16)
                pl.BlockSpec((1, c_out_pad), lambda i: (0, 0)),           # b2
            ],
            out_specs=pl.BlockSpec((tile_n, c_out_pad), lambda i: (i, 0)),
        ),
        compiler_params=pltpu.CompilerParams(
            dimension_semantics=("parallel",),           # >=2 row tiles -> both v7x TCs
            vmem_limit_bytes=32 * 1024 * 1024,
        ),
        cost_estimate=pl.CostEstimate(flops=flops,
                                      transcendentals=transcendentals,
                                      bytes_accessed=bytes_accessed),
    )(adj_p, xw1_p, dinv_p, b1_p, w2_p, b2_p)

    return out[:n, :c_out]


if __name__ == "__main__":
    key = jax.random.PRNGKey(0)
    k_x, k_e, k_w1, k_w2 = jax.random.split(key, 4)

    # Small shapes implied by the module: N nodes, in -> hidden -> out channels.
    N, C_IN, HIDDEN, C_OUT = 300, 16, 32, 8
    E = 1500

    x = jax.random.normal(k_x, (N, C_IN), dtype=jnp.float32)
    edge_index = jax.random.randint(k_e, (2, E), 0, N, dtype=jnp.int32)

    # Deterministic parameter init (GCNConv: glorot weight, zero bias).
    def glorot(k, shape):
        fan_in, fan_out = shape
        limit = jnp.sqrt(6.0 / (fan_in + fan_out))
        return jax.random.uniform(k, shape, jnp.float32, -limit, limit)

    w1 = glorot(k_w1, (C_IN, HIDDEN))
    b1 = jnp.zeros((HIDDEN,), jnp.float32)
    w2 = glorot(k_w2, (HIDDEN, C_OUT))
    b2 = jnp.zeros((C_OUT,), jnp.float32)

    gcn = jax.jit(gcn_forward)
    out = gcn(x, edge_index, w1, b1, w2, b2)
    jax.block_until_ready(out)

    # --- pure-JAX f32 reference for a correctness sanity check ---
    src, dst = edge_index[0], edge_index[1]
    adj = jnp.zeros((N, N), jnp.float32).at[dst, src].add(1.0)
    diag = jnp.diagonal(adj)
    adj = adj + jnp.diag(jnp.where(diag > 0.0, 0.0, 1.0))
    deg = jnp.sum(adj, axis=1)
    dis = jnp.where(deg > 0.0, 1.0 / jnp.sqrt(deg), 0.0)
    a_hat = adj * dis[:, None] * dis[None, :]
    h1_ref = jnp.maximum(a_hat @ (x @ w1) + b1, 0.0)
    h2_ref = a_hat @ (h1_ref @ w2) + b2
    ref = jax.nn.log_softmax(h2_ref, axis=1)

    assert out.shape == (N, C_OUT)
    row_sums = jnp.sum(jnp.exp(out), axis=1)
    assert bool(jnp.all(jnp.abs(row_sums - 1.0) < 1e-3))
    assert bool(jnp.max(jnp.abs(out - ref)) < 0.05), float(jnp.max(jnp.abs(out - ref)))
    print("KERNEL_OK")
</pallas_src>

<mosaic_0001>
module attributes {stable_mosaic.version = 11 : i64} {
  func.func @_fused_gcn_kernel(%arg0: i32, %arg1: memref<512x512xbf16, #tpu.memory_space<vmem>>, %arg2: memref<512x128xbf16, #tpu.memory_space<vmem>>, %arg3: memref<512x1xf32, #tpu.memory_space<vmem>>, %arg4: memref<1x128xf32, #tpu.memory_space<vmem>>, %arg5: memref<128x128xbf16, #tpu.memory_space<vmem>>, %arg6: memref<1x128xf32, #tpu.memory_space<vmem>>, %arg7: memref<256x128xf32, #tpu.memory_space<vmem>>) attributes {dimension_semantics = [#tpu.dimension_semantics<parallel>], iteration_bounds = array<i64: 2>, scalar_prefetch = 0 : i64, scratch_operands = 0 : i64, tpu.core_type = #tpu.core_type<tc>, window_params = [{pipeline_mode = #tpu.pipeline_mode<synchronous>, transform_indices = @transform_0, window_bounds = array<i64: 512, 512>}, {pipeline_mode = #tpu.pipeline_mode<synchronous>, transform_indices = @transform_1, window_bounds = array<i64: 512, 128>}, {pipeline_mode = #tpu.pipeline_mode<synchronous>, transform_indices = @transform_2, window_bounds = array<i64: 512, 1>}, {pipeline_mode = #tpu.pipeline_mode<synchronous>, transform_indices = @transform_3, window_bounds = array<i64: 1, 128>}, {pipeline_mode = #tpu.pipeline_mode<synchronous>, transform_indices = @transform_4, window_bounds = array<i64: 128, 128>}, {pipeline_mode = #tpu.pipeline_mode<synchronous>, transform_indices = @transform_5, window_bounds = array<i64: 1, 128>}, {transform_indices = @transform_6, window_bounds = array<i64: 256, 128>}]} {
    %c256_i32 = arith.constant 256 : i32
    %0 = arith.muli %arg0, %c256_i32 : i32
    %1 = tpu.assume_multiple %0, 256 : i32
    %c0 = arith.constant 0 : index
    %c0_0 = arith.constant 0 : index
    %2 = vector.load %arg1[%c0, %c0_0] : memref<512x512xbf16, #tpu.memory_space<vmem>>, vector<512x512xbf16>
    %c0_1 = arith.constant 0 : index
    %c0_2 = arith.constant 0 : index
    %3 = vector.load %arg3[%c0_1, %c0_2] : memref<512x1xf32, #tpu.memory_space<vmem>>, vector<512x1xf32>
    %c0_3 = arith.constant 0 : index
    %c0_4 = arith.constant 0 : index
    %4 = vector.load %arg2[%c0_3, %c0_4] : memref<512x128xbf16, #tpu.memory_space<vmem>>, vector<512x128xbf16>
    %cst = arith.constant dense<0.000000e+00> : vector<512x128xf32>
    %5 = tpu.matmul %2, %4, %cst {dimension_numbers = #tpu.dot_dimension_numbers<[1], [0], [0], [1], [0, 0, 1, 1], [], []>} : vector<512x512xbf16>, vector<512x128xbf16>, vector<512x128xf32> -> vector<512x128xf32>
    %6 = vector.broadcast %3 : vector<512x1xf32> to vector<512x128xf32>
    %7 = arith.mulf %6, %5 : vector<512x128xf32>
    %c0_5 = arith.constant 0 : index
    %c0_6 = arith.constant 0 : index
    %8 = vector.load %arg4[%c0_5, %c0_6] : memref<1x128xf32, #tpu.memory_space<vmem>>, vector<1x128xf32>
    %9 = vector.broadcast %8 : vector<1x128xf32> to vector<512x128xf32>
    %10 = arith.addf %7, %9 : vector<512x128xf32>
    %cst_7 = arith.constant 0.000000e+00 : f32
    %11 = vector.broadcast %cst_7 : f32 to vector<512x128xf32>
    %12 = arith.maximumf %10, %11 : vector<512x128xf32>
    %13 = vector.broadcast %3 : vector<512x1xf32> to vector<512x128xf32>
    %14 = arith.mulf %13, %12 : vector<512x128xf32>
    %15 = arith.truncf %14 : vector<512x128xf32> to vector<512x128xbf16>
    %16 = arith.index_cast %1 : i32 to index
    %c0_8 = arith.constant 0 : index
    %17 = vector.load %arg1[%16, %c0_8] : memref<512x512xbf16, #tpu.memory_space<vmem>>, vector<256x512xbf16>
    %cst_9 = arith.constant dense<0.000000e+00> : vector<256x128xf32>
    %18 = tpu.matmul %17, %15, %cst_9 {dimension_numbers = #tpu.dot_dimension_numbers<[1], [0], [0], [1], [0, 0, 1, 1], [], []>} : vector<256x512xbf16>, vector<512x128xbf16>, vector<256x128xf32> -> vector<256x128xf32>
    %19 = arith.index_cast %1 : i32 to index
    %c0_10 = arith.constant 0 : index
    %20 = vector.load %arg3[%19, %c0_10] : memref<512x1xf32, #tpu.memory_space<vmem>>, vector<256x1xf32>
    %21 = arith.truncf %18 : vector<256x128xf32> to vector<256x128xbf16>
    %c0_11 = arith.constant 0 : index
    %c0_12 = arith.constant 0 : index
    %22 = vector.load %arg5[%c0_11, %c0_12] : memref<128x128xbf16, #tpu.memory_space<vmem>>, vector<128x128xbf16>
    %cst_13 = arith.constant dense<0.000000e+00> : vector<256x128xf32>
    %23 = tpu.matmul %21, %22, %cst_13 {dimension_numbers = #tpu.dot_dimension_numbers<[1], [0], [0], [1], [0, 0, 1, 1], [], []>} : vector<256x128xbf16>, vector<128x128xbf16>, vector<256x128xf32> -> vector<256x128xf32>
    %24 = vector.broadcast %20 : vector<256x1xf32> to vector<256x128xf32>
    %25 = arith.mulf %24, %23 : vector<256x128xf32>
    %c0_14 = arith.constant 0 : index
    %c0_15 = arith.constant 0 : index
    %26 = vector.load %arg6[%c0_14, %c0_15] : memref<1x128xf32, #tpu.memory_space<vmem>>, vector<1x128xf32>
    %27 = vector.broadcast %26 : vector<1x128xf32> to vector<256x128xf32>
    %28 = arith.addf %25, %27 : vector<256x128xf32>
    %29 = tpu.iota {dimensions = array<i32: 1>} : vector<256x128xi32>
    %c8_i32 = arith.constant 8 : i32
    %30 = vector.broadcast %c8_i32 : i32 to vector<256x128xi32>
    %31 = arith.cmpi slt, %29, %30 : vector<256x128xi32>
    %cst_16 = arith.constant 0xFF800000 : f32
    %32 = vector.broadcast %cst_16 : f32 to vector<256x128xf32>
    %33 = arith.select %31, %28, %32 : vector<256x128xi1>, vector<256x128xf32>
    %cst_17 = arith.constant dense<0xFF800000> : vector<256xf32>
    %34 = vector.multi_reduction <maximumf>, %33, %cst_17 [1] : vector<256x128xf32> to vector<256xf32>
    %35 = vector.shape_cast %34 : vector<256xf32> to vector<256x1xf32>
    %36 = vector.broadcast %35 : vector<256x1xf32> to vector<256x128xf32>
    %37 = arith.subf %33, %36 : vector<256x128xf32>
    %38 = math.exp %37 : vector<256x128xf32>
    %cst_18 = arith.constant dense<0.000000e+00> : vector<256xf32>
    %39 = vector.multi_reduction <add>, %38, %cst_18 [1] : vector<256x128xf32> to vector<256xf32>
    %40 = vector.shape_cast %39 : vector<256xf32> to vector<256x1xf32>
    %41 = math.log %40 : vector<256x1xf32>
    %42 = vector.broadcast %41 : vector<256x1xf32> to vector<256x128xf32>
    %43 = arith.subf %37, %42 : vector<256x128xf32>
    %c0_19 = arith.constant 0 : index
    %c0_20 = arith.constant 0 : index
    %44 = vector.load %arg7[%c0_19, %c0_20] : memref<256x128xf32, #tpu.memory_space<vmem>>, vector<256x128xf32>
    tpu.vector_store %arg7[%c0_19, %c0_20], %43 {strides = array<i32>} : memref<256x128xf32, #tpu.memory_space<vmem>>, vector<256x128xf32>,
    return
  }
  func.func @transform_0(%arg0: i32) -> (i32, i32) {
    %c0_i32 = arith.constant 0 : i32
    %c0_i32_0 = arith.constant 0 : i32
    %c0_i32_1 = arith.constant 0 : i32
    return %c0_i32, %c0_i32_0 : i32, i32
  }
  func.func @transform_1(%arg0: i32) -> (i32, i32) {
    %c0_i32 = arith.constant 0 : i32
    %c0_i32_0 = arith.constant 0 : i32
    %c0_i32_1 = arith.constant 0 : i32
    return %c0_i32, %c0_i32_0 : i32, i32
  }
  func.func @transform_2(%arg0: i32) -> (i32, i32) {
    %c0_i32 = arith.constant 0 : i32
    %c0_i32_0 = arith.constant 0 : i32
    %c0_i32_1 = arith.constant 0 : i32
    return %c0_i32, %c0_i32_0 : i32, i32
  }
  func.func @transform_3(%arg0: i32) -> (i32, i32) {
    %c0_i32 = arith.constant 0 : i32
    %c0_i32_0 = arith.constant 0 : i32
    %c0_i32_1 = arith.constant 0 : i32
    return %c0_i32, %c0_i32_0 : i32, i32
  }
  func.func @transform_4(%arg0: i32) -> (i32, i32) {
    %c0_i32 = arith.constant 0 : i32
    %c0_i32_0 = arith.constant 0 : i32
    %c0_i32_1 = arith.constant 0 : i32
    return %c0_i32, %c0_i32_0 : i32, i32
  }
  func.func @transform_5(%arg0: i32) -> (i32, i32) {
    %c0_i32 = arith.constant 0 : i32
    %c0_i32_0 = arith.constant 0 : i32
    %c0_i32_1 = arith.constant 0 : i32
    return %c0_i32, %c0_i32_0 : i32, i32
  }
  func.func @transform_6(%arg0: i32) -> (i32, i32) {
    %c0_i32 = arith.constant 0 : i32
    %c0_i32_0 = arith.constant 0 : i32
    return %arg0, %c0_i32 : i32, i32
  }
}

</mosaic_0001>

<llo_original>
// kernel: gcn_forward.1
$region0: #{gcn_forward.1}
  #allocation0 [shape = 'u32[]', space=smem, size = 0x4, offset = 0x4, fixed_abs, tag = 'smem constant byte address 0x4 - core index']
  #allocation1 [shape = 'u32[72,128]{1,0:T(1,128)}', space=vmem, size = 0x9000, scoped, tag = 'internal scratch']
  %s0 = inlined_call_operand.vmem [shape: bf16[512,512], index: 0, kind: input, shape index: {}]
  %s1 = inlined_call_operand.vmem [shape: bf16[512,128], index: 1, kind: input, shape index: {}]
  %s2 = inlined_call_operand.vmem [shape: f32[512,1], index: 2, kind: input, shape index: {}]
  %s3 = inlined_call_operand.vmem [shape: f32[1,128], index: 3, kind: input, shape index: {}]
  %s4 = inlined_call_operand.vmem [shape: bf16[128,128], index: 4, kind: input, shape index: {}]
  %s5 = inlined_call_operand.vmem [shape: f32[1,128], index: 5, kind: input, shape index: {}]
  %s6 = inlined_call_operand.vmem [shape: f32[512,128], index: 6, kind: output, shape index: {}]
  %s7 = sld [smem:[#allocation0]]
  $region57: #{gcn_forward.1} parent=0
    _
  %s9 = ssub.s32 1, %s7
  %s10 = scalar_select 0, %s9, %s7
  loop: start=0, step=1, limit=4
  $region2: #{gcn_forward.1} parent=0 // loop_pre_header
    _
  $region3: #{gcn_forward.1} parent=0 // loop_header
    %s12 = sphi 0, %s16
    %p13 = scmp.ge.s32.totalorder %s12, 4
    %s20 = sphi 0, %s20
    %s22 = sphi 0, %s20
    %s23 = sphi 0, %s22
    %s37 = sphi 0, %s23
    %s41 = sphi 0, %s41
    %s43 = sphi 0, %s41
    %s44 = sphi 0, %s43
    %s58 = sphi 0, %s44
    %s62 = sphi 0, %s62
    %s64 = sphi 0, %s62
    %s65 = sphi 0, %s64
    %s79 = sphi 0, %s65
    %s83 = sphi 0, %s83
    %s85 = sphi 0, %s83
    %s86 = sphi 0, %s85
    %s100 = sphi 0, %s86
    %s104 = sphi 0, %s104
    %s106 = sphi 0, %s104
    %s107 = sphi 0, %s106
    %s121 = sphi 0, %s107
    %s125 = sphi 0, %s125
    %s127 = sphi 0, %s125
    %s128 = sphi 0, %s127
    %s142 = sphi 0, %s128
    %s148 = sphi 0, %s150
    %s151 = sphi 0, %s148
    %s152 = sphi 0, %s151
    %s168 = sphi 0, %s152
  $region4: #{gcn_forward.1} parent=0 // loop_header_branch
    %15 = sbr.rel (%p13) target = $region8
  $region5: #{gcn_forward.1} parent=0 // loop_body
    %s17 = ssub.s32 %s12, 1
    %s18 = ssub.s32 %s12, 2
    %s19 = sadd.s32 %s12, 1
    %s21 = sadd.s32 %s20, 1
    %p24 = scmp.eq.s32.totalorder %s12, 1
    %p25 = scmp.ne.s32.totalorder %s20, %s22
    %p26 = scmp.eq.s32.totalorder %s12, 0
    %p27 = por %p25, %p26
    %p28 = scmp.ne.s32.totalorder %s20, %s22
    %p29 = scmp.eq.s32.totalorder %s17, 1
    %p30 = por %p28, %p29
    %p31 = scmp.ne.s32.totalorder %s22, %s23
    %p32 = scmp.eq.s32.totalorder %s17, 0
    %p33 = por %p31, %p32
    %p34 = scmp.ne.s32.totalorder %s22, %s23
    %p35 = scmp.eq.s32.totalorder %s18, 1
    %p36 = por %p34, %p35
    %p38 = scmp.ne.s32.totalorder %s23, %s37
    %p39 = scmp.eq.s32.totalorder %s18, 0
    %p40 = por %p38, %p39
    %s42 = sadd.s32 %s41, 1
    %p45 = scmp.eq.s32.totalorder %s12, 1
    %p46 = scmp.ne.s32.totalorder %s41, %s43
    %p47 = scmp.eq.s32.totalorder %s12, 0
    %p48 = por %p46, %p47
    %p49 = scmp.ne.s32.totalorder %s41, %s43
    %p50 = scmp.eq.s32.totalorder %s17, 1
    %p51 = por %p49, %p50
    %p52 = scmp.ne.s32.totalorder %s43, %s44
    %p53 = scmp.eq.s32.totalorder %s17, 0
    %p54 = por %p52, %p53
    %p55 = scmp.ne.s32.totalorder %s43, %s44
    %p56 = scmp.eq.s32.totalorder %s18, 1
    %p57 = por %p55, %p56
    %p59 = scmp.ne.s32.totalorder %s44, %s58
    %p60 = scmp.eq.s32.totalorder %s18, 0
    %p61 = por %p59, %p60
    %s63 = sadd.s32 %s62, 1
    %p66 = scmp.eq.s32.totalorder %s12, 1
    %p67 = scmp.ne.s32.totalorder %s62, %s64
    %p68 = scmp.eq.s32.totalorder %s12, 0
    %p69 = por %p67, %p68
    %p70 = scmp.ne.s32.totalorder %s62, %s64
    %p71 = scmp.eq.s32.totalorder %s17, 1
    %p72 = por %p70, %p71
    %p73 = scmp.ne.s32.totalorder %s64, %s65
    %p74 = scmp.eq.s32.totalorder %s17, 0
    %p75 = por %p73, %p74
    %p76 = scmp.ne.s32.totalorder %s64, %s65
    %p77 = scmp.eq.s32.totalorder %s18, 1
    %p78 = por %p76, %p77
    %p80 = scmp.ne.s32.totalorder %s65, %s79
    %p81 = scmp.eq.s32.totalorder %s18, 0
    %p82 = por %p80, %p81
    %s84 = sadd.s32 %s83, 1
    %p87 = scmp.eq.s32.totalorder %s12, 1
    %p88 = scmp.ne.s32.totalorder %s83, %s85
    %p89 = scmp.eq.s32.totalorder %s12, 0
    %p90 = por %p88, %p89
    %p91 = scmp.ne.s32.totalorder %s83, %s85
    %p92 = scmp.eq.s32.totalorder %s17, 1
    %p93 = por %p91, %p92
    %p94 = scmp.ne.s32.totalorder %s85, %s86
    %p95 = scmp.eq.s32.totalorder %s17, 0
    %p96 = por %p94, %p95
    %p97 = scmp.ne.s32.totalorder %s85, %s86
    %p98 = scmp.eq.s32.totalorder %s18, 1
    %p99 = por %p97, %p98
    %p101 = scmp.ne.s32.totalorder %s86, %s100
    %p102 = scmp.eq.s32.totalorder %s18, 0
    %p103 = por %p101, %p102
    %s105 = sadd.s32 %s104, 1
    %p108 = scmp.eq.s32.totalorder %s12, 1
    %p109 = scmp.ne.s32.totalorder %s104, %s106
    %p110 = scmp.eq.s32.totalorder %s12, 0
    %p111 = por %p109, %p110
    %p112 = scmp.ne.s32.totalorder %s104, %s106
    %p113 = scmp.eq.s32.totalorder %s17, 1
    %p114 = por %p112, %p113
    %p115 = scmp.ne.s32.totalorder %s106, %s107
    %p116 = scmp.eq.s32.totalorder %s17, 0
    %p117 = por %p115, %p116
    %p118 = scmp.ne.s32.totalorder %s106, %s107
    %p119 = scmp.eq.s32.totalorder %s18, 1
    %p120 = por %p118, %p119
    %p122 = scmp.ne.s32.totalorder %s107, %s121
    %p123 = scmp.eq.s32.totalorder %s18, 0
    %p124 = por %p122, %p123
    %s126 = sadd.s32 %s125, 1
    %p129 = scmp.eq.s32.totalorder %s12, 1
    %p130 = scmp.ne.s32.totalorder %s125, %s127
    %p131 = scmp.eq.s32.totalorder %s12, 0
    %p132 = por %p130, %p131
    %p133 = scmp.ne.s32.totalorder %s125, %s127
    %p134 = scmp.eq.s32.totalorder %s17, 1
    %p135 = por %p133, %p134
    %p136 = scmp.ne.s32.totalorder %s127, %s128
    %p137 = scmp.eq.s32.totalorder %s17, 0
    %p138 = por %p136, %p137
    %p139 = scmp.ne.s32.totalorder %s127, %s128
    %p140 = scmp.eq.s32.totalorder %s18, 1
    %p141 = por %p139, %p140
    %p143 = scmp.ne.s32.totalorder %s128, %s142
    %p144 = scmp.eq.s32.totalorder %s18, 0
    %p145 = por %p143, %p144
    %s146 = ssub.s32 %s12, %s19
    %p147 = scmp.eq.s32.totalorder %s146, 0
    %s149 = sadd.s32 %s148, 1
    %s150 = scalar_select %p147, %s148, %s149
    %p153 = pneg %p147
    %p154 = scmp.eq.s32.totalorder %s12, 1
    %p155 = por %p153, %p154
    %p156 = scmp.ne.s32.totalorder %s148, %s151
    %p157 = scmp.eq.s32.totalorder %s12, 0
    %p158 = por %p156, %p157
    %p159 = scmp.ne.s32.totalorder %s148, %s151
    %p160 = scmp.eq.s32.totalorder %s17, 1
    %p161 = por %p159, %p160
    %p162 = scmp.ne.s32.totalorder %s151, %s152
    %p163 = scmp.eq.s32.totalorder %s17, 0
    %p164 = por %p162, %p163
    %p165 = scmp.ne.s32.totalorder %s151, %s152
    %p166 = scmp.eq.s32.totalorder %s18, 1
    %p167 = por %p165, %p166
    %p169 = scmp.ne.s32.totalorder %s152, %s168
    %p170 = scmp.eq.s32.totalorder %s18, 0
    %p171 = por %p169, %p170
    %p172 = scmp.le.s32.totalorder 1, %s12
    %p173 = scmp.lt.s32.totalorder %s12, 3
    %p174 = pnand %p172, %p173
    %p175 = pneg %p174
    // Predicated region
    $region9: #{gcn_forward.1} parent=5 // pred_check
      _
    $region10: #{gcn_forward.1} parent=5 // pred_check_branch
      %177 = sbr.rel (%p174) target = $region12
    $region11: #{gcn_forward.1} parent=5 // pred_region
      %s178 = ssub.s32 %s12, 1
      // Predicated region
      $region13: #{gcn_forward.1} parent=11 // pred_check
        %p179 = pneg %p33
      $region14: #{gcn_forward.1} parent=11 // pred_check_branch
        %181 = sbr.rel (%p179) target = $region16
      $region15: #{gcn_forward.1} parent=11 // pred_region
        _
      $region16: #{gcn_forward.1} parent=11 // pred_fallthru
        _
      // Predicated region
      $region17: #{gcn_forward.1} parent=11 // pred_check
        %p182 = pneg %p54
      $region18: #{gcn_forward.1} parent=11 // pred_check_branch
        %184 = sbr.rel (%p182) target = $region20
      $region19: #{gcn_forward.1} parent=11 // pred_region
        _
      $region20: #{gcn_forward.1} parent=11 // pred_fallthru
        _
      // Predicated region
      $region21: #{gcn_forward.1} parent=11 // pred_check
        %p185 = pneg %p75
      $region22: #{gcn_forward.1} parent=11 // pred_check_branch
        %187 = sbr.rel (%p185) target = $region24
      $region23: #{gcn_forward.1} parent=11 // pred_region
        _
      $region24: #{gcn_forward.1} parent=11 // pred_fallthru
        _
      // Predicated region
      $region25: #{gcn_forward.1} parent=11 // pred_check
        %p188 = pneg %p96
      $region26: #{gcn_forward.1} parent=11 // pred_check_branch
        %190 = sbr.rel (%p188) target = $region28
      $region27: #{gcn_forward.1} parent=11 // pred_region
        _
      $region28: #{gcn_forward.1} parent=11 // pred_fallthru
        _
      // Predicated region
      $region29: #{gcn_forward.1} parent=11 // pred_check
        %p191 = pneg %p117
      $region30: #{gcn_forward.1} parent=11 // pred_check_branch
        %193 = sbr.rel (%p191) target = $region32
      $region31: #{gcn_forward.1} parent=11 // pred_region
        _
      $region32: #{gcn_forward.1} parent=11 // pred_fallthru
        _
      // Predicated region
      $region33: #{gcn_forward.1} parent=11 // pred_check
        %p194 = pneg %p138
      $region34: #{gcn_forward.1} parent=11 // pred_check_branch
        %196 = sbr.rel (%p194) target = $region36
      $region35: #{gcn_forward.1} parent=11 // pred_region
        _
      $region36: #{gcn_forward.1} parent=11 // pred_fallthru
        _
    $region12: #{gcn_forward.1} parent=5 // pred_fallthru
      _
    %p197 = scmp.lt.s32.totalorder %s12, 2
    // Predicated region
    $region37: #{gcn_forward.1} parent=5 // pred_check
      %p198 = pneg %p197
    $region38: #{gcn_forward.1} parent=5 // pred_check_branch
      %200 = sbr.rel (%p198) target = $region40
    $region39: #{gcn_forward.1} parent=5 // pred_region
      _
    $region40: #{gcn_forward.1} parent=5 // pred_fallthru
      _
    %p201 = scmp.le.s32.totalorder 1, %s12
    %p202 = scmp.lt.s32.totalorder %s12, 3
    %p203 = pnand %p201, %p202
    %p204 = pneg %p203
    // Predicated region
    $region41: #{gcn_forward.1} parent=5 // pred_check
      _
    $region42: #{gcn_forward.1} parent=5 // pred_check_branch
      %206 = sbr.rel (%p203) target = $region44
    $region43: #{gcn_forward.1} parent=5 // pred_region
      %s207 = ssub.s32 %s12, 1
      %p208 = pneg %p33
      %p209 = pneg %p30
      %p210 = pneg %p54
      %p211 = pneg %p51
      %p212 = pneg %p75
      %p213 = pneg %p72
      %p214 = pneg %p96
      %p215 = pneg %p93
      %p216 = pneg %p117
      %p217 = pneg %p114
      %p218 = pneg %p138
      %p219 = pneg %p135
      %p220 = pneg %p164
      %p221 = pneg %p161
      %s222 = smul.u32 32, %s17
      %p223 = scmp.lt.s32.totalorder %s222, 63
      %s224 = scalar_select %p223, %s222, 63
      %s225 = smul.addr %s224, 8
      %s226 = scalar_lea.vmem %s6, %s225
      %s227 = smul.u32 32, %s17
      %p228 = scmp.lt.s32.totalorder %s227, 63
      %s229 = scalar_select %p228, %s227, 63
      %s230 = smul.addr %s229, 8
      %s231 = scalar_lea.vmem %s6, %s230
      %s232 = smul.u32 32, %s17
      %s233 = smul.u32 %s17, 256
      %v234 = vld [vmem:[%s0] sm:$0xff]
      %v235 = vld [vmem:[%s0 + $0x8] sm:$0xff]
      %v236 = vld [vmem:[%s0 + $0x10] sm:$0xff]
      %v237 = vld [vmem:[%s0 + $0x18] sm:$0xff]
      %v238 = vld [vmem:[%s0 + $0x20] sm:$0xff]
      %v239 = vld [vmem:[%s0 + $0x28] sm:$0xff]
      %v240 = vld [vmem:[%s0 + $0x30] sm:$0xff]
      %v241 = vld [vmem:[%s0 + $0x38] sm:$0xff]
      %v242 = vld [vmem:[%s0 + $0x40] sm:$0xff]
      %v243 = vld [vmem:[%s0 + $0x48] sm:$0xff]
      %v244 = vld [vmem:[%s0 + $0x50] sm:$0xff]
      %v245 = vld [vmem:[%s0 + $0x58] sm:$0xff]
      %v246 = vld [vmem:[%s0 + $0x60] sm:$0xff]
      %v247 = vld [vmem:[%s0 + $0x68] sm:$0xff]
      %v248 = vld [vmem:[%s0 + $0x70] sm:$0xff]
      %v249 = vld [vmem:[%s0 + $0x78] sm:$0xff]
      %v250 = vld [vmem:[%s0 + $0x80] sm:$0xff]
      %v251 = vld [vmem:[%s0 + $0x88] sm:$0xff]
      %v252 = vld [vmem:[%s0 + $0x90] sm:$0xff]
      %v253 = vld [vmem:[%s0 + $0x98] sm:$0xff]
      %v254 = vld [vmem:[%s0 + $0xa0] sm:$0xff]
      %v255 = vld [vmem:[%s0 + $0xa8] sm:$0xff]
      %v256 = vld [vmem:[%s0 + $0xb0] sm:$0xff]
      %v257 = vld [vmem:[%s0 + $0xb8] sm:$0xff]
      %v258 = vld [vmem:[%s0 + $0xc0] sm:$0xff]
      %v259 = vld [vmem:[%s0 + $0xc8] sm:$0xff]
      %v260 = vld [vmem:[%s0 + $0xd0] sm:$0xff]
      %v261 = vld [vmem:[%s0 + $0xd8] sm:$0xff]
      %v262 = vld [vmem:[%s0 + $0xe0] sm:$0xff]
      %v263 = vld [vmem:[%s0 + $0xe8] sm:$0xff]
      %v264 = vld [vmem:[%s0 + $0xf0] sm:$0xff]
      %v265 = vld [vmem:[%s0 + $0xf8] sm:$0xff]
      %v266 = vld [vmem:[%s0 + $0x100] sm:$0xff]
      %v267 = vld [vmem:[%s0 + $0x108] sm:$0xff]
      %v268 = vld [vmem:[%s0 + $0x110] sm:$0xff]
      %v269 = vld [vmem:[%s0 + $0x118] sm:$0xff]
      %v270 = vld [vmem:[%s0 + $0x120] sm:$0xff]
      %v271 = vld [vmem:[%s0 + $0x128] sm:$0xff]
      %v272 = vld [vmem:[%s0 + $0x130] sm:$0xff]
      %v273 = vld [vmem:[%s0 + $0x138] sm:$0xff]
      %v274 = vld [vmem:[%s0 + $0x140] sm:$0xff]
      %v275 = vld [vmem:[%s0 + $0x148] sm:$0xff]
      %v276 = vld [vmem:[%s0 + $0x150] sm:$0xff]
      %v277 = vld [vmem:[%s0 + $0x158] sm:$0xff]
      %v278 = vld [vmem:[%s0 + $0x160] sm:$0xff]
      %v279 = vld [vmem:[%s0 + $0x168] sm:$0xff]
      %v280 = vld [vmem:[%s0 + $0x170] sm:$0xff]
      %v281 = vld [vmem:[%s0 + $0x178] sm:$0xff]
      %v282 = vld [vmem:[%s0 + $0x180] sm:$0xff]
      %v283 = vld [vmem:[%s0 + $0x188] sm:$0xff]
      %v284 = vld [vmem:[%s0 + $0x190] sm:$0xff]
      %v285 = vld [vmem:[%s0 + $0x198] sm:$0xff]
      %v286 = vld [vmem:[%s0 + $0x1a0] sm:$0xff]
      %v287 = vld [vmem:[%s0 + $0x1a8] sm:$0xff]
      %v288 = vld [vmem:[%s0 + $0x1b0] sm:$0xff]
      %v289 = vld [vmem:[%s0 + $0x1b8] sm:$0xff]
      %v290 = vld [vmem:[%s0 + $0x1c0] sm:$0xff]
      %v291 = vld [vmem:[%s0 + $0x1c8] sm:$0xff]
      %v292 = vld [vmem:[%s0 + $0x1d0] sm:$0xff]
      %v293 = vld [vmem:[%s0 + $0x1d8] sm:$0xff]
      %v294 = vld [vmem:[%s0 + $0x1e0] sm:$0xff]
      %v295 = vld [vmem:[%s0 + $0x1e8] sm:$0xff]
      %v296 = vld [vmem:[%s0 + $0x1f0] sm:$0xff]
      %v297 = vld [vmem:[%s0 + $0x1f8] sm:$0xff]
      %v298 = vld [vmem:[%s0 + $0x200] sm:$0xff]
      %v299 = vld [vmem:[%s0 + $0x208] sm:$0xff]
      %v300 = vld [vmem:[%s0 + $0x210] sm:$0xff]
      %v301 = vld [vmem:[%s0 + $0x218] sm:$0xff]
      %v302 = vld [vmem:[%s0 + $0x220] sm:$0xff]
      %v303 = vld [vmem:[%s0 + $0x228] sm:$0xff]
      %v304 = vld [vmem:[%s0 + $0x230] sm:$0xff]
      %v305 = vld [vmem:[%s0 + $0x238] sm:$0xff]
      %v306 = vld [vmem:[%s0 + $0x240] sm:$0xff]
      %v307 = vld [vmem:[%s0 + $0x248] sm:$0xff]
      %v308 = vld [vmem:[%s0 + $0x250] sm:$0xff]
      %v309 = vld [vmem:[%s0 + $0x258] sm:$0xff]
      %v310 = vld [vmem:[%s0 + $0x260] sm:$0xff]
      %v311 = vld [vmem:[%s0 + $0x268] sm:$0xff]
      %v312 = vld [vmem:[%s0 + $0x270] sm:$0xff]
      %v313 = vld [vmem:[%s0 + $0x278] sm:$0xff]
      %v314 = vld [vmem:[%s0 + $0x280] sm:$0xff]
      %v315 = vld [vmem:[%s0 + $0x288] sm:$0xff]
      %v316 = vld [vmem:[%s0 + $0x290] sm:$0xff]
      %v317 = vld [vmem:[%s0 + $0x298] sm:$0xff]
      %v318 = vld [vmem:[%s0 + $0x2a0] sm:$0xff]
      %v319 = vld [vmem:[%s0 + $0x2a8] sm:$0xff]
      %v320 = vld [vmem:[%s0 + $0x2b0] sm:$0xff]
      %v321 = vld [vmem:[%s0 + $0x2b8] sm:$0xff]
      %v322 = vld [vmem:[%s0 + $0x2c0] sm:$0xff]
      %v323 = vld [vmem:[%s0 + $0x2c8] sm:$0xff]
      %v324 = vld [vmem:[%s0 + $0x2d0] sm:$0xff]
      %v325 = vld [vmem:[%s0 + $0x2d8] sm:$0xff]
      %v326 = vld [vmem:[%s0 + $0x2e0] sm:$0xff]
      %v327 = vld [vmem:[%s0 + $0x2e8] sm:$0xff]
      %v328 = vld [vmem:[%s0 + $0x2f0] sm:$0xff]
      %v329 = vld [vmem:[%s0 + $0x2f8] sm:$0xff]
      %v330 = vld [vmem:[%s0 + $0x300] sm:$0xff]
      %v331 = vld [vmem:[%s0 + $0x308] sm:$0xff]
      %v332 = vld [vmem:[%s0 + $0x310] sm:$0xff]
      %v333 = vld [vmem:[%s0 + $0x318] sm:$0xff]
      %v334 = vld [vmem:[%s0 + $0x320] sm:$0xff]
      %v335 = vld [vmem:[%s0 + $0x328] sm:$0xff]
      %v336 = vld [vmem:[%s0 + $0x330] sm:$0xff]
      %v337 = vld [vmem:[%s0 + $0x338] sm:$0xff]
      %v338 = vld [vmem:[%s0 + $0x340] sm:$0xff]
      %v339 = vld [vmem:[%s0 + $0x348] sm:$0xff]
      %v340 = vld [vmem:[%s0 + $0x350] sm:$0xff]
      %v341 = vld [vmem:[%s0 + $0x358] sm:$0xff]
      %v342 = vld [vmem:[%s0 + $0x360] sm:$0xff]
      %v343 = vld [vmem:[%s0 + $0x368] sm:$0xff]
      %v344 = vld [vmem:[%s0 + $0x370] sm:$0xff]
      %v345 = vld [vmem:[%s0 + $0x378] sm:$0xff]
      %v346 = vld [vmem:[%s0 + $0x380] sm:$0xff]
      %v347 = vld [vmem:[%s0 + $0x388] sm:$0xff]
      %v348 = vld [vmem:[%s0 + $0x390] sm:$0xff]
      %v349 = vld [vmem:[%s0 + $0x398] sm:$0xff]
      %v350 = vld [vmem:[%s0 + $0x3a0] sm:$0xff]
      %v351 = vld [vmem:[%s0 + $0x3a8] sm:$0xff]
      %v352 = vld [vmem:[%s0 + $0x3b0] sm:$0xff]
      %v353 = vld [vmem:[%s0 + $0x3b8] sm:$0xff]
      %v354 = vld [vmem:[%s0 + $0x3c0] sm:$0xff]
      %v355 = vld [vmem:[%s0 + $0x3c8] sm:$0xff]
      %v356 = vld [vmem:[%s0 + $0x3d0] sm:$0xff]
      %v357 = vld [vmem:[%s0 + $0x3d8] sm:$0xff]
      %v358 = vld [vmem:[%s0 + $0x3e0] sm:$0xff]
      %v359 = vld [vmem:[%s0 + $0x3e8] sm:$0xff]
      %v360 = vld [vmem:[%s0 + $0x3f0] sm:$0xff]
      %v361 = vld [vmem:[%s0 + $0x3f8] sm:$0xff]
      %v362 = vld [vmem:[%s2] sm:$0xff]
      %v363 = vld [vmem:[%s2 + $0x8] sm:$0xff]
      %v364 = vld [vmem:[%s2 + $0x10] sm:$0xff]
      %v365 = vld [vmem:[%s2 + $0x18] sm:$0xff]
      %v366 = vld [vmem:[%s2 + $0x20] sm:$0xff]
      %v367 = vld [vmem:[%s2 + $0x28] sm:$0xff]
      %v368 = vld [vmem:[%s2 + $0x30] sm:$0xff]
      %v369 = vld [vmem:[%s2 + $0x38] sm:$0xff]
      %v370 = vld [vmem:[%s2 + $0x40] sm:$0xff]
      %v371 = vld [vmem:[%s2 + $0x48] sm:$0xff]
      %v372 = vld [vmem:[%s2 + $0x50] sm:$0xff]
      %v373 = vld [vmem:[%s2 + $0x58] sm:$0xff]
      %v374 = vld [vmem:[%s2 + $0x60] sm:$0xff]
      %v375 = vld [vmem:[%s2 + $0x68] sm:$0xff]
      %v376 = vld [vmem:[%s2 + $0x70] sm:$0xff]
      %v377 = vld [vmem:[%s2 + $0x78] sm:$0xff]
      %v378 = vld [vmem:[%s2 + $0x80] sm:$0xff]
      %v379 = vld [vmem:[%s2 + $0x88] sm:$0xff]
      %v380 = vld [vmem:[%s2 + $0x90] sm:$0xff]
      %v381 = vld [vmem:[%s2 + $0x98] sm:$0xff]
      %v382 = vld [vmem:[%s2 + $0xa0] sm:$0xff]
      %v383 = vld [vmem:[%s2 + $0xa8] sm:$0xff]
      %v384 = vld [vmem:[%s2 + $0xb0] sm:$0xff]
      %v385 = vld [vmem:[%s2 + $0xb8] sm:$0xff]
      %v386 = vld [vmem:[%s2 + $0xc0] sm:$0xff]
      %v387 = vld [vmem:[%s2 + $0xc8] sm:$0xff]
      %v388 = vld [vmem:[%s2 + $0xd0] sm:$0xff]
      %v389 = vld [vmem:[%s2 + $0xd8] sm:$0xff]
      %v390 = vld [vmem:[%s2 + $0xe0] sm:$0xff]
      %v391 = vld [vmem:[%s2 + $0xe8] sm:$0xff]
      %v392 = vld [vmem:[%s2 + $0xf0] sm:$0xff]
      %v393 = vld [vmem:[%s2 + $0xf8] sm:$0xff]
      %v394 = vld [vmem:[%s2 + $0x100] sm:$0xff]
      %v395 = vld [vmem:[%s2 + $0x108] sm:$0xff]
      %v396 = vld [vmem:[%s2 + $0x110] sm:$0xff]
      %v397 = vld [vmem:[%s2 + $0x118] sm:$0xff]
      %v398 = vld [vmem:[%s2 + $0x120] sm:$0xff]
      %v399 = vld [vmem:[%s2 + $0x128] sm:$0xff]
      %v400 = vld [vmem:[%s2 + $0x130] sm:$0xff]
      %v401 = vld [vmem:[%s2 + $0x138] sm:$0xff]
      %v402 = vld [vmem:[%s2 + $0x140] sm:$0xff]
      %v403 = vld [vmem:[%s2 + $0x148] sm:$0xff]
      %v404 = vld [vmem:[%s2 + $0x150] sm:$0xff]
      %v405 = vld [vmem:[%s2 + $0x158] sm:$0xff]
      %v406 = vld [vmem:[%s2 + $0x160] sm:$0xff]
      %v407 = vld [vmem:[%s2 + $0x168] sm:$0xff]
      %v408 = vld [vmem:[%s2 + $0x170] sm:$0xff]
      %v409 = vld [vmem:[%s2 + $0x178] sm:$0xff]
      %v410 = vld [vmem:[%s2 + $0x180] sm:$0xff]
      %v411 = vld [vmem:[%s2 + $0x188] sm:$0xff]
      %v412 = vld [vmem:[%s2 + $0x190] sm:$0xff]
      %v413 = vld [vmem:[%s2 + $0x198] sm:$0xff]
      %v414 = vld [vmem:[%s2 + $0x1a0] sm:$0xff]
      %v415 = vld [vmem:[%s2 + $0x1a8] sm:$0xff]
      %v416 = vld [vmem:[%s2 + $0x1b0] sm:$0xff]
      %v417 = vld [vmem:[%s2 + $0x1b8] sm:$0xff]
      %v418 = vld [vmem:[%s2 + $0x1c0] sm:$0xff]
      %v419 = vld [vmem:[%s2 + $0x1c8] sm:$0xff]
      %v420 = vld [vmem:[%s2 + $0x1d0] sm:$0xff]
      %v421 = vld [vmem:[%s2 + $0x1d8] sm:$0xff]
      %v422 = vld [vmem:[%s2 + $0x1e0] sm:$0xff]
      %v423 = vld [vmem:[%s2 + $0x1e8] sm:$0xff]
      %v424 = vld [vmem:[%s2 + $0x1f0] sm:$0xff]
      %v425 = vld [vmem:[%s2 + $0x1f8] sm:$0xff]
      %v426 = vld [vmem:[%s1] sm:$0xf]
      %v427 = vld [vmem:[%s1 + $0x4] sm:$0xf]
      %v428 = vld [vmem:[%s1 + $0x8] sm:$0xf]
      %v429 = vld [vmem:[%s1 + $0xc] sm:$0xf]
      %v430 = vld [vmem:[%s1 + $0x10] sm:$0xf]
      %v431 = vld [vmem:[%s1 + $0x14] sm:$0xf]
      %v432 = vld [vmem:[%s1 + $0x18] sm:$0xf]
      %v433 = vld [vmem:[%s1 + $0x1c] sm:$0xf]
      %v434 = vld [vmem:[%s1 + $0x20] sm:$0xf]
      %v435 = vld [vmem:[%s1 + $0x24] sm:$0xf]
      %v436 = vld [vmem:[%s1 + $0x28] sm:$0xf]
      %v437 = vld [vmem:[%s1 + $0x2c] sm:$0xf]
      %v438 = vld [vmem:[%s1 + $0x30] sm:$0xf]
      %v439 = vld [vmem:[%s1 + $0x34] sm:$0xf]
      %v440 = vld [vmem:[%s1 + $0x38] sm:$0xf]
      %v441 = vld [vmem:[%s1 + $0x3c] sm:$0xf]
      %v442 = vld [vmem:[%s1 + $0x40] sm:$0xf]
      %v443 = vld [vmem:[%s1 + $0x44] sm:$0xf]
      %v444 = vld [vmem:[%s1 + $0x48] sm:$0xf]
      %v445 = vld [vmem:[%s1 + $0x4c] sm:$0xf]
      %v446 = vld [vmem:[%s1 + $0x50] sm:$0xf]
      %v447 = vld [vmem:[%s1 + $0x54] sm:$0xf]
      %v448 = vld [vmem:[%s1 + $0x58] sm:$0xf]
      %v449 = vld [vmem:[%s1 + $0x5c] sm:$0xf]
      %v450 = vld [vmem:[%s1 + $0x60] sm:$0xf]
      %v451 = vld [vmem:[%s1 + $0x64] sm:$0xf]
      %v452 = vld [vmem:[%s1 + $0x68] sm:$0xf]
      %v453 = vld [vmem:[%s1 + $0x6c] sm:$0xf]
      %v454 = vld [vmem:[%s1 + $0x70] sm:$0xf]
      %v455 = vld [vmem:[%s1 + $0x74] sm:$0xf]
      %v456 = vld [vmem:[%s1 + $0x78] sm:$0xf]
      %v457 = vld [vmem:[%s1 + $0x7c] sm:$0xf]
      %v458 = vld [vmem:[%s1 + $0x80] sm:$0xf]
      %v459 = vld [vmem:[%s1 + $0x84] sm:$0xf]
      %v460 = vld [vmem:[%s1 + $0x88] sm:$0xf]
      %v461 = vld [vmem:[%s1 + $0x8c] sm:$0xf]
      %v462 = vld [vmem:[%s1 + $0x90] sm:$0xf]
      %v463 = vld [vmem:[%s1 + $0x94] sm:$0xf]
      %v464 = vld [vmem:[%s1 + $0x98] sm:$0xf]
      %v465 = vld [vmem:[%s1 + $0x9c] sm:$0xf]
      %v466 = vld [vmem:[%s1 + $0xa0] sm:$0xf]
      %v467 = vld [vmem:[%s1 + $0xa4] sm:$0xf]
      %v468 = vld [vmem:[%s1 + $0xa8] sm:$0xf]
      %v469 = vld [vmem:[%s1 + $0xac] sm:$0xf]
      %v470 = vld [vmem:[%s1 + $0xb0] sm:$0xf]
      %v471 = vld [vmem:[%s1 + $0xb4] sm:$0xf]
      %v472 = vld [vmem:[%s1 + $0xb8] sm:$0xf]
      %v473 = vld [vmem:[%s1 + $0xbc] sm:$0xf]
      %v474 = vld [vmem:[%s1 + $0xc0] sm:$0xf]
      %v475 = vld [vmem:[%s1 + $0xc4] sm:$0xf]
      %v476 = vld [vmem:[%s1 + $0xc8] sm:$0xf]
      %v477 = vld [vmem:[%s1 + $0xcc] sm:$0xf]
      %v478 = vld [vmem:[%s1 + $0xd0] sm:$0xf]
      %v479 = vld [vmem:[%s1 + $0xd4] sm:$0xf]
      %v480 = vld [vmem:[%s1 + $0xd8] sm:$0xf]
      %v481 = vld [vmem:[%s1 + $0xdc] sm:$0xf]
      %v482 = vld [vmem:[%s1 + $0xe0] sm:$0xf]
      %v483 = vld [vmem:[%s1 + $0xe4] sm:$0xf]
      %v484 = vld [vmem:[%s1 + $0xe8] sm:$0xf]
      %v485 = vld [vmem:[%s1 + $0xec] sm:$0xf]
      %v486 = vld [vmem:[%s1 + $0xf0] sm:$0xf]
      %v487 = vld [vmem:[%s1 + $0xf4] sm:$0xf]
      %v488 = vld [vmem:[%s1 + $0xf8] sm:$0xf]
      %v489 = vld [vmem:[%s1 + $0xfc] sm:$0xf]
      %v618 = vunpack.c.l.b16 %v234
      %v619 = vunpack.c.h.b16 %v234
      %v620 = vunpack.c.l.b16 %v235
      %v621 = vunpack.c.h.b16 %v235
      %v622 = vunpack.c.l.b16 %v236
      %v623 = vunpack.c.h.b16 %v236
      %v624 = vunpack.c.l.b16 %v237
      %v625 = vunpack.c.h.b16 %v237
      %v626 = vunpack.c.l.b16 %v238
      %v627 = vunpack.c.h.b16 %v238
      %v628 = vunpack.c.l.b16 %v239
      %v629 = vunpack.c.h.b16 %v239
      %v630 = vunpack.c.l.b16 %v240
      %v631 = vunpack.c.h.b16 %v240
      %v632 = vunpack.c.l.b16 %v241
      %v633 = vunpack.c.h.b16 %v241
      %v634 = vunpack.c.l.b16 %v242
      %v635 = vunpack.c.h.b16 %v242
      %v636 = vunpack.c.l.b16 %v243
      %v637 = vunpack.c.h.b16 %v243
      %v638 = vunpack.c.l.b16 %v244
      %v639 = vunpack.c.h.b16 %v244
      %v640 = vunpack.c.l.b16 %v245
      %v641 = vunpack.c.h.b16 %v245
      %v642 = vunpack.c.l.b16 %v246
      %v643 = vunpack.c.h.b16 %v246
      %v644 = vunpack.c.l.b16 %v247
      %v645 = vunpack.c.h.b16 %v247
      %v646 = vunpack.c.l.b16 %v248
      %v647 = vunpack.c.h.b16 %v248
      %v648 = vunpack.c.l.b16 %v249
      %v649 = vunpack.c.h.b16 %v249
      %v650 = vunpack.c.l.b16 %v250
      %v651 = vunpack.c.h.b16 %v250
      %v652 = vunpack.c.l.b16 %v251
      %v653 = vunpack.c.h.b16 %v251
      %v654 = vunpack.c.l.b16 %v252
      %v655 = vunpack.c.h.b16 %v252
      %v656 = vunpack.c.l.b16 %v253
      %v657 = vunpack.c.h.b16 %v253
      %v658 = vunpack.c.l.b16 %v254
      %v659 = vunpack.c.h.b16 %v254
      %v660 = vunpack.c.l.b16 %v255
      %v661 = vunpack.c.h.b16 %v255
      %v662 = vunpack.c.l.b16 %v256
      %v663 = vunpack.c.h.b16 %v256
      %v664 = vunpack.c.l.b16 %v257
      %v665 = vunpack.c.h.b16 %v257
      %v666 = vunpack.c.l.b16 %v258
      %v667 = vunpack.c.h.b16 %v258
      %v668 = vunpack.c.l.b16 %v259
      %v669 = vunpack.c.h.b16 %v259
      %v670 = vunpack.c.l.b16 %v260
      %v671 = vunpack.c.h.b16 %v260
      %v672 = vunpack.c.l.b16 %v261
      %v673 = vunpack.c.h.b16 %v261
      %v674 = vunpack.c.l.b16 %v262
      %v675 = vunpack.c.h.b16 %v262
      %v676 = vunpack.c.l.b16 %v263
      %v677 = vunpack.c.h.b16 %v263
      %v678 = vunpack.c.l.b16 %v264
      %v679 = vunpack.c.h.b16 %v264
      %v680 = vunpack.c.l.b16 %v265
      %v681 = vunpack.c.h.b16 %v265
      %v682 = vunpack.c.l.b16 %v266
      %v683 = vunpack.c.h.b16 %v266
      %v684 = vunpack.c.l.b16 %v267
      %v685 = vunpack.c.h.b16 %v267
      %v686 = vunpack.c.l.b16 %v268
      %v687 = vunpack.c.h.b16 %v268
      %v688 = vunpack.c.l.b16 %v269
      %v689 = vunpack.c.h.b16 %v269
      %v690 = vunpack.c.l.b16 %v270
      %v691 = vunpack.c.h.b16 %v270
      %v692 = vunpack.c.l.b16 %v271
      %v693 = vunpack.c.h.b16 %v271
      %v694 = vunpack.c.l.b16 %v272
      %v695 = vunpack.c.h.b16 %v272
      %v696 = vunpack.c.l.b16 %v273
      %v697 = vunpack.c.h.b16 %v273
      %v698 = vunpack.c.l.b16 %v274
      %v699 = vunpack.c.h.b16 %v274
      %v700 = vunpack.c.l.b16 %v275
      %v701 = vunpack.c.h.b16 %v275
      %v702 = vunpack.c.l.b16 %v276
      %v703 = vunpack.c.h.b16 %v276
      %v704 = vunpack.c.l.b16 %v277
      %v705 = vunpack.c.h.b16 %v277
      %v706 = vunpack.c.l.b16 %v278
      %v707 = vunpack.c.h.b16 %v278
      %v708 = vunpack.c.l.b16 %v279
      %v709 = vunpack.c.h.b16 %v279
      %v710 = vunpack.c.l.b16 %v280
      %v711 = vunpack.c.h.b16 %v280
      %v712 = vunpack.c.l.b16 %v281
      %v713 = vunpack.c.h.b16 %v281
      %v714 = vunpack.c.l.b16 %v282
      %v715 = vunpack.c.h.b16 %v282
      %v716 = vunpack.c.l.b16 %v283
      %v717 = vunpack.c.h.b16 %v283
      %v718 = vunpack.c.l.b16 %v284
      %v719 = vunpack.c.h.b16 %v284
      %v720 = vunpack.c.l.b16 %v285
      %v721 = vunpack.c.h.b16 %v285
      %v722 = vunpack.c.l.b16 %v286
      %v723 = vunpack.c.h.b16 %v286
      %v724 = vunpack.c.l.b16 %v287
      %v725 = vunpack.c.h.b16 %v287
      %v726 = vunpack.c.l.b16 %v288
      %v727 = vunpack.c.h.b16 %v288
      %v728 = vunpack.c.l.b16 %v289
      %v729 = vunpack.c.h.b16 %v289
      %v730 = vunpack.c.l.b16 %v290
      %v731 = vunpack.c.h.b16 %v290
      %v732 = vunpack.c.l.b16 %v291
      %v733 = vunpack.c.h.b16 %v291
      %v734 = vunpack.c.l.b16 %v292
      %v735 = vunpack.c.h.b16 %v292
      %v736 = vunpack.c.l.b16 %v293
      %v737 = vunpack.c.h.b16 %v293
      %v738 = vunpack.c.l.b16 %v294
      %v739 = vunpack.c.h.b16 %v294
      %v740 = vunpack.c.l.b16 %v295
      %v741 = vunpack.c.h.b16 %v295
      %v742 = vunpack.c.l.b16 %v296
      %v743 = vunpack.c.h.b16 %v296
      %v744 = vunpack.c.l.b16 %v297
      %v745 = vunpack.c.h.b16 %v297
      %v746 = vunpack.c.l.b16 %v298
      %v747 = vunpack.c.h.b16 %v298
      %v748 = vunpack.c.l.b16 %v299
      %v749 = vunpack.c.h.b16 %v299
      %v750 = vunpack.c.l.b16 %v300
      %v751 = vunpack.c.h.b16 %v300
      %v752 = vunpack.c.l.b16 %v301
      %v753 = vunpack.c.h.b16 %v301
      %v754 = vunpack.c.l.b16 %v302
      %v755 = vunpack.c.h.b16 %v302
      %v756 = vunpack.c.l.b16 %v303
      %v757 = vunpack.c.h.b16 %v303
      %v758 = vunpack.c.l.b16 %v304
      %v759 = vunpack.c.h.b16 %v304
      %v760 = vunpack.c.l.b16 %v305
      %v761 = vunpack.c.h.b16 %v305
      %v762 = vunpack.c.l.b16 %v306
      %v763 = vunpack.c.h.b16 %v306
      %v764 = vunpack.c.l.b16 %v307
      %v765 = vunpack.c.h.b16 %v307
      %v766 = vunpack.c.l.b16 %v308
      %v767 = vunpack.c.h.b16 %v308
      %v768 = vunpack.c.l.b16 %v309
      %v769 = vunpack.c.h.b16 %v309
      %v770 = vunpack.c.l.b16 %v310
      %v771 = vunpack.c.h.b16 %v310
      %v772 = vunpack.c.l.b16 %v311
      %v773 = vunpack.c.h.b16 %v311
      %v774 = vunpack.c.l.b16 %v312
      %v775 = vunpack.c.h.b16 %v312
      %v776 = vunpack.c.l.b16 %v313
      %v777 = vunpack.c.h.b16 %v313
      %v778 = vunpack.c.l.b16 %v314
      %v779 = vunpack.c.h.b16 %v314
      %v780 = vunpack.c.l.b16 %v315
      %v781 = vunpack.c.h.b16 %v315
      %v782 = vunpack.c.l.b16 %v316
      %v783 = vunpack.c.h.b16 %v316
      %v784 = vunpack.c.l.b16 %v317
      %v785 = vunpack.c.h.b16 %v317
      %v786 = vunpack.c.l.b16 %v318
      %v787 = vunpack.c.h.b16 %v318
      %v788 = vunpack.c.l.b16 %v319
      %v789 = vunpack.c.h.b16 %v319
      %v790 = vunpack.c.l.b16 %v320
      %v791 = vunpack.c.h.b16 %v320
      %v792 = vunpack.c.l.b16 %v321
      %v793 = vunpack.c.h.b16 %v321
      %v794 = vunpack.c.l.b16 %v322
      %v795 = vunpack.c.h.b16 %v322
      %v796 = vunpack.c.l.b16 %v323
      %v797 = vunpack.c.h.b16 %v323
      %v798 = vunpack.c.l.b16 %v324
      %v799 = vunpack.c.h.b16 %v324
      %v800 = vunpack.c.l.b16 %v325
      %v801 = vunpack.c.h.b16 %v325
      %v802 = vunpack.c.l.b16 %v326
      %v803 = vunpack.c.h.b16 %v326
      %v804 = vunpack.c.l.b16 %v327
      %v805 = vunpack.c.h.b16 %v327
      %v806 = vunpack.c.l.b16 %v328
      %v807 = vunpack.c.h.b16 %v328
      %v808 = vunpack.c.l.b16 %v329
      %v809 = vunpack.c.h.b16 %v329
      %v810 = vunpack.c.l.b16 %v330
      %v811 = vunpack.c.h.b16 %v330
      %v812 = vunpack.c.l.b16 %v331
      %v813 = vunpack.c.h.b16 %v331
      %v814 = vunpack.c.l.b16 %v332
      %v815 = vunpack.c.h.b16 %v332
      %v816 = vunpack.c.l.b16 %v333
      %v817 = vunpack.c.h.b16 %v333
      %v818 = vunpack.c.l.b16 %v334
      %v819 = vunpack.c.h.b16 %v334
      %v820 = vunpack.c.l.b16 %v335
      %v821 = vunpack.c.h.b16 %v335
      %v822 = vunpack.c.l.b16 %v336
      %v823 = vunpack.c.h.b16 %v336
      %v824 = vunpack.c.l.b16 %v337
      %v825 = vunpack.c.h.b16 %v337
      %v826 = vunpack.c.l.b16 %v338
      %v827 = vunpack.c.h.b16 %v338
      %v828 = vunpack.c.l.b16 %v339
      %v829 = vunpack.c.h.b16 %v339
      %v830 = vunpack.c.l.b16 %v340
      %v831 = vunpack.c.h.b16 %v340
      %v832 = vunpack.c.l.b16 %v341
      %v833 = vunpack.c.h.b16 %v341
      %v834 = vunpack.c.l.b16 %v342
      %v835 = vunpack.c.h.b16 %v342
      %v836 = vunpack.c.l.b16 %v343
      %v837 = vunpack.c.h.b16 %v343
      %v838 = vunpack.c.l.b16 %v344
      %v839 = vunpack.c.h.b16 %v344
      %v840 = vunpack.c.l.b16 %v345
      %v841 = vunpack.c.h.b16 %v345
      %v842 = vunpack.c.l.b16 %v346
      %v843 = vunpack.c.h.b16 %v346
      %v844 = vunpack.c.l.b16 %v347
      %v845 = vunpack.c.h.b16 %v347
      %v846 = vunpack.c.l.b16 %v348
      %v847 = vunpack.c.h.b16 %v348
      %v848 = vunpack.c.l.b16 %v349
      %v849 = vunpack.c.h.b16 %v349
      %v850 = vunpack.c.l.b16 %v350
      %v851 = vunpack.c.h.b16 %v350
      %v852 = vunpack.c.l.b16 %v351
      %v853 = vunpack.c.h.b16 %v351
      %v854 = vunpack.c.l.b16 %v352
      %v855 = vunpack.c.h.b16 %v352
      %v856 = vunpack.c.l.b16 %v353
      %v857 = vunpack.c.h.b16 %v353
      %v858 = vunpack.c.l.b16 %v354
      %v859 = vunpack.c.h.b16 %v354
      %v860 = vunpack.c.l.b16 %v355
      %v861 = vunpack.c.h.b16 %v355
      %v862 = vunpack.c.l.b16 %v356
      %v863 = vunpack.c.h.b16 %v356
      %v864 = vunpack.c.l.b16 %v357
      %v865 = vunpack.c.h.b16 %v357
      %v866 = vunpack.c.l.b16 %v358
      %v867 = vunpack.c.h.b16 %v358
      %v868 = vunpack.c.l.b16 %v359
      %v869 = vunpack.c.h.b16 %v359
      %v870 = vunpack.c.l.b16 %v360
      %v871 = vunpack.c.h.b16 %v360
      %v872 = vunpack.c.l.b16 %v361
      %v873 = vunpack.c.h.b16 %v361
      %v874 = vpack.c.b16 %v622, %v618
      %v875 = vpack.c.b16 %v623, %v619
      %v876 = vpack.c.b16 %v624, %v620
      %v877 = vpack.c.b16 %v625, %v621
      %v878 = vpack.c.b16 %v630, %v626
      %v879 = vpack.c.b16 %v631, %v627
      %v880 = vpack.c.b16 %v632, %v628
      %v881 = vpack.c.b16 %v633, %v629
      %v882 = vpack.c.b16 %v638, %v634
      %v883 = vpack.c.b16 %v639, %v635
      %v884 = vpack.c.b16 %v640, %v636
      %v885 = vpack.c.b16 %v641, %v637
      %v886 = vpack.c.b16 %v646, %v642
      %v887 = vpack.c.b16 %v647, %v643
      %v888 = vpack.c.b16 %v648, %v644
      %v889 = vpack.c.b16 %v649, %v645
      %v890 = vpack.c.b16 %v654, %v650
      %v891 = vpack.c.b16 %v655, %v651
      %v892 = vpack.c.b16 %v656, %v652
      %v893 = vpack.c.b16 %v657, %v653
      %v894 = vpack.c.b16 %v662, %v658
      %v895 = vpack.c.b16 %v663, %v659
      %v896 = vpack.c.b16 %v664, %v660
      %v897 = vpack.c.b16 %v665, %v661
      %v898 = vpack.c.b16 %v670, %v666
      %v899 = vpack.c.b16 %v671, %v667
      %v900 = vpack.c.b16 %v672, %v668
      %v901 = vpack.c.b16 %v673, %v669
      %v902 = vpack.c.b16 %v678, %v674
      %v903 = vpack.c.b16 %v679, %v675
      %v904 = vpack.c.b16 %v680, %v676
      %v905 = vpack.c.b16 %v681, %v677
      %v906 = vpack.c.b16 %v686, %v682
      %v907 = vpack.c.b16 %v687, %v683
      %v908 = vpack.c.b16 %v688, %v684
      %v909 = vpack.c.b16 %v689, %v685
      %v910 = vpack.c.b16 %v694, %v690
      %v911 = vpack.c.b16 %v695, %v691
      %v912 = vpack.c.b16 %v696, %v692
      %v913 = vpack.c.b16 %v697, %v693
      %v914 = vpack.c.b16 %v702, %v698
      %v915 = vpack.c.b16 %v703, %v699
      %v916 = vpack.c.b16 %v704, %v700
      %v917 = vpack.c.b16 %v705, %v701
      %v918 = vpack.c.b16 %v710, %v706
      %v919 = vpack.c.b16 %v711, %v707
      %v920 = vpack.c.b16 %v712, %v708
      %v921 = vpack.c.b16 %v713, %v709
      %v922 = vpack.c.b16 %v718, %v714
      %v923 = vpack.c.b16 %v719, %v715
      %v924 = vpack.c.b16 %v720, %v716
      %v925 = vpack.c.b16 %v721, %v717
      %v926 = vpack.c.b16 %v726, %v722
      %v927 = vpack.c.b16 %v727, %v723
      %v928 = vpack.c.b16 %v728, %v724
      %v929 = vpack.c.b16 %v729, %v725
      %v930 = vpack.c.b16 %v734, %v730
      %v931 = vpack.c.b16 %v735, %v731
      %v932 = vpack.c.b16 %v736, %v732
      %v933 = vpack.c.b16 %v737, %v733
      %v934 = vpack.c.b16 %v742, %v738
      %v935 = vpack.c.b16 %v743, %v739
      %v936 = vpack.c.b16 %v744, %v740
      %v937 = vpack.c.b16 %v745, %v741
      %v938 = vpack.c.b16 %v750, %v746
      %v939 = vpack.c.b16 %v751, %v747
      %v940 = vpack.c.b16 %v752, %v748
      %v941 = vpack.c.b16 %v753, %v749
      %v942 = vpack.c.b16 %v758, %v754
      %v943 = vpack.c.b16 %v759, %v755
      %v944 = vpack.c.b16 %v760, %v756
      %v945 = vpack.c.b16 %v761, %v757
      %v946 = vpack.c.b16 %v766, %v762
      %v947 = vpack.c.b16 %v767, %v763
      %v948 = vpack.c.b16 %v768, %v764
      %v949 = vpack.c.b16 %v769, %v765
      %v950 = vpack.c.b16 %v774, %v770
      %v951 = vpack.c.b16 %v775, %v771
      %v952 = vpack.c.b16 %v776, %v772
      %v953 = vpack.c.b16 %v777, %v773
      %v954 = vpack.c.b16 %v782, %v778
      %v955 = vpack.c.b16 %v783, %v779
      %v956 = vpack.c.b16 %v784, %v780
      %v957 = vpack.c.b16 %v785, %v781
      %v958 = vpack.c.b16 %v790, %v786
      %v959 = vpack.c.b16 %v791, %v787
      %v960 = vpack.c.b16 %v792, %v788
      %v961 = vpack.c.b16 %v793, %v789
      %v962 = vpack.c.b16 %v798, %v794
      %v963 = vpack.c.b16 %v799, %v795
      %v964 = vpack.c.b16 %v800, %v796
      %v965 = vpack.c.b16 %v801, %v797
      %v966 = vpack.c.b16 %v806, %v802
      %v967 = vpack.c.b16 %v807, %v803
      %v968 = vpack.c.b16 %v808, %v804
      %v969 = vpack.c.b16 %v809, %v805
      %v970 = vpack.c.b16 %v814, %v810
      %v971 = vpack.c.b16 %v815, %v811
      %v972 = vpack.c.b16 %v816, %v812
      %v973 = vpack.c.b16 %v817, %v813
      %v974 = vpack.c.b16 %v822, %v818
      %v975 = vpack.c.b16 %v823, %v819
      %v976 = vpack.c.b16 %v824, %v820
      %v977 = vpack.c.b16 %v825, %v821
      %v978 = vpack.c.b16 %v830, %v826
      %v979 = vpack.c.b16 %v831, %v827
      %v980 = vpack.c.b16 %v832, %v828
      %v981 = vpack.c.b16 %v833, %v829
      %v982 = vpack.c.b16 %v838, %v834
      %v983 = vpack.c.b16 %v839, %v835
      %v984 = vpack.c.b16 %v840, %v836
      %v985 = vpack.c.b16 %v841, %v837
      %v986 = vpack.c.b16 %v846, %v842
      %v987 = vpack.c.b16 %v847, %v843
      %v988 = vpack.c.b16 %v848, %v844
      %v989 = vpack.c.b16 %v849, %v845
      %v990 = vpack.c.b16 %v854, %v850
      %v991 = vpack.c.b16 %v855, %v851
      %v992 = vpack.c.b16 %v856, %v852
      %v993 = vpack.c.b16 %v857, %v853
      %v994 = vpack.c.b16 %v862, %v858
      %v995 = vpack.c.b16 %v863, %v859
      %v996 = vpack.c.b16 %v864, %v860
      %v997 = vpack.c.b16 %v865, %v861
      %v998 = vpack.c.b16 %v870, %v866
      %v999 = vpack.c.b16 %v871, %v867
      %v1000 = vpack.c.b16 %v872, %v868
      %v1001 = vpack.c.b16 %v873, %v869
      %v1194 = vunpack.c.l.b16 %v426
      %v1195 = vunpack.c.l.b16 %v427
      %v1196 = vunpack.c.l.b16 %v428
      %v1197 = vunpack.c.l.b16 %v429
      %v1198 = vunpack.c.l.b16 %v430
      %v1199 = vunpack.c.l.b16 %v431
      %v1200 = vunpack.c.l.b16 %v432
      %v1201 = vunpack.c.l.b16 %v433
      %v1202 = vunpack.c.l.b16 %v434
      %v1203 = vunpack.c.l.b16 %v435
      %v1204 = vunpack.c.l.b16 %v436
      %v1205 = vunpack.c.l.b16 %v437
      %v1206 = vunpack.c.l.b16 %v438
      %v1207 = vunpack.c.l.b16 %v439
      %v1208 = vunpack.c.l.b16 %v440
      %v1209 = vunpack.c.l.b16 %v441
      %v1210 = vunpack.c.l.b16 %v442
      %v1211 = vunpack.c.l.b16 %v443
      %v1212 = vunpack.c.l.b16 %v444
      %v1213 = vunpack.c.l.b16 %v445
      %v1214 = vunpack.c.l.b16 %v446
      %v1215 = vunpack.c.l.b16 %v447
      %v1216 = vunpack.c.l.b16 %v448
      %v1217 = vunpack.c.l.b16 %v449
      %v1218 = vunpack.c.l.b16 %v450
      %v1219 = vunpack.c.l.b16 %v451
      %v1220 = vunpack.c.l.b16 %v452
      %v1221 = vunpack.c.l.b16 %v453
      %v1222 = vunpack.c.l.b16 %v454
      %v1223 = vunpack.c.l.b16 %v455
      %v1224 = vunpack.c.l.b16 %v456
      %v1225 = vunpack.c.l.b16 %v457
      %v1226 = vunpack.c.l.b16 %v458
      %v1227 = vunpack.c.l.b16 %v459
      %v1228 = vunpack.c.l.b16 %v460
      %v1229 = vunpack.c.l.b16 %v461
      %v1230 = vunpack.c.l.b16 %v462
      %v1231 = vunpack.c.l.b16 %v463
      %v1232 = vunpack.c.l.b16 %v464
      %v1233 = vunpack.c.l.b16 %v465
      %v1234 = vunpack.c.l.b16 %v466
      %v1235 = vunpack.c.l.b16 %v467
      %v1236 = vunpack.c.l.b16 %v468
      %v1237 = vunpack.c.l.b16 %v469
      %v1238 = vunpack.c.l.b16 %v470
      %v1239 = vunpack.c.l.b16 %v471
      %v1240 = vunpack.c.l.b16 %v472
      %v1241 = vunpack.c.l.b16 %v473
      %v1242 = vunpack.c.l.b16 %v474
      %v1243 = vunpack.c.l.b16 %v475
      %v1244 = vunpack.c.l.b16 %v476
      %v1245 = vunpack.c.l.b16 %v477
      %v1246 = vunpack.c.l.b16 %v478
      %v1247 = vunpack.c.l.b16 %v479
      %v1248 = vunpack.c.l.b16 %v480
      %v1249 = vunpack.c.l.b16 %v481
      %v1250 = vunpack.c.l.b16 %v482
      %v1251 = vunpack.c.l.b16 %v483
      %v1252 = vunpack.c.l.b16 %v484
      %v1253 = vunpack.c.l.b16 %v485
      %v1254 = vunpack.c.l.b16 %v486
      %v1255 = vunpack.c.l.b16 %v487
      %v1256 = vunpack.c.l.b16 %v488
      %v1257 = vunpack.c.l.b16 %v489
      %v1258 = vpack.c.b16 %v1195, %v1194
      %v1259 = vpack.c.b16 %v1197, %v1196
      %v1260 = vpack.c.b16 %v1199, %v1198
      %v1261 = vpack.c.b16 %v1201, %v1200
      %v1262 = vpack.c.b16 %v1203, %v1202
      %v1263 = vpack.c.b16 %v1205, %v1204
      %v1264 = vpack.c.b16 %v1207, %v1206
      %v1265 = vpack.c.b16 %v1209, %v1208
      %v1266 = vpack.c.b16 %v1211, %v1210
      %v1267 = vpack.c.b16 %v1213, %v1212
      %v1268 = vpack.c.b16 %v1215, %v1214
      %v1269 = vpack.c.b16 %v1217, %v1216
      %v1270 = vpack.c.b16 %v1219, %v1218
      %v1271 = vpack.c.b16 %v1221, %v1220
      %v1272 = vpack.c.b16 %v1223, %v1222
      %v1273 = vpack.c.b16 %v1225, %v1224
      %v1274 = vpack.c.b16 %v1227, %v1226
      %v1275 = vpack.c.b16 %v1229, %v1228
      %v1276 = vpack.c.b16 %v1231, %v1230
      %v1277 = vpack.c.b16 %v1233, %v1232
      %v1278 = vpack.c.b16 %v1235, %v1234
      %v1279 = vpack.c.b16 %v1237, %v1236
      %v1280 = vpack.c.b16 %v1239, %v1238
      %v1281 = vpack.c.b16 %v1241, %v1240
      %v1282 = vpack.c.b16 %v1243, %v1242
      %v1283 = vpack.c.b16 %v1245, %v1244
      %v1284 = vpack.c.b16 %v1247, %v1246
      %v1285 = vpack.c.b16 %v1249, %v1248
      %v1286 = vpack.c.b16 %v1251, %v1250
      %v1287 = vpack.c.b16 %v1253, %v1252
      %v1288 = vpack.c.b16 %v1255, %v1254
      %v1289 = vpack.c.b16 %v1257, %v1256
      %1322 = vmatpush.bf16.msra.mxu0 %v1265
      %1323 = vmatpush.bf16.msra.mxu0 %v1264
      %1324 = vmatpush.bf16.msra.mxu0 %v1263
      %1325 = vmatpush.bf16.msra.mxu0 %v1262
      %1326 = vmatpush.bf16.msra.mxu0 %v1261
      %1327 = vmatpush.bf16.msra.mxu0 %v1260
      %1328 = vmatpush.bf16.msra.mxu0 %v1259
      %1329 = vmatpush.bf16.msra.mxu0 %v1258
      %1330 = vmatmul.bf16.gmra.mxu0 %v874
      %v1331 = vpop.f32.mrf.mxu0
      %v1332 = vadd.f32 0.0, %v1331
      %v1333 = vpop.f32.mrf.mxu0
      %v1334 = vadd.f32 0.0, %v1333
      %1335 = vmatmul.bf16.gmra.mxu0 %v878
      %v1336 = vpop.f32.mrf.mxu0
      %v1337 = vadd.f32 0.0, %v1336
      %v1338 = vpop.f32.mrf.mxu0
      %v1339 = vadd.f32 0.0, %v1338
      %1340 = vmatmul.bf16.gmra.mxu0 %v882
      %v1341 = vpop.f32.mrf.mxu0
      %v1342 = vadd.f32 0.0, %v1341
      %v1343 = vpop.f32.mrf.mxu0
      %v1344 = vadd.f32 0.0, %v1343
      %1345 = vmatmul.bf16.gmra.mxu0 %v886
      %v1346 = vpop.f32.mrf.mxu0
      %v1347 = vadd.f32 0.0, %v1346
      %v1348 = vpop.f32.mrf.mxu0
      %v1349 = vadd.f32 0.0, %v1348
      %1350 = vmatmul.bf16.gmra.mxu0 %v890
      %v1351 = vpop.f32.mrf.mxu0
      %v1352 = vadd.f32 0.0, %v1351
      %v1353 = vpop.f32.mrf.mxu0
      %v1354 = vadd.f32 0.0, %v1353
      %1355 = vmatmul.bf16.gmra.mxu0 %v894
      %v1356 = vpop.f32.mrf.mxu0
      %v1357 = vadd.f32 0.0, %v1356
      %v1358 = vpop.f32.mrf.mxu0
      %v1359 = vadd.f32 0.0, %v1358
      %1360 = vmatmul.bf16.gmra.mxu0 %v898
      %v1361 = vpop.f32.mrf.mxu0
      %v1362 = vadd.f32 0.0, %v1361
      %v1363 = vpop.f32.mrf.mxu0
      %v1364 = vadd.f32 0.0, %v1363
      %1365 = vmatmul.bf16.gmra.mxu0 %v902
      %v1366 = vpop.f32.mrf.mxu0
      %v1367 = vadd.f32 0.0, %v1366
      %v1368 = vpop.f32.mrf.mxu0
      %v1369 = vadd.f32 0.0, %v1368
      %1370 = vmatmul.bf16.gmra.mxu0 %v906
      %v1371 = vpop.f32.mrf.mxu0
      %v1372 = vadd.f32 0.0, %v1371
      %v1373 = vpop.f32.mrf.mxu0
      %v1374 = vadd.f32 0.0, %v1373
      %1375 = vmatmul.bf16.gmra.mxu0 %v910
      %v1376 = vpop.f32.mrf.mxu0
      %v1377 = vadd.f32 0.0, %v1376
      %v1378 = vpop.f32.mrf.mxu0
      %v1379 = vadd.f32 0.0, %v1378
      %1380 = vmatmul.bf16.gmra.mxu0 %v914
      %v1381 = vpop.f32.mrf.mxu0
      %v1382 = vadd.f32 0.0, %v1381
      %v1383 = vpop.f32.mrf.mxu0
      %v1384 = vadd.f32 0.0, %v1383
      %1385 = vmatmul.bf16.gmra.mxu0 %v918
      %v1386 = vpop.f32.mrf.mxu0
      %v1387 = vadd.f32 0.0, %v1386
      %v1388 = vpop.f32.mrf.mxu0
      %v1389 = vadd.f32 0.0, %v1388
      %1390 = vmatmul.bf16.gmra.mxu0 %v922
      %v1391 = vpop.f32.mrf.mxu0
      %v1392 = vadd.f32 0.0, %v1391
      %v1393 = vpop.f32.mrf.mxu0
      %v1394 = vadd.f32 0.0, %v1393
      %1395 = vmatmul.bf16.gmra.mxu0 %v926
      %v1396 = vpop.f32.mrf.mxu0
      %v1397 = vadd.f32 0.0, %v1396
      %v1398 = vpop.f32.mrf.mxu0
      %v1399 = vadd.f32 0.0, %v1398
      %1400 = vmatmul.bf16.gmra.mxu0 %v930
      %v1401 = vpop.f32.mrf.mxu0
      %v1402 = vadd.f32 0.0, %v1401
      %v1403 = vpop.f32.mrf.mxu0
      %v1404 = vadd.f32 0.0, %v1403
      %1405 = vmatmul.bf16.gmra.mxu0 %v934
      %v1406 = vpop.f32.mrf.mxu0
      %v1407 = vadd.f32 0.0, %v1406
      %v1408 = vpop.f32.mrf.mxu0
      %v1409 = vadd.f32 0.0, %v1408
      %1410 = vmatmul.bf16.gmra.mxu0 %v938
      %v1411 = vpop.f32.mrf.mxu0
      %v1412 = vadd.f32 0.0, %v1411
      %v1413 = vpop.f32.mrf.mxu0
      %v1414 = vadd.f32 0.0, %v1413
      %1415 = vmatmul.bf16.gmra.mxu0 %v942
      %v1416 = vpop.f32.mrf.mxu0
      %v1417 = vadd.f32 0.0, %v1416
      %v1418 = vpop.f32.mrf.mxu0
      %v1419 = vadd.f32 0.0, %v1418
      %1420 = vmatmul.bf16.gmra.mxu0 %v946
      %v1421 = vpop.f32.mrf.mxu0
      %v1422 = vadd.f32 0.0, %v1421
      %v1423 = vpop.f32.mrf.mxu0
      %v1424 = vadd.f32 0.0, %v1423
      %1425 = vmatmul.bf16.gmra.mxu0 %v950
      %v1426 = vpop.f32.mrf.mxu0
      %v1427 = vadd.f32 0.0, %v1426
      %v1428 = vpop.f32.mrf.mxu0
      %v1429 = vadd.f32 0.0, %v1428
      %1430 = vmatmul.bf16.gmra.mxu0 %v954
      %v1431 = vpop.f32.mrf.mxu0
      %v1432 = vadd.f32 0.0, %v1431
      %v1433 = vpop.f32.mrf.mxu0
      %v1434 = vadd.f32 0.0, %v1433
      %1435 = vmatmul.bf16.gmra.mxu0 %v958
      %v1436 = vpop.f32.mrf.mxu0
      %v1437 = vadd.f32 0.0, %v1436
      %v1438 = vpop.f32.mrf.mxu0
      %v1439 = vadd.f32 0.0, %v1438
      %1440 = vmatmul.bf16.gmra.mxu0 %v962
      %v1441 = vpop.f32.mrf.mxu0
      %v1442 = vadd.f32 0.0, %v1441
      %v1443 = vpop.f32.mrf.mxu0
      %v1444 = vadd.f32 0.0, %v1443
      %1445 = vmatmul.bf16.gmra.mxu0 %v966
      %v1446 = vpop.f32.mrf.mxu0
      %v1447 = vadd.f32 0.0, %v1446
      %v1448 = vpop.f32.mrf.mxu0
      %v1449 = vadd.f32 0.0, %v1448
      %1450 = vmatmul.bf16.gmra.mxu0 %v970
      %v1451 = vpop.f32.mrf.mxu0
      %v1452 = vadd.f32 0.0, %v1451
      %v1453 = vpop.f32.mrf.mxu0
      %v1454 = vadd.f32 0.0, %v1453
      %1455 = vmatmul.bf16.gmra.mxu0 %v974
      %v1456 = vpop.f32.mrf.mxu0
      %v1457 = vadd.f32 0.0, %v1456
      %v1458 = vpop.f32.mrf.mxu0
      %v1459 = vadd.f32 0.0, %v1458
      %1460 = vmatmul.bf16.gmra.mxu0 %v978
      %v1461 = vpop.f32.mrf.mxu0
      %v1462 = vadd.f32 0.0, %v1461
      %v1463 = vpop.f32.mrf.mxu0
      %v1464 = vadd.f32 0.0, %v1463
      %1465 = vmatmul.bf16.gmra.mxu0 %v982
      %v1466 = vpop.f32.mrf.mxu0
      %v1467 = vadd.f32 0.0, %v1466
      %v1468 = vpop.f32.mrf.mxu0
      %v1469 = vadd.f32 0.0, %v1468
      %1470 = vmatmul.bf16.gmra.mxu0 %v986
      %v1471 = vpop.f32.mrf.mxu0
      %v1472 = vadd.f32 0.0, %v1471
      %v1473 = vpop.f32.mrf.mxu0
      %v1474 = vadd.f32 0.0, %v1473
      %1475 = vmatmul.bf16.gmra.mxu0 %v990
      %v1476 = vpop.f32.mrf.mxu0
      %v1477 = vadd.f32 0.0, %v1476
      %v1478 = vpop.f32.mrf.mxu0
      %v1479 = vadd.f32 0.0, %v1478
      %1480 = vmatmul.bf16.gmra.mxu0 %v994
      %v1481 = vpop.f32.mrf.mxu0
      %v1482 = vadd.f32 0.0, %v1481
      %v1483 = vpop.f32.mrf.mxu0
      %v1484 = vadd.f32 0.0, %v1483
      %1485 = vmatmul.bf16.gmra.mxu0 %v998
      %v1486 = vpop.f32.mrf.mxu0
      %v1487 = vadd.f32 0.0, %v1486
      %v1488 = vpop.f32.mrf.mxu0
      %v1489 = vadd.f32 0.0, %v1488
      %1490 = vdwg.mxu0
      %1491 = vmatpush.bf16.msra.mxu0 %v1273
      %1492 = vmatpush.bf16.msra.mxu0 %v1272
      %1493 = vmatpush.bf16.msra.mxu0 %v1271
      %1494 = vmatpush.bf16.msra.mxu0 %v1270
      %1495 = vmatpush.bf16.msra.mxu0 %v1269
      %1496 = vmatpush.bf16.msra.mxu0 %v1268
      %1497 = vmatpush.bf16.msra.mxu0 %v1267
      %1498 = vmatpush.bf16.msra.mxu0 %v1266
      %1499 = vmatmul.bf16.gmra.mxu0 %v875
      %v1500 = vpop.f32.mrf.mxu0
      %v1501 = vadd.f32 %v1332, %v1500
      %v1502 = vpop.f32.mrf.mxu0
      %v1503 = vadd.f32 %v1334, %v1502
      %1504 = vmatmul.bf16.gmra.mxu0 %v879
      %v1505 = vpop.f32.mrf.mxu0
      %v1506 = vadd.f32 %v1337, %v1505
      %v1507 = vpop.f32.mrf.mxu0
      %v1508 = vadd.f32 %v1339, %v1507
      %1509 = vmatmul.bf16.gmra.mxu0 %v883
      %v1510 = vpop.f32.mrf.mxu0
      %v1511 = vadd.f32 %v1342, %v1510
      %v1512 = vpop.f32.mrf.mxu0
      %v1513 = vadd.f32 %v1344, %v1512
      %1514 = vmatmul.bf16.gmra.mxu0 %v887
      %v1515 = vpop.f32.mrf.mxu0
      %v1516 = vadd.f32 %v1347, %v1515
      %v1517 = vpop.f32.mrf.mxu0
      %v1518 = vadd.f32 %v1349, %v1517
      %1519 = vmatmul.bf16.gmra.mxu0 %v891
      %v1520 = vpop.f32.mrf.mxu0
      %v1521 = vadd.f32 %v1352, %v1520
      %v1522 = vpop.f32.mrf.mxu0
      %v1523 = vadd.f32 %v1354, %v1522
      %1524 = vmatmul.bf16.gmra.mxu0 %v895
      %v1525 = vpop.f32.mrf.mxu0
      %v1526 = vadd.f32 %v1357, %v1525
      %v1527 = vpop.f32.mrf.mxu0
      %v1528 = vadd.f32 %v1359, %v1527
      %1529 = vmatmul.bf16.gmra.mxu0 %v899
      %v1530 = vpop.f32.mrf.mxu0
      %v1531 = vadd.f32 %v1362, %v1530
      %v1532 = vpop.f32.mrf.mxu0
      %v1533 = vadd.f32 %v1364, %v1532
      %1534 = vmatmul.bf16.gmra.mxu0 %v903
      %v1535 = vpop.f32.mrf.mxu0
      %v1536 = vadd.f32 %v1367, %v1535
      %v1537 = vpop.f32.mrf.mxu0
      %v1538 = vadd.f32 %v1369, %v1537
      %1539 = vmatmul.bf16.gmra.mxu0 %v907
      %v1540 = vpop.f32.mrf.mxu0
      %v1541 = vadd.f32 %v1372, %v1540
      %v1542 = vpop.f32.mrf.mxu0
      %v1543 = vadd.f32 %v1374, %v1542
      %1544 = vmatmul.bf16.gmra.mxu0 %v911
      %v1545 = vpop.f32.mrf.mxu0
      %v1546 = vadd.f32 %v1377, %v1545
      %v1547 = vpop.f32.mrf.mxu0
      %v1548 = vadd.f32 %v1379, %v1547
      %1549 = vmatmul.bf16.gmra.mxu0 %v915
      %v1550 = vpop.f32.mrf.mxu0
      %v1551 = vadd.f32 %v1382, %v1550
      %v1552 = vpop.f32.mrf.mxu0
      %v1553 = vadd.f32 %v1384, %v1552
      %1554 = vmatmul.bf16.gmra.mxu0 %v919
      %v1555 = vpop.f32.mrf.mxu0
      %v1556 = vadd.f32 %v1387, %v1555
      %v1557 = vpop.f32.mrf.mxu0
      %v1558 = vadd.f32 %v1389, %v1557
      %1559 = vmatmul.bf16.gmra.mxu0 %v923
      %v1560 = vpop.f32.mrf.mxu0
      %v1561 = vadd.f32 %v1392, %v1560
      %v1562 = vpop.f32.mrf.mxu0
      %v1563 = vadd.f32 %v1394, %v1562
      %1564 = vmatmul.bf16.gmra.mxu0 %v927
      %v1565 = vpop.f32.mrf.mxu0
      %v1566 = vadd.f32 %v1397, %v1565
      %v1567 = vpop.f32.mrf.mxu0
      %v1568 = vadd.f32 %v1399, %v1567
      %1569 = vmatmul.bf16.gmra.mxu0 %v931
      %v1570 = vpop.f32.mrf.mxu0
      %v1571 = vadd.f32 %v1402, %v1570
      %v1572 = vpop.f32.mrf.mxu0
      %v1573 = vadd.f32 %v1404, %v1572
      %1574 = vmatmul.bf16.gmra.mxu0 %v935
      %v1575 = vpop.f32.mrf.mxu0
      %v1576 = vadd.f32 %v1407, %v1575
      %v1577 = vpop.f32.mrf.mxu0
      %v1578 = vadd.f32 %v1409, %v1577
      %1579 = vmatmul.bf16.gmra.mxu0 %v939
      %v1580 = vpop.f32.mrf.mxu0
      %v1581 = vadd.f32 %v1412, %v1580
      %v1582 = vpop.f32.mrf.mxu0
      %v1583 = vadd.f32 %v1414, %v1582
      %1584 = vmatmul.bf16.gmra.mxu0 %v943
      %v1585 = vpop.f32.mrf.mxu0
      %v1586 = vadd.f32 %v1417, %v1585
      %v1587 = vpop.f32.mrf.mxu0
      %v1588 = vadd.f32 %v1419, %v1587
      %1589 = vmatmul.bf16.gmra.mxu0 %v947
      %v1590 = vpop.f32.mrf.mxu0
      %v1591 = vadd.f32 %v1422, %v1590
      %v1592 = vpop.f32.mrf.mxu0
      %v1593 = vadd.f32 %v1424, %v1592
      %1594 = vmatmul.bf16.gmra.mxu0 %v951
      %v1595 = vpop.f32.mrf.mxu0
      %v1596 = vadd.f32 %v1427, %v1595
      %v1597 = vpop.f32.mrf.mxu0
      %v1598 = vadd.f32 %v1429, %v1597
      %1599 = vmatmul.bf16.gmra.mxu0 %v955
      %v1600 = vpop.f32.mrf.mxu0
      %v1601 = vadd.f32 %v1432, %v1600
      %v1602 = vpop.f32.mrf.mxu0
      %v1603 = vadd.f32 %v1434, %v1602
      %1604 = vmatmul.bf16.gmra.mxu0 %v959
      %v1605 = vpop.f32.mrf.mxu0
      %v1606 = vadd.f32 %v1437, %v1605
      %v1607 = vpop.f32.mrf.mxu0
      %v1608 = vadd.f32 %v1439, %v1607
      %1609 = vmatmul.bf16.gmra.mxu0 %v963
      %v1610 = vpop.f32.mrf.mxu0
      %v1611 = vadd.f32 %v1442, %v1610
      %v1612 = vpop.f32.mrf.mxu0
      %v1613 = vadd.f32 %v1444, %v1612
      %1614 = vmatmul.bf16.gmra.mxu0 %v967
      %v1615 = vpop.f32.mrf.mxu0
      %v1616 = vadd.f32 %v1447, %v1615
      %v1617 = vpop.f32.mrf.mxu0
      %v1618 = vadd.f32 %v1449, %v1617
      %1619 = vmatmul.bf16.gmra.mxu0 %v971
      %v1620 = vpop.f32.mrf.mxu0
      %v1621 = vadd.f32 %v1452, %v1620
      %v1622 = vpop.f32.mrf.mxu0
      %v1623 = vadd.f32 %v1454, %v1622
      %1624 = vmatmul.bf16.gmra.mxu0 %v975
      %v1625 = vpop.f32.mrf.mxu0
      %v1626 = vadd.f32 %v1457, %v1625
      %v1627 = vpop.f32.mrf.mxu0
      %v1628 = vadd.f32 %v1459, %v1627
      %1629 = vmatmul.bf16.gmra.mxu0 %v979
      %v1630 = vpop.f32.mrf.mxu0
      %v1631 = vadd.f32 %v1462, %v1630
      %v1632 = vpop.f32.mrf.mxu0
      %v1633 = vadd.f32 %v1464, %v1632
      %1634 = vmatmul.bf16.gmra.mxu0 %v983
      %v1635 = vpop.f32.mrf.mxu0
      %v1636 = vadd.f32 %v1467, %v1635
      %v1637 = vpop.f32.mrf.mxu0
      %v1638 = vadd.f32 %v1469, %v1637
      %1639 = vmatmul.bf16.gmra.mxu0 %v987
      %v1640 = vpop.f32.mrf.mxu0
      %v1641 = vadd.f32 %v1472, %v1640
      %v1642 = vpop.f32.mrf.mxu0
      %v1643 = vadd.f32 %v1474, %v1642
      %1644 = vmatmul.bf16.gmra.mxu0 %v991
      %v1645 = vpop.f32.mrf.mxu0
      %v1646 = vadd.f32 %v1477, %v1645
      %v1647 = vpop.f32.mrf.mxu0
      %v1648 = vadd.f32 %v1479, %v1647
      %1649 = vmatmul.bf16.gmra.mxu0 %v995
      %v1650 = vpop.f32.mrf.mxu0
      %v1651 = vadd.f32 %v1482, %v1650
      %v1652 = vpop.f32.mrf.mxu0
      %v1653 = vadd.f32 %v1484, %v1652
      %1654 = vmatmul.bf16.gmra.mxu0 %v999
      %v1655 = vpop.f32.mrf.mxu0
      %v1656 = vadd.f32 %v1487, %v1655
      %v1657 = vpop.f32.mrf.mxu0
      %v1658 = vadd.f32 %v1489, %v1657
      %1659 = vdwg.mxu0
      %1660 = vmatpush.bf16.msra.mxu0 %v1281
      %1661 = vmatpush.bf16.msra.mxu0 %v1280
      %1662 = vmatpush.bf16.msra.mxu0 %v1279
      %1663 = vmatpush.bf16.msra.mxu0 %v1278
      %1664 = vmatpush.bf16.msra.mxu0 %v1277
      %1665 = vmatpush.bf16.msra.mxu0 %v1276
      %1666 = vmatpush.bf16.msra.mxu0 %v1275
      %1667 = vmatpush.bf16.msra.mxu0 %v1274
      %1668 = vmatmul.bf16.gmra.mxu0 %v876
      %v1669 = vpop.f32.mrf.mxu0
      %v1670 = vadd.f32 %v1501, %v1669
      %v1671 = vpop.f32.mrf.mxu0
      %v1672 = vadd.f32 %v1503, %v1671
      %1673 = vmatmul.bf16.gmra.mxu0 %v880
      %v1674 = vpop.f32.mrf.mxu0
      %v1675 = vadd.f32 %v1506, %v1674
      %v1676 = vpop.f32.mrf.mxu0
      %v1677 = vadd.f32 %v1508, %v1676
      %1678 = vmatmul.bf16.gmra.mxu0 %v884
      %v1679 = vpop.f32.mrf.mxu0
      %v1680 = vadd.f32 %v1511, %v1679
      %v1681 = vpop.f32.mrf.mxu0
      %v1682 = vadd.f32 %v1513, %v1681
      %1683 = vmatmul.bf16.gmra.mxu0 %v888
      %v1684 = vpop.f32.mrf.mxu0
      %v1685 = vadd.f32 %v1516, %v1684
      %v1686 = vpop.f32.mrf.mxu0
      %v1687 = vadd.f32 %v1518, %v1686
      %1688 = vmatmul.bf16.gmra.mxu0 %v892
      %v1689 = vpop.f32.mrf.mxu0
      %v1690 = vadd.f32 %v1521, %v1689
      %v1691 = vpop.f32.mrf.mxu0
      %v1692 = vadd.f32 %v1523, %v1691
      %1693 = vmatmul.bf16.gmra.mxu0 %v896
      %v1694 = vpop.f32.mrf.mxu0
      %v1695 = vadd.f32 %v1526, %v1694
      %v1696 = vpop.f32.mrf.mxu0
      %v1697 = vadd.f32 %v1528, %v1696
      %1698 = vmatmul.bf16.gmra.mxu0 %v900
      %v1699 = vpop.f32.mrf.mxu0
      %v1700 = vadd.f32 %v1531, %v1699
      %v1701 = vpop.f32.mrf.mxu0
      %v1702 = vadd.f32 %v1533, %v1701
      %1703 = vmatmul.bf16.gmra.mxu0 %v904
      %v1704 = vpop.f32.mrf.mxu0
      %v1705 = vadd.f32 %v1536, %v1704
      %v1706 = vpop.f32.mrf.mxu0
      %v1707 = vadd.f32 %v1538, %v1706
      %1708 = vmatmul.bf16.gmra.mxu0 %v908
      %v1709 = vpop.f32.mrf.mxu0
      %v1710 = vadd.f32 %v1541, %v1709
      %v1711 = vpop.f32.mrf.mxu0
      %v1712 = vadd.f32 %v1543, %v1711
      %1713 = vmatmul.bf16.gmra.mxu0 %v912
      %v1714 = vpop.f32.mrf.mxu0
      %v1715 = vadd.f32 %v1546, %v1714
      %v1716 = vpop.f32.mrf.mxu0
      %v1717 = vadd.f32 %v1548, %v1716
      %1718 = vmatmul.bf16.gmra.mxu0 %v916
      %v1719 = vpop.f32.mrf.mxu0
      %v1720 = vadd.f32 %v1551, %v1719
      %v1721 = vpop.f32.mrf.mxu0
      %v1722 = vadd.f32 %v1553, %v1721
      %1723 = vmatmul.bf16.gmra.mxu0 %v920
      %v1724 = vpop.f32.mrf.mxu0
      %v1725 = vadd.f32 %v1556, %v1724
      %v1726 = vpop.f32.mrf.mxu0
      %v1727 = vadd.f32 %v1558, %v1726
      %1728 = vmatmul.bf16.gmra.mxu0 %v924
      %v1729 = vpop.f32.mrf.mxu0
      %v1730 = vadd.f32 %v1561, %v1729
      %v1731 = vpop.f32.mrf.mxu0
      %v1732 = vadd.f32 %v1563, %v1731
      %1733 = vmatmul.bf16.gmra.mxu0 %v928
      %v1734 = vpop.f32.mrf.mxu0
      %v1735 = vadd.f32 %v1566, %v1734
      %v1736 = vpop.f32.mrf.mxu0
      %v1737 = vadd.f32 %v1568, %v1736
      %1738 = vmatmul.bf16.gmra.mxu0 %v932
      %v1739 = vpop.f32.mrf.mxu0
      %v1740 = vadd.f32 %v1571, %v1739
      %v1741 = vpop.f32.mrf.mxu0
      %v1742 = vadd.f32 %v1573, %v1741
      %1743 = vmatmul.bf16.gmra.mxu0 %v936
      %v1744 = vpop.f32.mrf.mxu0
      %v1745 = vadd.f32 %v1576, %v1744
      %v1746 = vpop.f32.mrf.mxu0
      %v1747 = vadd.f32 %v1578, %v1746
      %1748 = vmatmul.bf16.gmra.mxu0 %v940
      %v1749 = vpop.f32.mrf.mxu0
      %v1750 = vadd.f32 %v1581, %v1749
      %v1751 = vpop.f32.mrf.mxu0
      %v1752 = vadd.f32 %v1583, %v1751
      %1753 = vmatmul.bf16.gmra.mxu0 %v944
      %v1754 = vpop.f32.mrf.mxu0
      %v1755 = vadd.f32 %v1586, %v1754
      %v1756 = vpop.f32.mrf.mxu0
      %v1757 = vadd.f32 %v1588, %v1756
      %1758 = vmatmul.bf16.gmra.mxu0 %v948
      %v1759 = vpop.f32.mrf.mxu0
      %v1760 = vadd.f32 %v1591, %v1759
      %v1761 = vpop.f32.mrf.mxu0
      %v1762 = vadd.f32 %v1593, %v1761
      %1763 = vmatmul.bf16.gmra.mxu0 %v952
      %v1764 = vpop.f32.mrf.mxu0
      %v1765 = vadd.f32 %v1596, %v1764
      %v1766 = vpop.f32.mrf.mxu0
      %v1767 = vadd.f32 %v1598, %v1766
      %1768 = vmatmul.bf16.gmra.mxu0 %v956
      %v1769 = vpop.f32.mrf.mxu0
      %v1770 = vadd.f32 %v1601, %v1769
      %v1771 = vpop.f32.mrf.mxu0
      %v1772 = vadd.f32 %v1603, %v1771
      %1773 = vmatmul.bf16.gmra.mxu0 %v960
      %v1774 = vpop.f32.mrf.mxu0
      %v1775 = vadd.f32 %v1606, %v1774
      %v1776 = vpop.f32.mrf.mxu0
      %v1777 = vadd.f32 %v1608, %v1776
      %1778 = vmatmul.bf16.gmra.mxu0 %v964
      %v1779 = vpop.f32.mrf.mxu0
      %v1780 = vadd.f32 %v1611, %v1779
      %v1781 = vpop.f32.mrf.mxu0
      %v1782 = vadd.f32 %v1613, %v1781
      %1783 = vmatmul.bf16.gmra.mxu0 %v968
      %v1784 = vpop.f32.mrf.mxu0
      %v1785 = vadd.f32 %v1616, %v1784
      %v1786 = vpop.f32.mrf.mxu0
      %v1787 = vadd.f32 %v1618, %v1786
      %1788 = vmatmul.bf16.gmra.mxu0 %v972
      %v1789 = vpop.f32.mrf.mxu0
      %v1790 = vadd.f32 %v1621, %v1789
      %v1791 = vpop.f32.mrf.mxu0
      %v1792 = vadd.f32 %v1623, %v1791
      %1793 = vmatmul.bf16.gmra.mxu0 %v976
      %v1794 = vpop.f32.mrf.mxu0
      %v1795 = vadd.f32 %v1626, %v1794
      %v1796 = vpop.f32.mrf.mxu0
      %v1797 = vadd.f32 %v1628, %v1796
      %1798 = vmatmul.bf16.gmra.mxu0 %v980
      %v1799 = vpop.f32.mrf.mxu0
      %v1800 = vadd.f32 %v1631, %v1799
      %v1801 = vpop.f32.mrf.mxu0
      %v1802 = vadd.f32 %v1633, %v1801
      %1803 = vmatmul.bf16.gmra.mxu0 %v984
      %v1804 = vpop.f32.mrf.mxu0
      %v1805 = vadd.f32 %v1636, %v1804
      %v1806 = vpop.f32.mrf.mxu0
      %v1807 = vadd.f32 %v1638, %v1806
      %1808 = vmatmul.bf16.gmra.mxu0 %v988
      %v1809 = vpop.f32.mrf.mxu0
      %v1810 = vadd.f32 %v1641, %v1809
      %v1811 = vpop.f32.mrf.mxu0
      %v1812 = vadd.f32 %v1643, %v1811
      %1813 = vmatmul.bf16.gmra.mxu0 %v992
      %v1814 = vpop.f32.mrf.mxu0
      %v1815 = vadd.f32 %v1646, %v1814
      %v1816 = vpop.f32.mrf.mxu0
      %v1817 = vadd.f32 %v1648, %v1816
      %1818 = vmatmul.bf16.gmra.mxu0 %v996
      %v1819 = vpop.f32.mrf.mxu0
      %v1820 = vadd.f32 %v1651, %v1819
      %v1821 = vpop.f32.mrf.mxu0
      %v1822 = vadd.f32 %v1653, %v1821
      %1823 = vmatmul.bf16.gmra.mxu0 %v1000
      %v1824 = vpop.f32.mrf.mxu0
      %v1825 = vadd.f32 %v1656, %v1824
      %v1826 = vpop.f32.mrf.mxu0
      %v1827 = vadd.f32 %v1658, %v1826
      %1828 = vdwg.mxu0
      %1829 = vmatpush.bf16.msra.mxu0 %v1289
      %1830 = vmatpush.bf16.msra.mxu0 %v1288
      %1831 = vmatpush.bf16.msra.mxu0 %v1287
      %1832 = vmatpush.bf16.msra.mxu0 %v1286
      %1833 = vmatpush.bf16.msra.mxu0 %v1285
      %1834 = vmatpush.bf16.msra.mxu0 %v1284
      %1835 = vmatpush.bf16.msra.mxu0 %v1283
      %1836 = vmatpush.bf16.msra.mxu0 %v1282
      %1837 = vmatmul.bf16.gmra.mxu0 %v877
      %v1838 = vpop.f32.mrf.mxu0
      %v1839 = vadd.f32 %v1670, %v1838
      %v1840 = vpop.f32.mrf.mxu0
      %v1841 = vadd.f32 %v1672, %v1840
      %1842 = vmatmul.bf16.gmra.mxu0 %v881
      %v1843 = vpop.f32.mrf.mxu0
      %v1844 = vadd.f32 %v1675, %v1843
      %v1845 = vpop.f32.mrf.mxu0
      %v1846 = vadd.f32 %v1677, %v1845
      %1847 = vmatmul.bf16.gmra.mxu0 %v885
      %v1848 = vpop.f32.mrf.mxu0
      %v1849 = vadd.f32 %v1680, %v1848
      %v1850 = vpop.f32.mrf.mxu0
      %v1851 = vadd.f32 %v1682, %v1850
      %1852 = vmatmul.bf16.gmra.mxu0 %v889
      %v1853 = vpop.f32.mrf.mxu0
      %v1854 = vadd.f32 %v1685, %v1853
      %v1855 = vpop.f32.mrf.mxu0
      %v1856 = vadd.f32 %v1687, %v1855
      %1857 = vmatmul.bf16.gmra.mxu0 %v893
      %v1858 = vpop.f32.mrf.mxu0
      %v1859 = vadd.f32 %v1690, %v1858
      %v1860 = vpop.f32.mrf.mxu0
      %v1861 = vadd.f32 %v1692, %v1860
      %1862 = vmatmul.bf16.gmra.mxu0 %v897
      %v1863 = vpop.f32.mrf.mxu0
      %v1864 = vadd.f32 %v1695, %v1863
      %v1865 = vpop.f32.mrf.mxu0
      %v1866 = vadd.f32 %v1697, %v1865
      %1867 = vmatmul.bf16.gmra.mxu0 %v901
      %v1868 = vpop.f32.mrf.mxu0
      %v1869 = vadd.f32 %v1700, %v1868
      %v1870 = vpop.f32.mrf.mxu0
      %v1871 = vadd.f32 %v1702, %v1870
      %1872 = vmatmul.bf16.gmra.mxu0 %v905
      %v1873 = vpop.f32.mrf.mxu0
      %v1874 = vadd.f32 %v1705, %v1873
      %v1875 = vpop.f32.mrf.mxu0
      %v1876 = vadd.f32 %v1707, %v1875
      %1877 = vmatmul.bf16.gmra.mxu0 %v909
      %v1878 = vpop.f32.mrf.mxu0
      %v1879 = vadd.f32 %v1710, %v1878
      %v1880 = vpop.f32.mrf.mxu0
      %v1881 = vadd.f32 %v1712, %v1880
      %1882 = vmatmul.bf16.gmra.mxu0 %v913
      %v1883 = vpop.f32.mrf.mxu0
      %v1884 = vadd.f32 %v1715, %v1883
      %v1885 = vpop.f32.mrf.mxu0
      %v1886 = vadd.f32 %v1717, %v1885
      %1887 = vmatmul.bf16.gmra.mxu0 %v917
      %v1888 = vpop.f32.mrf.mxu0
      %v1889 = vadd.f32 %v1720, %v1888
      %v1890 = vpop.f32.mrf.mxu0
      %v1891 = vadd.f32 %v1722, %v1890
      %1892 = vmatmul.bf16.gmra.mxu0 %v921
      %v1893 = vpop.f32.mrf.mxu0
      %v1894 = vadd.f32 %v1725, %v1893
      %v1895 = vpop.f32.mrf.mxu0
      %v1896 = vadd.f32 %v1727, %v1895
      %1897 = vmatmul.bf16.gmra.mxu0 %v925
      %v1898 = vpop.f32.mrf.mxu0
      %v1899 = vadd.f32 %v1730, %v1898
      %v1900 = vpop.f32.mrf.mxu0
      %v1901 = vadd.f32 %v1732, %v1900
      %1902 = vmatmul.bf16.gmra.mxu0 %v929
      %v1903 = vpop.f32.mrf.mxu0
      %v1904 = vadd.f32 %v1735, %v1903
      %v1905 = vpop.f32.mrf.mxu0
      %v1906 = vadd.f32 %v1737, %v1905
      %1907 = vmatmul.bf16.gmra.mxu0 %v933
      %v1908 = vpop.f32.mrf.mxu0
      %v1909 = vadd.f32 %v1740, %v1908
      %v1910 = vpop.f32.mrf.mxu0
      %v1911 = vadd.f32 %v1742, %v1910
      %1912 = vmatmul.bf16.gmra.mxu0 %v937
      %v1913 = vpop.f32.mrf.mxu0
      %v1914 = vadd.f32 %v1745, %v1913
      %v1915 = vpop.f32.mrf.mxu0
      %v1916 = vadd.f32 %v1747, %v1915
      %1917 = vmatmul.bf16.gmra.mxu0 %v941
      %v1918 = vpop.f32.mrf.mxu0
      %v1919 = vadd.f32 %v1750, %v1918
      %v1920 = vpop.f32.mrf.mxu0
      %v1921 = vadd.f32 %v1752, %v1920
      %1922 = vmatmul.bf16.gmra.mxu0 %v945
      %v1923 = vpop.f32.mrf.mxu0
      %v1924 = vadd.f32 %v1755, %v1923
      %v1925 = vpop.f32.mrf.mxu0
      %v1926 = vadd.f32 %v1757, %v1925
      %1927 = vmatmul.bf16.gmra.mxu0 %v949
      %v1928 = vpop.f32.mrf.mxu0
      %v1929 = vadd.f32 %v1760, %v1928
      %v1930 = vpop.f32.mrf.mxu0
      %v1931 = vadd.f32 %v1762, %v1930
      %1932 = vmatmul.bf16.gmra.mxu0 %v953
      %v1933 = vpop.f32.mrf.mxu0
      %v1934 = vadd.f32 %v1765, %v1933
      %v1935 = vpop.f32.mrf.mxu0
      %v1936 = vadd.f32 %v1767, %v1935
      %1937 = vmatmul.bf16.gmra.mxu0 %v957
      %v1938 = vpop.f32.mrf.mxu0
      %v1939 = vadd.f32 %v1770, %v1938
      %v1940 = vpop.f32.mrf.mxu0
      %v1941 = vadd.f32 %v1772, %v1940
      %1942 = vmatmul.bf16.gmra.mxu0 %v961
      %v1943 = vpop.f32.mrf.mxu0
      %v1944 = vadd.f32 %v1775, %v1943
      %v1945 = vpop.f32.mrf.mxu0
      %v1946 = vadd.f32 %v1777, %v1945
      %1947 = vmatmul.bf16.gmra.mxu0 %v965
      %v1948 = vpop.f32.mrf.mxu0
      %v1949 = vadd.f32 %v1780, %v1948
      %v1950 = vpop.f32.mrf.mxu0
      %v1951 = vadd.f32 %v1782, %v1950
      %1952 = vmatmul.bf16.gmra.mxu0 %v969
      %v1953 = vpop.f32.mrf.mxu0
      %v1954 = vadd.f32 %v1785, %v1953
      %v1955 = vpop.f32.mrf.mxu0
      %v1956 = vadd.f32 %v1787, %v1955
      %1957 = vmatmul.bf16.gmra.mxu0 %v973
      %v1958 = vpop.f32.mrf.mxu0
      %v1959 = vadd.f32 %v1790, %v1958
      %v1960 = vpop.f32.mrf.mxu0
      %v1961 = vadd.f32 %v1792, %v1960
      %1962 = vmatmul.bf16.gmra.mxu0 %v977
      %v1963 = vpop.f32.mrf.mxu0
      %v1964 = vadd.f32 %v1795, %v1963
      %v1965 = vpop.f32.mrf.mxu0
      %v1966 = vadd.f32 %v1797, %v1965
      %1967 = vmatmul.bf16.gmra.mxu0 %v981
      %v1968 = vpop.f32.mrf.mxu0
      %v1969 = vadd.f32 %v1800, %v1968
      %v1970 = vpop.f32.mrf.mxu0
      %v1971 = vadd.f32 %v1802, %v1970
      %1972 = vmatmul.bf16.gmra.mxu0 %v985
      %v1973 = vpop.f32.mrf.mxu0
      %v1974 = vadd.f32 %v1805, %v1973
      %v1975 = vpop.f32.mrf.mxu0
      %v1976 = vadd.f32 %v1807, %v1975
      %1977 = vmatmul.bf16.gmra.mxu0 %v989
      %v1978 = vpop.f32.mrf.mxu0
      %v1979 = vadd.f32 %v1810, %v1978
      %v1980 = vpop.f32.mrf.mxu0
      %v1981 = vadd.f32 %v1812, %v1980
      %1982 = vmatmul.bf16.gmra.mxu0 %v993
      %v1983 = vpop.f32.mrf.mxu0
      %v1984 = vadd.f32 %v1815, %v1983
      %v1985 = vpop.f32.mrf.mxu0
      %v1986 = vadd.f32 %v1817, %v1985
      %1987 = vmatmul.bf16.gmra.mxu0 %v997
      %v1988 = vpop.f32.mrf.mxu0
      %v1989 = vadd.f32 %v1820, %v1988
      %v1990 = vpop.f32.mrf.mxu0
      %v1991 = vadd.f32 %v1822, %v1990
      %1992 = vmatmul.bf16.gmra.mxu0 %v1001
      %v1993 = vpop.f32.mrf.mxu0
      %v1994 = vadd.f32 %v1825, %v1993
      %v1995 = vpop.f32.mrf.mxu0
      %v1996 = vadd.f32 %v1827, %v1995
      %1997 = vdwg.mxu0
      %1999 = vset.pattern.permute.xlu0 0
      %2000 = vperm.xlu0 %1999, %v362
      %v2001 = vpop.permute.xlu0 %2000
      %2004 = vset.pattern.permute.xlu0 0
      %2005 = vperm.xlu0 %2004, %v363
      %v2006 = vpop.permute.xlu0 %2005
      %2009 = vset.pattern.permute.xlu0 0
      %2010 = vperm.xlu0 %2009, %v364
      %v2011 = vpop.permute.xlu0 %2010
      %2014 = vset.pattern.permute.xlu0 0
      %2015 = vperm.xlu0 %2014, %v365
      %v2016 = vpop.permute.xlu0 %2015
      %2019 = vset.pattern.permute.xlu0 0
      %2020 = vperm.xlu0 %2019, %v366
      %v2021 = vpop.permute.xlu0 %2020
      %2024 = vset.pattern.permute.xlu0 0
      %2025 = vperm.xlu0 %2024, %v367
      %v2026 = vpop.permute.xlu0 %2025
      %2029 = vset.pattern.permute.xlu0 0
      %2030 = vperm.xlu0 %2029, %v368
      %v2031 = vpop.permute.xlu0 %2030
      %2034 = vset.pattern.permute.xlu0 0
      %2035 = vperm.xlu0 %2034, %v369
      %v2036 = vpop.permute.xlu0 %2035
      %2039 = vset.pattern.permute.xlu0 0
      %2040 = vperm.xlu0 %2039, %v370
      %v2041 = vpop.permute.xlu0 %2040
      %2044 = vset.pattern.permute.xlu0 0
      %2045 = vperm.xlu0 %2044, %v371
      %v2046 = vpop.permute.xlu0 %2045
      %2049 = vset.pattern.permute.xlu0 0
      %2050 = vperm.xlu0 %2049, %v372
      %v2051 = vpop.permute.xlu0 %2050
      %2054 = vset.pattern.permute.xlu0 0
      %2055 = vperm.xlu0 %2054, %v373
      %v2056 = vpop.permute.xlu0 %2055
      %2059 = vset.pattern.permute.xlu0 0
      %2060 = vperm.xlu0 %2059, %v374
      %v2061 = vpop.permute.xlu0 %2060
      %2064 = vset.pattern.permute.xlu0 0
      %2065 = vperm.xlu0 %2064, %v375
      %v2066 = vpop.permute.xlu0 %2065
      %2069 = vset.pattern.permute.xlu0 0
      %2070 = vperm.xlu0 %2069, %v376
      %v2071 = vpop.permute.xlu0 %2070
      %2074 = vset.pattern.permute.xlu0 0
      %2075 = vperm.xlu0 %2074, %v377
      %v2076 = vpop.permute.xlu0 %2075
      %2079 = vset.pattern.permute.xlu0 0
      %2080 = vperm.xlu0 %2079, %v378
      %v2081 = vpop.permute.xlu0 %2080
      %2084 = vset.pattern.permute.xlu0 0
      %2085 = vperm.xlu0 %2084, %v379
      %v2086 = vpop.permute.xlu0 %2085
      %2089 = vset.pattern.permute.xlu0 0
      %2090 = vperm.xlu0 %2089, %v380
      %v2091 = vpop.permute.xlu0 %2090
      %2094 = vset.pattern.permute.xlu0 0
      %2095 = vperm.xlu0 %2094, %v381
      %v2096 = vpop.permute.xlu0 %2095
      %2099 = vset.pattern.permute.xlu0 0
      %2100 = vperm.xlu0 %2099, %v382
      %v2101 = vpop.permute.xlu0 %2100
      %2104 = vset.pattern.permute.xlu0 0
      %2105 = vperm.xlu0 %2104, %v383
      %v2106 = vpop.permute.xlu0 %2105
      %2109 = vset.pattern.permute.xlu0 0
      %2110 = vperm.xlu0 %2109, %v384
      %v2111 = vpop.permute.xlu0 %2110
      %2114 = vset.pattern.permute.xlu0 0
      %2115 = vperm.xlu0 %2114, %v385
      %v2116 = vpop.permute.xlu0 %2115
      %2119 = vset.pattern.permute.xlu0 0
      %2120 = vperm.xlu0 %2119, %v386
      %v2121 = vpop.permute.xlu0 %2120
      %2124 = vset.pattern.permute.xlu0 0
      %2125 = vperm.xlu0 %2124, %v387
      %v2126 = vpop.permute.xlu0 %2125
      %2129 = vset.pattern.permute.xlu0 0
      %2130 = vperm.xlu0 %2129, %v388
      %v2131 = vpop.permute.xlu0 %2130
      %2134 = vset.pattern.permute.xlu0 0
      %2135 = vperm.xlu0 %2134, %v389
      %v2136 = vpop.permute.xlu0 %2135
      %2139 = vset.pattern.permute.xlu0 0
      %2140 = vperm.xlu0 %2139, %v390
      %v2141 = vpop.permute.xlu0 %2140
      %2144 = vset.pattern.permute.xlu0 0
      %2145 = vperm.xlu0 %2144, %v391
      %v2146 = vpop.permute.xlu0 %2145
      %2149 = vset.pattern.permute.xlu0 0
      %2150 = vperm.xlu0 %2149, %v392
      %v2151 = vpop.permute.xlu0 %2150
      %2154 = vset.pattern.permute.xlu0 0
      %2155 = vperm.xlu0 %2154, %v393
      %v2156 = vpop.permute.xlu0 %2155
      %2159 = vset.pattern.permute.xlu0 0
      %2160 = vperm.xlu0 %2159, %v394
      %v2161 = vpop.permute.xlu0 %2160
      %2164 = vset.pattern.permute.xlu0 0
      %2165 = vperm.xlu0 %2164, %v395
      %v2166 = vpop.permute.xlu0 %2165
      %2169 = vset.pattern.permute.xlu0 0
      %2170 = vperm.xlu0 %2169, %v396
      %v2171 = vpop.permute.xlu0 %2170
      %2174 = vset.pattern.permute.xlu0 0
      %2175 = vperm.xlu0 %2174, %v397
      %v2176 = vpop.permute.xlu0 %2175
      %2179 = vset.pattern.permute.xlu0 0
      %2180 = vperm.xlu0 %2179, %v398
      %v2181 = vpop.permute.xlu0 %2180
      %2184 = vset.pattern.permute.xlu0 0
      %2185 = vperm.xlu0 %2184, %v399
      %v2186 = vpop.permute.xlu0 %2185
      %2189 = vset.pattern.permute.xlu0 0
      %2190 = vperm.xlu0 %2189, %v400
      %v2191 = vpop.permute.xlu0 %2190
      %2194 = vset.pattern.permute.xlu0 0
      %2195 = vperm.xlu0 %2194, %v401
      %v2196 = vpop.permute.xlu0 %2195
      %2199 = vset.pattern.permute.xlu0 0
      %2200 = vperm.xlu0 %2199, %v402
      %v2201 = vpop.permute.xlu0 %2200
      %2204 = vset.pattern.permute.xlu0 0
      %2205 = vperm.xlu0 %2204, %v403
      %v2206 = vpop.permute.xlu0 %2205
      %2209 = vset.pattern.permute.xlu0 0
      %2210 = vperm.xlu0 %2209, %v404
      %v2211 = vpop.permute.xlu0 %2210
      %2214 = vset.pattern.permute.xlu0 0
      %2215 = vperm.xlu0 %2214, %v405
      %v2216 = vpop.permute.xlu0 %2215
      %2219 = vset.pattern.permute.xlu0 0
      %2220 = vperm.xlu0 %2219, %v406
      %v2221 = vpop.permute.xlu0 %2220
      %2224 = vset.pattern.permute.xlu0 0
      %2225 = vperm.xlu0 %2224, %v407
      %v2226 = vpop.permute.xlu0 %2225
      %2229 = vset.pattern.permute.xlu0 0
      %2230 = vperm.xlu0 %2229, %v408
      %v2231 = vpop.permute.xlu0 %2230
      %2234 = vset.pattern.permute.xlu0 0
      %2235 = vperm.xlu0 %2234, %v409
      %v2236 = vpop.permute.xlu0 %2235
      %2239 = vset.pattern.permute.xlu0 0
      %2240 = vperm.xlu0 %2239, %v410
      %v2241 = vpop.permute.xlu0 %2240
      %2244 = vset.pattern.permute.xlu0 0
      %2245 = vperm.xlu0 %2244, %v411
      %v2246 = vpop.permute.xlu0 %2245
      %2249 = vset.pattern.permute.xlu0 0
      %2250 = vperm.xlu0 %2249, %v412
      %v2251 = vpop.permute.xlu0 %2250
      %2254 = vset.pattern.permute.xlu0 0
      %2255 = vperm.xlu0 %2254, %v413
      %v2256 = vpop.permute.xlu0 %2255
      %2259 = vset.pattern.permute.xlu0 0
      %2260 = vperm.xlu0 %2259, %v414
      %v2261 = vpop.permute.xlu0 %2260
      %2264 = vset.pattern.permute.xlu0 0
      %2265 = vperm.xlu0 %2264, %v415
      %v2266 = vpop.permute.xlu0 %2265
      %2269 = vset.pattern.permute.xlu0 0
      %2270 = vperm.xlu0 %2269, %v416
      %v2271 = vpop.permute.xlu0 %2270
      %2274 = vset.pattern.permute.xlu0 0
      %2275 = vperm.xlu0 %2274, %v417
      %v2276 = vpop.permute.xlu0 %2275
      %2279 = vset.pattern.permute.xlu0 0
      %2280 = vperm.xlu0 %2279, %v418
      %v2281 = vpop.permute.xlu0 %2280
      %2284 = vset.pattern.permute.xlu0 0
      %2285 = vperm.xlu0 %2284, %v419
      %v2286 = vpop.permute.xlu0 %2285
      %2289 = vset.pattern.permute.xlu0 0
      %2290 = vperm.xlu0 %2289, %v420
      %v2291 = vpop.permute.xlu0 %2290
      %2294 = vset.pattern.permute.xlu0 0
      %2295 = vperm.xlu0 %2294, %v421
      %v2296 = vpop.permute.xlu0 %2295
      %2299 = vset.pattern.permute.xlu0 0
      %2300 = vperm.xlu0 %2299, %v422
      %v2301 = vpop.permute.xlu0 %2300
      %2304 = vset.pattern.permute.xlu0 0
      %2305 = vperm.xlu0 %2304, %v423
      %v2306 = vpop.permute.xlu0 %2305
      %2309 = vset.pattern.permute.xlu0 0
      %2310 = vperm.xlu0 %2309, %v424
      %v2311 = vpop.permute.xlu0 %2310
      %2314 = vset.pattern.permute.xlu0 0
      %2315 = vperm.xlu0 %2314, %v425
      %v2316 = vpop.permute.xlu0 %2315
      %v2318 = vmul.f32 %v2001, %v1839
      %v2319 = vmul.f32 %v2006, %v1841
      %v2320 = vmul.f32 %v2011, %v1844
      %v2321 = vmul.f32 %v2016, %v1846
      %v2322 = vmul.f32 %v2021, %v1849
      %v2323 = vmul.f32 %v2026, %v1851
      %v2324 = vmul.f32 %v2031, %v1854
      %v2325 = vmul.f32 %v2036, %v1856
      %v2326 = vmul.f32 %v2041, %v1859
      %v2327 = vmul.f32 %v2046, %v1861
      %v2328 = vmul.f32 %v2051, %v1864
      %v2329 = vmul.f32 %v2056, %v1866
      %v2330 = vmul.f32 %v2061, %v1869
      %v2331 = vmul.f32 %v2066, %v1871
      %v2332 = vmul.f32 %v2071, %v1874
      %v2333 = vmul.f32 %v2076, %v1876
      %v2334 = vmul.f32 %v2081, %v1879
      %v2335 = vmul.f32 %v2086, %v1881
      %v2336 = vmul.f32 %v2091, %v1884
      %v2337 = vmul.f32 %v2096, %v1886
      %v2338 = vmul.f32 %v2101, %v1889
      %v2339 = vmul.f32 %v2106, %v1891
      %v2340 = vmul.f32 %v2111, %v1894
      %v2341 = vmul.f32 %v2116, %v1896
      %v2342 = vmul.f32 %v2121, %v1899
      %v2343 = vmul.f32 %v2126, %v1901
      %v2344 = vmul.f32 %v2131, %v1904
      %v2345 = vmul.f32 %v2136, %v1906
      %v2346 = vmul.f32 %v2141, %v1909
      %v2347 = vmul.f32 %v2146, %v1911
      %v2348 = vmul.f32 %v2151, %v1914
      %v2349 = vmul.f32 %v2156, %v1916
      %v2350 = vmul.f32 %v2161, %v1919
      %v2351 = vmul.f32 %v2166, %v1921
      %v2352 = vmul.f32 %v2171, %v1924
      %v2353 = vmul.f32 %v2176, %v1926
      %v2354 = vmul.f32 %v2181, %v1929
      %v2355 = vmul.f32 %v2186, %v1931
      %v2356 = vmul.f32 %v2191, %v1934
      %v2357 = vmul.f32 %v2196, %v1936
      %v2358 = vmul.f32 %v2201, %v1939
      %v2359 = vmul.f32 %v2206, %v1941
      %v2360 = vmul.f32 %v2211, %v1944
      %v2361 = vmul.f32 %v2216, %v1946
      %v2362 = vmul.f32 %v2221, %v1949
      %v2363 = vmul.f32 %v2226, %v1951
      %v2364 = vmul.f32 %v2231, %v1954
      %v2365 = vmul.f32 %v2236, %v1956
      %v2366 = vmul.f32 %v2241, %v1959
      %v2367 = vmul.f32 %v2246, %v1961
      %v2368 = vmul.f32 %v2251, %v1964
      %v2369 = vmul.f32 %v2256, %v1966
      %v2370 = vmul.f32 %v2261, %v1969
      %v2371 = vmul.f32 %v2266, %v1971
      %v2372 = vmul.f32 %v2271, %v1974
      %v2373 = vmul.f32 %v2276, %v1976
      %v2374 = vmul.f32 %v2281, %v1979
      %v2375 = vmul.f32 %v2286, %v1981
      %v2376 = vmul.f32 %v2291, %v1984
      %v2377 = vmul.f32 %v2296, %v1986
      %v2378 = vmul.f32 %v2301, %v1989
      %v2379 = vmul.f32 %v2306, %v1991
      %v2380 = vmul.f32 %v2311, %v1994
      %v2381 = vmul.f32 %v2316, %v1996
      %v2382 = vld [vmem:[%s3] sm:$0x1]
      %v2384 = vperm.slane %v2382, 0
      %v2386 = vadd.f32 %v2318, %v2384
      %v2387 = vadd.f32 %v2319, %v2384
      %v2388 = vadd.f32 %v2320, %v2384
      %v2389 = vadd.f32 %v2321, %v2384
      %v2390 = vadd.f32 %v2322, %v2384
      %v2391 = vadd.f32 %v2323, %v2384
      %v2392 = vadd.f32 %v2324, %v2384
      %v2393 = vadd.f32 %v2325, %v2384
      %v2394 = vadd.f32 %v2326, %v2384
      %v2395 = vadd.f32 %v2327, %v2384
      %v2396 = vadd.f32 %v2328, %v2384
      %v2397 = vadd.f32 %v2329, %v2384
      %v2398 = vadd.f32 %v2330, %v2384
      %v2399 = vadd.f32 %v2331, %v2384
      %v2400 = vadd.f32 %v2332, %v2384
      %v2401 = vadd.f32 %v2333, %v2384
      %v2402 = vadd.f32 %v2334, %v2384
      %v2403 = vadd.f32 %v2335, %v2384
      %v2404 = vadd.f32 %v2336, %v2384
      %v2405 = vadd.f32 %v2337, %v2384
      %v2406 = vadd.f32 %v2338, %v2384
      %v2407 = vadd.f32 %v2339, %v2384
      %v2408 = vadd.f32 %v2340, %v2384
      %v2409 = vadd.f32 %v2341, %v2384
      %v2410 = vadd.f32 %v2342, %v2384
      %v2411 = vadd.f32 %v2343, %v2384
      %v2412 = vadd.f32 %v2344, %v2384
      %v2413 = vadd.f32 %v2345, %v2384
      %v2414 = vadd.f32 %v2346, %v2384
      %v2415 = vadd.f32 %v2347, %v2384
      %v2416 = vadd.f32 %v2348, %v2384
      %v2417 = vadd.f32 %v2349, %v2384
      %v2418 = vadd.f32 %v2350, %v2384
      %v2419 = vadd.f32 %v2351, %v2384
      %v2420 = vadd.f32 %v2352, %v2384
      %v2421 = vadd.f32 %v2353, %v2384
      %v2422 = vadd.f32 %v2354, %v2384
      %v2423 = vadd.f32 %v2355, %v2384
      %v2424 = vadd.f32 %v2356, %v2384
      %v2425 = vadd.f32 %v2357, %v2384
      %v2426 = vadd.f32 %v2358, %v2384
      %v2427 = vadd.f32 %v2359, %v2384
      %v2428 = vadd.f32 %v2360, %v2384
      %v2429 = vadd.f32 %v2361, %v2384
      %v2430 = vadd.f32 %v2362, %v2384
      %v2431 = vadd.f32 %v2363, %v2384
      %v2432 = vadd.f32 %v2364, %v2384
      %v2433 = vadd.f32 %v2365, %v2384
      %v2434 = vadd.f32 %v2366, %v2384
      %v2435 = vadd.f32 %v2367, %v2384
      %v2436 = vadd.f32 %v2368, %v2384
      %v2437 = vadd.f32 %v2369, %v2384
      %v2438 = vadd.f32 %v2370, %v2384
      %v2439 = vadd.f32 %v2371, %v2384
      %v2440 = vadd.f32 %v2372, %v2384
      %v2441 = vadd.f32 %v2373, %v2384
      %v2442 = vadd.f32 %v2374, %v2384
      %v2443 = vadd.f32 %v2375, %v2384
      %v2444 = vadd.f32 %v2376, %v2384
      %v2445 = vadd.f32 %v2377, %v2384
      %v2446 = vadd.f32 %v2378, %v2384
      %v2447 = vadd.f32 %v2379, %v2384
      %v2448 = vadd.f32 %v2380, %v2384
      %v2449 = vadd.f32 %v2381, %v2384
      %v2450 = vmax.f32 %v2386, 0.0
      %v2451 = vmax.f32 %v2387, 0.0
      %v2452 = vmax.f32 %v2388, 0.0
      %v2453 = vmax.f32 %v2389, 0.0
      %v2454 = vmax.f32 %v2390, 0.0
      %v2455 = vmax.f32 %v2391, 0.0
      %v2456 = vmax.f32 %v2392, 0.0
      %v2457 = vmax.f32 %v2393, 0.0
      %v2458 = vmax.f32 %v2394, 0.0
      %v2459 = vmax.f32 %v2395, 0.0
      %v2460 = vmax.f32 %v2396, 0.0
      %v2461 = vmax.f32 %v2397, 0.0
      %v2462 = vmax.f32 %v2398, 0.0
      %v2463 = vmax.f32 %v2399, 0.0
      %v2464 = vmax.f32 %v2400, 0.0
      %v2465 = vmax.f32 %v2401, 0.0
      %v2466 = vmax.f32 %v2402, 0.0
      %v2467 = vmax.f32 %v2403, 0.0
      %v2468 = vmax.f32 %v2404, 0.0
      %v2469 = vmax.f32 %v2405, 0.0
      %v2470 = vmax.f32 %v2406, 0.0
      %v2471 = vmax.f32 %v2407, 0.0
      %v2472 = vmax.f32 %v2408, 0.0
      %v2473 = vmax.f32 %v2409, 0.0
      %v2474 = vmax.f32 %v2410, 0.0
      %v2475 = vmax.f32 %v2411, 0.0
      %v2476 = vmax.f32 %v2412, 0.0
      %v2477 = vmax.f32 %v2413, 0.0
      %v2478 = vmax.f32 %v2414, 0.0
      %v2479 = vmax.f32 %v2415, 0.0
      %v2480 = vmax.f32 %v2416, 0.0
      %v2481 = vmax.f32 %v2417, 0.0
      %v2482 = vmax.f32 %v2418, 0.0
      %v2483 = vmax.f32 %v2419, 0.0
      %v2484 = vmax.f32 %v2420, 0.0
      %v2485 = vmax.f32 %v2421, 0.0
      %v2486 = vmax.f32 %v2422, 0.0
      %v2487 = vmax.f32 %v2423, 0.0
      %v2488 = vmax.f32 %v2424, 0.0
      %v2489 = vmax.f32 %v2425, 0.0
      %v2490 = vmax.f32 %v2426, 0.0
      %v2491 = vmax.f32 %v2427, 0.0
      %v2492 = vmax.f32 %v2428, 0.0
      %v2493 = vmax.f32 %v2429, 0.0
      %v2494 = vmax.f32 %v2430, 0.0
      %v2495 = vmax.f32 %v2431, 0.0
      %v2496 = vmax.f32 %v2432, 0.0
      %v2497 = vmax.f32 %v2433, 0.0
      %v2498 = vmax.f32 %v2434, 0.0
      %v2499 = vmax.f32 %v2435, 0.0
      %v2500 = vmax.f32 %v2436, 0.0
      %v2501 = vmax.f32 %v2437, 0.0
      %v2502 = vmax.f32 %v2438, 0.0
      %v2503 = vmax.f32 %v2439, 0.0
      %v2504 = vmax.f32 %v2440, 0.0
      %v2505 = vmax.f32 %v2441, 0.0
      %v2506 = vmax.f32 %v2442, 0.0
      %v2507 = vmax.f32 %v2443, 0.0
      %v2508 = vmax.f32 %v2444, 0.0
      %v2509 = vmax.f32 %v2445, 0.0
      %v2510 = vmax.f32 %v2446, 0.0
      %v2511 = vmax.f32 %v2447, 0.0
      %v2512 = vmax.f32 %v2448, 0.0
      %v2513 = vmax.f32 %v2449, 0.0
      %v2514 = vmul.f32 %v2001, %v2450
      %v2515 = vmul.f32 %v2006, %v2451
      %v2516 = vmul.f32 %v2011, %v2452
      %v2517 = vmul.f32 %v2016, %v2453
      %v2518 = vmul.f32 %v2021, %v2454
      %v2519 = vmul.f32 %v2026, %v2455
      %v2520 = vmul.f32 %v2031, %v2456
      %v2521 = vmul.f32 %v2036, %v2457
      %v2522 = vmul.f32 %v2041, %v2458
      %v2523 = vmul.f32 %v2046, %v2459
      %v2524 = vmul.f32 %v2051, %v2460
      %v2525 = vmul.f32 %v2056, %v2461
      %v2526 = vmul.f32 %v2061, %v2462
      %v2527 = vmul.f32 %v2066, %v2463
      %v2528 = vmul.f32 %v2071, %v2464
      %v2529 = vmul.f32 %v2076, %v2465
      %v2530 = vmul.f32 %v2081, %v2466
      %v2531 = vmul.f32 %v2086, %v2467
      %v2532 = vmul.f32 %v2091, %v2468
      %v2533 = vmul.f32 %v2096, %v2469
      %v2534 = vmul.f32 %v2101, %v2470
      %v2535 = vmul.f32 %v2106, %v2471
      %v2536 = vmul.f32 %v2111, %v2472
      %v2537 = vmul.f32 %v2116, %v2473
      %v2538 = vmul.f32 %v2121, %v2474
      %v2539 = vmul.f32 %v2126, %v2475
      %v2540 = vmul.f32 %v2131, %v2476
      %v2541 = vmul.f32 %v2136, %v2477
      %v2542 = vmul.f32 %v2141, %v2478
      %v2543 = vmul.f32 %v2146, %v2479
      %v2544 = vmul.f32 %v2151, %v2480
      %v2545 = vmul.f32 %v2156, %v2481
      %v2546 = vmul.f32 %v2161, %v2482
      %v2547 = vmul.f32 %v2166, %v2483
      %v2548 = vmul.f32 %v2171, %v2484
      %v2549 = vmul.f32 %v2176, %v2485
      %v2550 = vmul.f32 %v2181, %v2486
      %v2551 = vmul.f32 %v2186, %v2487
      %v2552 = vmul.f32 %v2191, %v2488
      %v2553 = vmul.f32 %v2196, %v2489
      %v2554 = vmul.f32 %v2201, %v2490
      %v2555 = vmul.f32 %v2206, %v2491
      %v2556 = vmul.f32 %v2211, %v2492
      %v2557 = vmul.f32 %v2216, %v2493
      %v2558 = vmul.f32 %v2221, %v2494
      %v2559 = vmul.f32 %v2226, %v2495
      %v2560 = vmul.f32 %v2231, %v2496
      %v2561 = vmul.f32 %v2236, %v2497
      %v2562 = vmul.f32 %v2241, %v2498
      %v2563 = vmul.f32 %v2246, %v2499
      %v2564 = vmul.f32 %v2251, %v2500
      %v2565 = vmul.f32 %v2256, %v2501
      %v2566 = vmul.f32 %v2261, %v2502
      %v2567 = vmul.f32 %v2266, %v2503
      %v2568 = vmul.f32 %v2271, %v2504
      %v2569 = vmul.f32 %v2276, %v2505
      %v2570 = vmul.f32 %v2281, %v2506
      %v2571 = vmul.f32 %v2286, %v2507
      %v2572 = vmul.f32 %v2291, %v2508
      %v2573 = vmul.f32 %v2296, %v2509
      %v2574 = vmul.f32 %v2301, %v2510
      %v2575 = vmul.f32 %v2306, %v2511
      %v2576 = vmul.f32 %v2311, %v2512
      %v2577 = vmul.f32 %v2316, %v2513
      %v2578 = vpack.c.bf16 %v2515, %v2514
      %v2579 = vpack.c.bf16 %v2517, %v2516
      %v2580 = vpack.c.bf16 %v2519, %v2518
      %v2581 = vpack.c.bf16 %v2521, %v2520
      %v2582 = vpack.c.bf16 %v2523, %v2522
      %v2583 = vpack.c.bf16 %v2525, %v2524
      %v2584 = vpack.c.bf16 %v2527, %v2526
      %v2585 = vpack.c.bf16 %v2529, %v2528
      %v2586 = vpack.c.bf16 %v2531, %v2530
      %v2587 = vpack.c.bf16 %v2533, %v2532
      %v2588 = vpack.c.bf16 %v2535, %v2534
      %v2589 = vpack.c.bf16 %v2537, %v2536
      %v2590 = vpack.c.bf16 %v2539, %v2538
      %v2591 = vpack.c.bf16 %v2541, %v2540
      %v2592 = vpack.c.bf16 %v2543, %v2542
      %v2593 = vpack.c.bf16 %v2545, %v2544
      %v2594 = vpack.c.bf16 %v2547, %v2546
      %v2595 = vpack.c.bf16 %v2549, %v2548
      %v2596 = vpack.c.bf16 %v2551, %v2550
      %v2597 = vpack.c.bf16 %v2553, %v2552
      %v2598 = vpack.c.bf16 %v2555, %v2554
      %v2599 = vpack.c.bf16 %v2557, %v2556
      %v2600 = vpack.c.bf16 %v2559, %v2558
      %v2601 = vpack.c.bf16 %v2561, %v2560
      %v2602 = vpack.c.bf16 %v2563, %v2562
      %v2603 = vpack.c.bf16 %v2565, %v2564
      %v2604 = vpack.c.bf16 %v2567, %v2566
      %v2605 = vpack.c.bf16 %v2569, %v2568
      %v2606 = vpack.c.bf16 %v2571, %v2570
      %v2607 = vpack.c.bf16 %v2573, %v2572
      %v2608 = vpack.c.bf16 %v2575, %v2574
      %v2609 = vpack.c.bf16 %v2577, %v2576
      %s2610 = sshra.s32 %s233, 3
      %s2611 = sand.u32 %s233, 7
      %s2612 = smul.u32 %s2610, 4
      %s2613 = smul.addr %s2612, 4
      %s2614 = scalar_lea.vmem %s0, %s2613
      %v2615 = vld [vmem:[%s2614] sm:$0xff]
      %v2616 = vld [vmem:[%s2614 + $0x8] sm:$0xff]
      %v2617 = vld [vmem:[%s2614 + $0x10] sm:$0xff]
      %v2618 = vld [vmem:[%s2614 + $0x18] sm:$0xff]
      %v2619 = vld [vmem:[%s2614 + $0x20] sm:$0xff]
      %v2620 = vld [vmem:[%s2614 + $0x28] sm:$0xff]
      %v2621 = vld [vmem:[%s2614 + $0x30] sm:$0xff]
      %v2622 = vld [vmem:[%s2614 + $0x38] sm:$0xff]
      %v2623 = vld [vmem:[%s2614 + $0x40] sm:$0xff]
      %v2624 = vld [vmem:[%s2614 + $0x48] sm:$0xff]
      %v2625 = vld [vmem:[%s2614 + $0x50] sm:$0xff]
      %v2626 = vld [vmem:[%s2614 + $0x58] sm:$0xff]
      %v2627 = vld [vmem:[%s2614 + $0x60] sm:$0xff]
      %v2628 = vld [vmem:[%s2614 + $0x68] sm:$0xff]
      %v2629 = vld [vmem:[%s2614 + $0x70] sm:$0xff]
      %v2630 = vld [vmem:[%s2614 + $0x78] sm:$0xff]
      %v2631 = vld [vmem:[%s2614 + $0x80] sm:$0xff]
      %v2632 = vld [vmem:[%s2614 + $0x88] sm:$0xff]
      %v2633 = vld [vmem:[%s2614 + $0x90] sm:$0xff]
      %v2634 = vld [vmem:[%s2614 + $0x98] sm:$0xff]
      %v2635 = vld [vmem:[%s2614 + $0xa0] sm:$0xff]
      %v2636 = vld [vmem:[%s2614 + $0xa8] sm:$0xff]
      %v2637 = vld [vmem:[%s2614 + $0xb0] sm:$0xff]
      %v2638 = vld [vmem:[%s2614 + $0xb8] sm:$0xff]
      %v2639 = vld [vmem:[%s2614 + $0xc0] sm:$0xff]
      %v2640 = vld [vmem:[%s2614 + $0xc8] sm:$0xff]
      %v2641 = vld [vmem:[%s2614 + $0xd0] sm:$0xff]
      %v2642 = vld [vmem:[%s2614 + $0xd8] sm:$0xff]
      %v2643 = vld [vmem:[%s2614 + $0xe0] sm:$0xff]
      %v2644 = vld [vmem:[%s2614 + $0xe8] sm:$0xff]
      %v2645 = vld [vmem:[%s2614 + $0xf0] sm:$0xff]
      %v2646 = vld [vmem:[%s2614 + $0xf8] sm:$0xff]
      %v2647 = vld [vmem:[%s2614 + $0x100] sm:$0xff]
      %v2648 = vld [vmem:[%s2614 + $0x108] sm:$0xff]
      %v2649 = vld [vmem:[%s2614 + $0x110] sm:$0xff]
      %v2650 = vld [vmem:[%s2614 + $0x118] sm:$0xff]
      %v2651 = vld [vmem:[%s2614 + $0x120] sm:$0xff]
      %v2652 = vld [vmem:[%s2614 + $0x128] sm:$0xff]
      %v2653 = vld [vmem:[%s2614 + $0x130] sm:$0xff]
      %v2654 = vld [vmem:[%s2614 + $0x138] sm:$0xff]
      %v2655 = vld [vmem:[%s2614 + $0x140] sm:$0xff]
      %v2656 = vld [vmem:[%s2614 + $0x148] sm:$0xff]
      %v2657 = vld [vmem:[%s2614 + $0x150] sm:$0xff]
      %v2658 = vld [vmem:[%s2614 + $0x158] sm:$0xff]
      %v2659 = vld [vmem:[%s2614 + $0x160] sm:$0xff]
      %v2660 = vld [vmem:[%s2614 + $0x168] sm:$0xff]
      %v2661 = vld [vmem:[%s2614 + $0x170] sm:$0xff]
      %v2662 = vld [vmem:[%s2614 + $0x178] sm:$0xff]
      %v2663 = vld [vmem:[%s2614 + $0x180] sm:$0xff]
      %v2664 = vld [vmem:[%s2614 + $0x188] sm:$0xff]
      %v2665 = vld [vmem:[%s2614 + $0x190] sm:$0xff]
      %v2666 = vld [vmem:[%s2614 + $0x198] sm:$0xff]
      %v2667 = vld [vmem:[%s2614 + $0x1a0] sm:$0xff]
      %v2668 = vld [vmem:[%s2614 + $0x1a8] sm:$0xff]
      %v2669 = vld [vmem:[%s2614 + $0x1b0] sm:$0xff]
      %v2670 = vld [vmem:[%s2614 + $0x1b8] sm:$0xff]
      %v2671 = vld [vmem:[%s2614 + $0x1c0] sm:$0xff]
      %v2672 = vld [vmem:[%s2614 + $0x1c8] sm:$0xff]
      %v2673 = vld [vmem:[%s2614 + $0x1d0] sm:$0xff]
      %v2674 = vld [vmem:[%s2614 + $0x1d8] sm:$0xff]
      %v2675 = vld [vmem:[%s2614 + $0x1e0] sm:$0xff]
      %v2676 = vld [vmem:[%s2614 + $0x1e8] sm:$0xff]
      %v2677 = vld [vmem:[%s2614 + $0x1f0] sm:$0xff]
      %v2678 = vld [vmem:[%s2614 + $0x1f8] sm:$0xff]
      %v2743 = vunpack.c.l.b16 %v2615
      %v2744 = vunpack.c.h.b16 %v2615
      %v2745 = vunpack.c.l.b16 %v2616
      %v2746 = vunpack.c.h.b16 %v2616
      %v2747 = vunpack.c.l.b16 %v2617
      %v2748 = vunpack.c.h.b16 %v2617
      %v2749 = vunpack.c.l.b16 %v2618
      %v2750 = vunpack.c.h.b16 %v2618
      %v2751 = vunpack.c.l.b16 %v2619
      %v2752 = vunpack.c.h.b16 %v2619
      %v2753 = vunpack.c.l.b16 %v2620
      %v2754 = vunpack.c.h.b16 %v2620
      %v2755 = vunpack.c.l.b16 %v2621
      %v2756 = vunpack.c.h.b16 %v2621
      %v2757 = vunpack.c.l.b16 %v2622
      %v2758 = vunpack.c.h.b16 %v2622
      %v2759 = vunpack.c.l.b16 %v2623
      %v2760 = vunpack.c.h.b16 %v2623
      %v2761 = vunpack.c.l.b16 %v2624
      %v2762 = vunpack.c.h.b16 %v2624
      %v2763 = vunpack.c.l.b16 %v2625
      %v2764 = vunpack.c.h.b16 %v2625
      %v2765 = vunpack.c.l.b16 %v2626
      %v2766 = vunpack.c.h.b16 %v2626
      %v2767 = vunpack.c.l.b16 %v2627
      %v2768 = vunpack.c.h.b16 %v2627
      %v2769 = vunpack.c.l.b16 %v2628
      %v2770 = vunpack.c.h.b16 %v2628
      %v2771 = vunpack.c.l.b16 %v2629
      %v2772 = vunpack.c.h.b16 %v2629
      %v2773 = vunpack.c.l.b16 %v2630
      %v2774 = vunpack.c.h.b16 %v2630
      %v2775 = vunpack.c.l.b16 %v2631
      %v2776 = vunpack.c.h.b16 %v2631
      %v2777 = vunpack.c.l.b16 %v2632
      %v2778 = vunpack.c.h.b16 %v2632
      %v2779 = vunpack.c.l.b16 %v2633
      %v2780 = vunpack.c.h.b16 %v2633
      %v2781 = vunpack.c.l.b16 %v2634
      %v2782 = vunpack.c.h.b16 %v2634
      %v2783 = vunpack.c.l.b16 %v2635
      %v2784 = vunpack.c.h.b16 %v2635
      %v2785 = vunpack.c.l.b16 %v2636
      %v2786 = vunpack.c.h.b16 %v2636
      %v2787 = vunpack.c.l.b16 %v2637
      %v2788 = vunpack.c.h.b16 %v2637
      %v2789 = vunpack.c.l.b16 %v2638
      %v2790 = vunpack.c.h.b16 %v2638
      %v2791 = vunpack.c.l.b16 %v2639
      %v2792 = vunpack.c.h.b16 %v2639
      %v2793 = vunpack.c.l.b16 %v2640
      %v2794 = vunpack.c.h.b16 %v2640
      %v2795 = vunpack.c.l.b16 %v2641
      %v2796 = vunpack.c.h.b16 %v2641
      %v2797 = vunpack.c.l.b16 %v2642
      %v2798 = vunpack.c.h.b16 %v2642
      %v2799 = vunpack.c.l.b16 %v2643
      %v2800 = vunpack.c.h.b16 %v2643
      %v2801 = vunpack.c.l.b16 %v2644
      %v2802 = vunpack.c.h.b16 %v2644
      %v2803 = vunpack.c.l.b16 %v2645
      %v2804 = vunpack.c.h.b16 %v2645
      %v2805 = vunpack.c.l.b16 %v2646
      %v2806 = vunpack.c.h.b16 %v2646
      %v2807 = vunpack.c.l.b16 %v2647
      %v2808 = vunpack.c.h.b16 %v2647
      %v2809 = vunpack.c.l.b16 %v2648
      %v2810 = vunpack.c.h.b16 %v2648
      %v2811 = vunpack.c.l.b16 %v2649
      %v2812 = vunpack.c.h.b16 %v2649
      %v2813 = vunpack.c.l.b16 %v2650
      %v2814 = vunpack.c.h.b16 %v2650
      %v2815 = vunpack.c.l.b16 %v2651
      %v2816 = vunpack.c.h.b16 %v2651
      %v2817 = vunpack.c.l.b16 %v2652
      %v2818 = vunpack.c.h.b16 %v2652
      %v2819 = vunpack.c.l.b16 %v2653
      %v2820 = vunpack.c.h.b16 %v2653
      %v2821 = vunpack.c.l.b16 %v2654
      %v2822 = vunpack.c.h.b16 %v2654
      %v2823 = vunpack.c.l.b16 %v2655
      %v2824 = vunpack.c.h.b16 %v2655
      %v2825 = vunpack.c.l.b16 %v2656
      %v2826 = vunpack.c.h.b16 %v2656
      %v2827 = vunpack.c.l.b16 %v2657
      %v2828 = vunpack.c.h.b16 %v2657
      %v2829 = vunpack.c.l.b16 %v2658
      %v2830 = vunpack.c.h.b16 %v2658
      %v2831 = vunpack.c.l.b16 %v2659
      %v2832 = vunpack.c.h.b16 %v2659
      %v2833 = vunpack.c.l.b16 %v2660
      %v2834 = vunpack.c.h.b16 %v2660
      %v2835 = vunpack.c.l.b16 %v2661
      %v2836 = vunpack.c.h.b16 %v2661
      %v2837 = vunpack.c.l.b16 %v2662
      %v2838 = vunpack.c.h.b16 %v2662
      %v2839 = vunpack.c.l.b16 %v2663
      %v2840 = vunpack.c.h.b16 %v2663
      %v2841 = vunpack.c.l.b16 %v2664
      %v2842 = vunpack.c.h.b16 %v2664
      %v2843 = vunpack.c.l.b16 %v2665
      %v2844 = vunpack.c.h.b16 %v2665
      %v2845 = vunpack.c.l.b16 %v2666
      %v2846 = vunpack.c.h.b16 %v2666
      %v2847 = vunpack.c.l.b16 %v2667
      %v2848 = vunpack.c.h.b16 %v2667
      %v2849 = vunpack.c.l.b16 %v2668
      %v2850 = vunpack.c.h.b16 %v2668
      %v2851 = vunpack.c.l.b16 %v2669
      %v2852 = vunpack.c.h.b16 %v2669
      %v2853 = vunpack.c.l.b16 %v2670
      %v2854 = vunpack.c.h.b16 %v2670
      %v2855 = vunpack.c.l.b16 %v2671
      %v2856 = vunpack.c.h.b16 %v2671
      %v2857 = vunpack.c.l.b16 %v2672
      %v2858 = vunpack.c.h.b16 %v2672
      %v2859 = vunpack.c.l.b16 %v2673
      %v2860 = vunpack.c.h.b16 %v2673
      %v2861 = vunpack.c.l.b16 %v2674
      %v2862 = vunpack.c.h.b16 %v2674
      %v2863 = vunpack.c.l.b16 %v2675
      %v2864 = vunpack.c.h.b16 %v2675
      %v2865 = vunpack.c.l.b16 %v2676
      %v2866 = vunpack.c.h.b16 %v2676
      %v2867 = vunpack.c.l.b16 %v2677
      %v2868 = vunpack.c.h.b16 %v2677
      %v2869 = vunpack.c.l.b16 %v2678
      %v2870 = vunpack.c.h.b16 %v2678
      %v2871 = vpack.c.b16 %v2747, %v2743
      %v2872 = vpack.c.b16 %v2748, %v2744
      %v2873 = vpack.c.b16 %v2749, %v2745
      %v2874 = vpack.c.b16 %v2750, %v2746
      %v2875 = vpack.c.b16 %v2755, %v2751
      %v2876 = vpack.c.b16 %v2756, %v2752
      %v2877 = vpack.c.b16 %v2757, %v2753
      %v2878 = vpack.c.b16 %v2758, %v2754
      %v2879 = vpack.c.b16 %v2763, %v2759
      %v2880 = vpack.c.b16 %v2764, %v2760
      %v2881 = vpack.c.b16 %v2765, %v2761
      %v2882 = vpack.c.b16 %v2766, %v2762
      %v2883 = vpack.c.b16 %v2771, %v2767
      %v2884 = vpack.c.b16 %v2772, %v2768
      %v2885 = vpack.c.b16 %v2773, %v2769
      %v2886 = vpack.c.b16 %v2774, %v2770
      %v2887 = vpack.c.b16 %v2779, %v2775
      %v2888 = vpack.c.b16 %v2780, %v2776
      %v2889 = vpack.c.b16 %v2781, %v2777
      %v2890 = vpack.c.b16 %v2782, %v2778
      %v2891 = vpack.c.b16 %v2787, %v2783
      %v2892 = vpack.c.b16 %v2788, %v2784
      %v2893 = vpack.c.b16 %v2789, %v2785
      %v2894 = vpack.c.b16 %v2790, %v2786
      %v2895 = vpack.c.b16 %v2795, %v2791
      %v2896 = vpack.c.b16 %v2796, %v2792
      %v2897 = vpack.c.b16 %v2797, %v2793
      %v2898 = vpack.c.b16 %v2798, %v2794
      %v2899 = vpack.c.b16 %v2803, %v2799
      %v2900 = vpack.c.b16 %v2804, %v2800
      %v2901 = vpack.c.b16 %v2805, %v2801
      %v2902 = vpack.c.b16 %v2806, %v2802
      %v2903 = vpack.c.b16 %v2811, %v2807
      %v2904 = vpack.c.b16 %v2812, %v2808
      %v2905 = vpack.c.b16 %v2813, %v2809
      %v2906 = vpack.c.b16 %v2814, %v2810
      %v2907 = vpack.c.b16 %v2819, %v2815
      %v2908 = vpack.c.b16 %v2820, %v2816
      %v2909 = vpack.c.b16 %v2821, %v2817
      %v2910 = vpack.c.b16 %v2822, %v2818
      %v2911 = vpack.c.b16 %v2827, %v2823
      %v2912 = vpack.c.b16 %v2828, %v2824
      %v2913 = vpack.c.b16 %v2829, %v2825
      %v2914 = vpack.c.b16 %v2830, %v2826
      %v2915 = vpack.c.b16 %v2835, %v2831
      %v2916 = vpack.c.b16 %v2836, %v2832
      %v2917 = vpack.c.b16 %v2837, %v2833
      %v2918 = vpack.c.b16 %v2838, %v2834
      %v2919 = vpack.c.b16 %v2843, %v2839
      %v2920 = vpack.c.b16 %v2844, %v2840
      %v2921 = vpack.c.b16 %v2845, %v2841
      %v2922 = vpack.c.b16 %v2846, %v2842
      %v2923 = vpack.c.b16 %v2851, %v2847
      %v2924 = vpack.c.b16 %v2852, %v2848
      %v2925 = vpack.c.b16 %v2853, %v2849
      %v2926 = vpack.c.b16 %v2854, %v2850
      %v2927 = vpack.c.b16 %v2859, %v2855
      %v2928 = vpack.c.b16 %v2860, %v2856
      %v2929 = vpack.c.b16 %v2861, %v2857
      %v2930 = vpack.c.b16 %v2862, %v2858
      %v2931 = vpack.c.b16 %v2867, %v2863
      %v2932 = vpack.c.b16 %v2868, %v2864
      %v2933 = vpack.c.b16 %v2869, %v2865
      %v2934 = vpack.c.b16 %v2870, %v2866
      %2999 = vmatpush.bf16.msra.mxu0 %v2585
      %3000 = vmatpush.bf16.msra.mxu0 %v2584
      %3001 = vmatpush.bf16.msra.mxu0 %v2583
      %3002 = vmatpush.bf16.msra.mxu0 %v2582
      %3003 = vmatpush.bf16.msra.mxu0 %v2581
      %3004 = vmatpush.bf16.msra.mxu0 %v2580
      %3005 = vmatpush.bf16.msra.mxu0 %v2579
      %3006 = vmatpush.bf16.msra.mxu0 %v2578
      %3007 = vmatmul.bf16.gmra.mxu0 %v2871
      %v3008 = vpop.f32.mrf.mxu0
      %v3009 = vadd.f32 0.0, %v3008
      %v3010 = vpop.f32.mrf.mxu0
      %v3011 = vadd.f32 0.0, %v3010
      %3012 = vmatmul.bf16.gmra.mxu0 %v2875
      %v3013 = vpop.f32.mrf.mxu0
      %v3014 = vadd.f32 0.0, %v3013
      %v3015 = vpop.f32.mrf.mxu0
      %v3016 = vadd.f32 0.0, %v3015
      %3017 = vmatmul.bf16.gmra.mxu0 %v2879
      %v3018 = vpop.f32.mrf.mxu0
      %v3019 = vadd.f32 0.0, %v3018
      %v3020 = vpop.f32.mrf.mxu0
      %v3021 = vadd.f32 0.0, %v3020
      %3022 = vmatmul.bf16.gmra.mxu0 %v2883
      %v3023 = vpop.f32.mrf.mxu0
      %v3024 = vadd.f32 0.0, %v3023
      %v3025 = vpop.f32.mrf.mxu0
      %v3026 = vadd.f32 0.0, %v3025
      %3027 = vmatmul.bf16.gmra.mxu0 %v2887
      %v3028 = vpop.f32.mrf.mxu0
      %v3029 = vadd.f32 0.0, %v3028
      %v3030 = vpop.f32.mrf.mxu0
      %v3031 = vadd.f32 0.0, %v3030
      %3032 = vmatmul.bf16.gmra.mxu0 %v2891
      %v3033 = vpop.f32.mrf.mxu0
      %v3034 = vadd.f32 0.0, %v3033
      %v3035 = vpop.f32.mrf.mxu0
      %v3036 = vadd.f32 0.0, %v3035
      %3037 = vmatmul.bf16.gmra.mxu0 %v2895
      %v3038 = vpop.f32.mrf.mxu0
      %v3039 = vadd.f32 0.0, %v3038
      %v3040 = vpop.f32.mrf.mxu0
      %v3041 = vadd.f32 0.0, %v3040
      %3042 = vmatmul.bf16.gmra.mxu0 %v2899
      %v3043 = vpop.f32.mrf.mxu0
      %v3044 = vadd.f32 0.0, %v3043
      %v3045 = vpop.f32.mrf.mxu0
      %v3046 = vadd.f32 0.0, %v3045
      %3047 = vmatmul.bf16.gmra.mxu0 %v2903
      %v3048 = vpop.f32.mrf.mxu0
      %v3049 = vadd.f32 0.0, %v3048
      %v3050 = vpop.f32.mrf.mxu0
      %v3051 = vadd.f32 0.0, %v3050
      %3052 = vmatmul.bf16.gmra.mxu0 %v2907
      %v3053 = vpop.f32.mrf.mxu0
      %v3054 = vadd.f32 0.0, %v3053
      %v3055 = vpop.f32.mrf.mxu0
      %v3056 = vadd.f32 0.0, %v3055
      %3057 = vmatmul.bf16.gmra.mxu0 %v2911
      %v3058 = vpop.f32.mrf.mxu0
      %v3059 = vadd.f32 0.0, %v3058
      %v3060 = vpop.f32.mrf.mxu0
      %v3061 = vadd.f32 0.0, %v3060
      %3062 = vmatmul.bf16.gmra.mxu0 %v2915
      %v3063 = vpop.f32.mrf.mxu0
      %v3064 = vadd.f32 0.0, %v3063
      %v3065 = vpop.f32.mrf.mxu0
      %v3066 = vadd.f32 0.0, %v3065
      %3067 = vmatmul.bf16.gmra.mxu0 %v2919
      %v3068 = vpop.f32.mrf.mxu0
      %v3069 = vadd.f32 0.0, %v3068
      %v3070 = vpop.f32.mrf.mxu0
      %v3071 = vadd.f32 0.0, %v3070
      %3072 = vmatmul.bf16.gmra.mxu0 %v2923
      %v3073 = vpop.f32.mrf.mxu0
      %v3074 = vadd.f32 0.0, %v3073
      %v3075 = vpop.f32.mrf.mxu0
      %v3076 = vadd.f32 0.0, %v3075
      %3077 = vmatmul.bf16.gmra.mxu0 %v2927
      %v3078 = vpop.f32.mrf.mxu0
      %v3079 = vadd.f32 0.0, %v3078
      %v3080 = vpop.f32.mrf.mxu0
      %v3081 = vadd.f32 0.0, %v3080
      %3082 = vmatmul.bf16.gmra.mxu0 %v2931
      %v3083 = vpop.f32.mrf.mxu0
      %v3084 = vadd.f32 0.0, %v3083
      %v3085 = vpop.f32.mrf.mxu0
      %v3086 = vadd.f32 0.0, %v3085
      %3087 = vdwg.mxu0
      %3088 = vmatpush.bf16.msra.mxu0 %v2593
      %3089 = vmatpush.bf16.msra.mxu0 %v2592
      %3090 = vmatpush.bf16.msra.mxu0 %v2591
      %3091 = vmatpush.bf16.msra.mxu0 %v2590
      %3092 = vmatpush.bf16.msra.mxu0 %v2589
      %3093 = vmatpush.bf16.msra.mxu0 %v2588
      %3094 = vmatpush.bf16.msra.mxu0 %v2587
      %3095 = vmatpush.bf16.msra.mxu0 %v2586
      %3096 = vmatmul.bf16.gmra.mxu0 %v2872
      %v3097 = vpop.f32.mrf.mxu0
      %v3098 = vadd.f32 %v3009, %v3097
      %v3099 = vpop.f32.mrf.mxu0
      %v3100 = vadd.f32 %v3011, %v3099
      %3101 = vmatmul.bf16.gmra.mxu0 %v2876
      %v3102 = vpop.f32.mrf.mxu0
      %v3103 = vadd.f32 %v3014, %v3102
      %v3104 = vpop.f32.mrf.mxu0
      %v3105 = vadd.f32 %v3016, %v3104
      %3106 = vmatmul.bf16.gmra.mxu0 %v2880
      %v3107 = vpop.f32.mrf.mxu0
      %v3108 = vadd.f32 %v3019, %v3107
      %v3109 = vpop.f32.mrf.mxu0
      %v3110 = vadd.f32 %v3021, %v3109
      %3111 = vmatmul.bf16.gmra.mxu0 %v2884
      %v3112 = vpop.f32.mrf.mxu0
      %v3113 = vadd.f32 %v3024, %v3112
      %v3114 = vpop.f32.mrf.mxu0
      %v3115 = vadd.f32 %v3026, %v3114
      %3116 = vmatmul.bf16.gmra.mxu0 %v2888
      %v3117 = vpop.f32.mrf.mxu0
      %v3118 = vadd.f32 %v3029, %v3117
      %v3119 = vpop.f32.mrf.mxu0
      %v3120 = vadd.f32 %v3031, %v3119
      %3121 = vmatmul.bf16.gmra.mxu0 %v2892
      %v3122 = vpop.f32.mrf.mxu0
      %v3123 = vadd.f32 %v3034, %v3122
      %v3124 = vpop.f32.mrf.mxu0
      %v3125 = vadd.f32 %v3036, %v3124
      %3126 = vmatmul.bf16.gmra.mxu0 %v2896
      %v3127 = vpop.f32.mrf.mxu0
      %v3128 = vadd.f32 %v3039, %v3127
      %v3129 = vpop.f32.mrf.mxu0
      %v3130 = vadd.f32 %v3041, %v3129
      %3131 = vmatmul.bf16.gmra.mxu0 %v2900
      %v3132 = vpop.f32.mrf.mxu0
      %v3133 = vadd.f32 %v3044, %v3132
      %v3134 = vpop.f32.mrf.mxu0
      %v3135 = vadd.f32 %v3046, %v3134
      %3136 = vmatmul.bf16.gmra.mxu0 %v2904
      %v3137 = vpop.f32.mrf.mxu0
      %v3138 = vadd.f32 %v3049, %v3137
      %v3139 = vpop.f32.mrf.mxu0
      %v3140 = vadd.f32 %v3051, %v3139
      %3141 = vmatmul.bf16.gmra.mxu0 %v2908
      %v3142 = vpop.f32.mrf.mxu0
      %v3143 = vadd.f32 %v3054, %v3142
      %v3144 = vpop.f32.mrf.mxu0
      %v3145 = vadd.f32 %v3056, %v3144
      %3146 = vmatmul.bf16.gmra.mxu0 %v2912
      %v3147 = vpop.f32.mrf.mxu0
      %v3148 = vadd.f32 %v3059, %v3147
      %v3149 = vpop.f32.mrf.mxu0
      %v3150 = vadd.f32 %v3061, %v3149
      %3151 = vmatmul.bf16.gmra.mxu0 %v2916
      %v3152 = vpop.f32.mrf.mxu0
      %v3153 = vadd.f32 %v3064, %v3152
      %v3154 = vpop.f32.mrf.mxu0
      %v3155 = vadd.f32 %v3066, %v3154
      %3156 = vmatmul.bf16.gmra.mxu0 %v2920
      %v3157 = vpop.f32.mrf.mxu0
      %v3158 = vadd.f32 %v3069, %v3157
      %v3159 = vpop.f32.mrf.mxu0
      %v3160 = vadd.f32 %v3071, %v3159
      %3161 = vmatmul.bf16.gmra.mxu0 %v2924
      %v3162 = vpop.f32.mrf.mxu0
      %v3163 = vadd.f32 %v3074, %v3162
      %v3164 = vpop.f32.mrf.mxu0
      %v3165 = vadd.f32 %v3076, %v3164
      %3166 = vmatmul.bf16.gmra.mxu0 %v2928
      %v3167 = vpop.f32.mrf.mxu0
      %v3168 = vadd.f32 %v3079, %v3167
      %v3169 = vpop.f32.mrf.mxu0
      %v3170 = vadd.f32 %v3081, %v3169
      %3171 = vmatmul.bf16.gmra.mxu0 %v2932
      %v3172 = vpop.f32.mrf.mxu0
      %v3173 = vadd.f32 %v3084, %v3172
      %v3174 = vpop.f32.mrf.mxu0
      %v3175 = vadd.f32 %v3086, %v3174
      %3176 = vdwg.mxu0
      %3177 = vmatpush.bf16.msra.mxu0 %v2601
      %3178 = vmatpush.bf16.msra.mxu0 %v2600
      %3179 = vmatpush.bf16.msra.mxu0 %v2599
      %3180 = vmatpush.bf16.msra.mxu0 %v2598
      %3181 = vmatpush.bf16.msra.mxu0 %v2597
      %3182 = vmatpush.bf16.msra.mxu0 %v2596
      %3183 = vmatpush.bf16.msra.mxu0 %v2595
      %3184 = vmatpush.bf16.msra.mxu0 %v2594
      %3185 = vmatmul.bf16.gmra.mxu0 %v2873
      %v3186 = vpop.f32.mrf.mxu0
      %v3187 = vadd.f32 %v3098, %v3186
      %v3188 = vpop.f32.mrf.mxu0
      %v3189 = vadd.f32 %v3100, %v3188
      %3190 = vmatmul.bf16.gmra.mxu0 %v2877
      %v3191 = vpop.f32.mrf.mxu0
      %v3192 = vadd.f32 %v3103, %v3191
      %v3193 = vpop.f32.mrf.mxu0
      %v3194 = vadd.f32 %v3105, %v3193
      %3195 = vmatmul.bf16.gmra.mxu0 %v2881
      %v3196 = vpop.f32.mrf.mxu0
      %v3197 = vadd.f32 %v3108, %v3196
      %v3198 = vpop.f32.mrf.mxu0
      %v3199 = vadd.f32 %v3110, %v3198
      %3200 = vmatmul.bf16.gmra.mxu0 %v2885
      %v3201 = vpop.f32.mrf.mxu0
      %v3202 = vadd.f32 %v3113, %v3201
      %v3203 = vpop.f32.mrf.mxu0
      %v3204 = vadd.f32 %v3115, %v3203
      %3205 = vmatmul.bf16.gmra.mxu0 %v2889
      %v3206 = vpop.f32.mrf.mxu0
      %v3207 = vadd.f32 %v3118, %v3206
      %v3208 = vpop.f32.mrf.mxu0
      %v3209 = vadd.f32 %v3120, %v3208
      %3210 = vmatmul.bf16.gmra.mxu0 %v2893
      %v3211 = vpop.f32.mrf.mxu0
      %v3212 = vadd.f32 %v3123, %v3211
      %v3213 = vpop.f32.mrf.mxu0
      %v3214 = vadd.f32 %v3125, %v3213
      %3215 = vmatmul.bf16.gmra.mxu0 %v2897
      %v3216 = vpop.f32.mrf.mxu0
      %v3217 = vadd.f32 %v3128, %v3216
      %v3218 = vpop.f32.mrf.mxu0
      %v3219 = vadd.f32 %v3130, %v3218
      %3220 = vmatmul.bf16.gmra.mxu0 %v2901
      %v3221 = vpop.f32.mrf.mxu0
      %v3222 = vadd.f32 %v3133, %v3221
      %v3223 = vpop.f32.mrf.mxu0
      %v3224 = vadd.f32 %v3135, %v3223
      %3225 = vmatmul.bf16.gmra.mxu0 %v2905
      %v3226 = vpop.f32.mrf.mxu0
      %v3227 = vadd.f32 %v3138, %v3226
      %v3228 = vpop.f32.mrf.mxu0
      %v3229 = vadd.f32 %v3140, %v3228
      %3230 = vmatmul.bf16.gmra.mxu0 %v2909
      %v3231 = vpop.f32.mrf.mxu0
      %v3232 = vadd.f32 %v3143, %v3231
      %v3233 = vpop.f32.mrf.mxu0
      %v3234 = vadd.f32 %v3145, %v3233
      %3235 = vmatmul.bf16.gmra.mxu0 %v2913
      %v3236 = vpop.f32.mrf.mxu0
      %v3237 = vadd.f32 %v3148, %v3236
      %v3238 = vpop.f32.mrf.mxu0
      %v3239 = vadd.f32 %v3150, %v3238
      %3240 = vmatmul.bf16.gmra.mxu0 %v2917
      %v3241 = vpop.f32.mrf.mxu0
      %v3242 = vadd.f32 %v3153, %v3241
      %v3243 = vpop.f32.mrf.mxu0
      %v3244 = vadd.f32 %v3155, %v3243
      %3245 = vmatmul.bf16.gmra.mxu0 %v2921
      %v3246 = vpop.f32.mrf.mxu0
      %v3247 = vadd.f32 %v3158, %v3246
      %v3248 = vpop.f32.mrf.mxu0
      %v3249 = vadd.f32 %v3160, %v3248
      %3250 = vmatmul.bf16.gmra.mxu0 %v2925
      %v3251 = vpop.f32.mrf.mxu0
      %v3252 = vadd.f32 %v3163, %v3251
      %v3253 = vpop.f32.mrf.mxu0
      %v3254 = vadd.f32 %v3165, %v3253
      %3255 = vmatmul.bf16.gmra.mxu0 %v2929
      %v3256 = vpop.f32.mrf.mxu0
      %v3257 = vadd.f32 %v3168, %v3256
      %v3258 = vpop.f32.mrf.mxu0
      %v3259 = vadd.f32 %v3170, %v3258
      %3260 = vmatmul.bf16.gmra.mxu0 %v2933
      %v3261 = vpop.f32.mrf.mxu0
      %v3262 = vadd.f32 %v3173, %v3261
      %v3263 = vpop.f32.mrf.mxu0
      %v3264 = vadd.f32 %v3175, %v3263
      %3265 = vdwg.mxu0
      %3266 = vmatpush.bf16.msra.mxu0 %v2609
      %3267 = vmatpush.bf16.msra.mxu0 %v2608
      %3268 = vmatpush.bf16.msra.mxu0 %v2607
      %3269 = vmatpush.bf16.msra.mxu0 %v2606
      %3270 = vmatpush.bf16.msra.mxu0 %v2605
      %3271 = vmatpush.bf16.msra.mxu0 %v2604
      %3272 = vmatpush.bf16.msra.mxu0 %v2603
      %3273 = vmatpush.bf16.msra.mxu0 %v2602
      %3274 = vmatmul.bf16.gmra.mxu0 %v2874
      %v3275 = vpop.f32.mrf.mxu0
      %v3276 = vadd.f32 %v3187, %v3275
      %v3277 = vpop.f32.mrf.mxu0
      %v3278 = vadd.f32 %v3189, %v3277
      %3279 = vmatmul.bf16.gmra.mxu0 %v2878
      %v3280 = vpop.f32.mrf.mxu0
      %v3281 = vadd.f32 %v3192, %v3280
      %v3282 = vpop.f32.mrf.mxu0
      %v3283 = vadd.f32 %v3194, %v3282
      %3284 = vmatmul.bf16.gmra.mxu0 %v2882
      %v3285 = vpop.f32.mrf.mxu0
      %v3286 = vadd.f32 %v3197, %v3285
      %v3287 = vpop.f32.mrf.mxu0
      %v3288 = vadd.f32 %v3199, %v3287
      %3289 = vmatmul.bf16.gmra.mxu0 %v2886
      %v3290 = vpop.f32.mrf.mxu0
      %v3291 = vadd.f32 %v3202, %v3290
      %v3292 = vpop.f32.mrf.mxu0
      %v3293 = vadd.f32 %v3204, %v3292
      %3294 = vmatmul.bf16.gmra.mxu0 %v2890
      %v3295 = vpop.f32.mrf.mxu0
      %v3296 = vadd.f32 %v3207, %v3295
      %v3297 = vpop.f32.mrf.mxu0
      %v3298 = vadd.f32 %v3209, %v3297
      %3299 = vmatmul.bf16.gmra.mxu0 %v2894
      %v3300 = vpop.f32.mrf.mxu0
      %v3301 = vadd.f32 %v3212, %v3300
      %v3302 = vpop.f32.mrf.mxu0
      %v3303 = vadd.f32 %v3214, %v3302
      %3304 = vmatmul.bf16.gmra.mxu0 %v2898
      %v3305 = vpop.f32.mrf.mxu0
      %v3306 = vadd.f32 %v3217, %v3305
      %v3307 = vpop.f32.mrf.mxu0
      %v3308 = vadd.f32 %v3219, %v3307
      %3309 = vmatmul.bf16.gmra.mxu0 %v2902
      %v3310 = vpop.f32.mrf.mxu0
      %v3311 = vadd.f32 %v3222, %v3310
      %v3312 = vpop.f32.mrf.mxu0
      %v3313 = vadd.f32 %v3224, %v3312
      %3314 = vmatmul.bf16.gmra.mxu0 %v2906
      %v3315 = vpop.f32.mrf.mxu0
      %v3316 = vadd.f32 %v3227, %v3315
      %v3317 = vpop.f32.mrf.mxu0
      %v3318 = vadd.f32 %v3229, %v3317
      %3319 = vmatmul.bf16.gmra.mxu0 %v2910
      %v3320 = vpop.f32.mrf.mxu0
      %v3321 = vadd.f32 %v3232, %v3320
      %v3322 = vpop.f32.mrf.mxu0
      %v3323 = vadd.f32 %v3234, %v3322
      %3324 = vmatmul.bf16.gmra.mxu0 %v2914
      %v3325 = vpop.f32.mrf.mxu0
      %v3326 = vadd.f32 %v3237, %v3325
      %v3327 = vpop.f32.mrf.mxu0
      %v3328 = vadd.f32 %v3239, %v3327
      %3329 = vmatmul.bf16.gmra.mxu0 %v2918
      %v3330 = vpop.f32.mrf.mxu0
      %v3331 = vadd.f32 %v3242, %v3330
      %v3332 = vpop.f32.mrf.mxu0
      %v3333 = vadd.f32 %v3244, %v3332
      %3334 = vmatmul.bf16.gmra.mxu0 %v2922
      %v3335 = vpop.f32.mrf.mxu0
      %v3336 = vadd.f32 %v3247, %v3335
      %v3337 = vpop.f32.mrf.mxu0
      %v3338 = vadd.f32 %v3249, %v3337
      %3339 = vmatmul.bf16.gmra.mxu0 %v2926
      %v3340 = vpop.f32.mrf.mxu0
      %v3341 = vadd.f32 %v3252, %v3340
      %v3342 = vpop.f32.mrf.mxu0
      %v3343 = vadd.f32 %v3254, %v3342
      %3344 = vmatmul.bf16.gmra.mxu0 %v2930
      %v3345 = vpop.f32.mrf.mxu0
      %v3346 = vadd.f32 %v3257, %v3345
      %v3347 = vpop.f32.mrf.mxu0
      %v3348 = vadd.f32 %v3259, %v3347
      %3349 = vmatmul.bf16.gmra.mxu0 %v2934
      %v3350 = vpop.f32.mrf.mxu0
      %v3351 = vadd.f32 %v3262, %v3350
      %v3352 = vpop.f32.mrf.mxu0
      %v3353 = vadd.f32 %v3264, %v3352
      %3354 = vdwg.mxu0
      %s3355 = scalar_lea.vmem %s2, %s233
      %v3356 = vld [vmem:[%s3355] sm:$0xff]
      %v3357 = vld [vmem:[%s3355 + $0x8] sm:$0xff]
      %v3358 = vld [vmem:[%s3355 + $0x10] sm:$0xff]
      %v3359 = vld [vmem:[%s3355 + $0x18] sm:$0xff]
      %v3360 = vld [vmem:[%s3355 + $0x20] sm:$0xff]
      %v3361 = vld [vmem:[%s3355 + $0x28] sm:$0xff]
      %v3362 = vld [vmem:[%s3355 + $0x30] sm:$0xff]
      %v3363 = vld [vmem:[%s3355 + $0x38] sm:$0xff]
      %v3364 = vld [vmem:[%s3355 + $0x40] sm:$0xff]
      %v3365 = vld [vmem:[%s3355 + $0x48] sm:$0xff]
      %v3366 = vld [vmem:[%s3355 + $0x50] sm:$0xff]
      %v3367 = vld [vmem:[%s3355 + $0x58] sm:$0xff]
      %v3368 = vld [vmem:[%s3355 + $0x60] sm:$0xff]
      %v3369 = vld [vmem:[%s3355 + $0x68] sm:$0xff]
      %v3370 = vld [vmem:[%s3355 + $0x70] sm:$0xff]
      %v3371 = vld [vmem:[%s3355 + $0x78] sm:$0xff]
      %v3372 = vld [vmem:[%s3355 + $0x80] sm:$0xff]
      %v3373 = vld [vmem:[%s3355 + $0x88] sm:$0xff]
      %v3374 = vld [vmem:[%s3355 + $0x90] sm:$0xff]
      %v3375 = vld [vmem:[%s3355 + $0x98] sm:$0xff]
      %v3376 = vld [vmem:[%s3355 + $0xa0] sm:$0xff]
      %v3377 = vld [vmem:[%s3355 + $0xa8] sm:$0xff]
      %v3378 = vld [vmem:[%s3355 + $0xb0] sm:$0xff]
      %v3379 = vld [vmem:[%s3355 + $0xb8] sm:$0xff]
      %v3380 = vld [vmem:[%s3355 + $0xc0] sm:$0xff]
      %v3381 = vld [vmem:[%s3355 + $0xc8] sm:$0xff]
      %v3382 = vld [vmem:[%s3355 + $0xd0] sm:$0xff]
      %v3383 = vld [vmem:[%s3355 + $0xd8] sm:$0xff]
      %v3384 = vld [vmem:[%s3355 + $0xe0] sm:$0xff]
      %v3385 = vld [vmem:[%s3355 + $0xe8] sm:$0xff]
      %v3386 = vld [vmem:[%s3355 + $0xf0] sm:$0xff]
      %v3387 = vld [vmem:[%s3355 + $0xf8] sm:$0xff]
      %v3388 = vpack.c.bf16 %v3278, %v3276
      %v3389 = vpack.c.bf16 %v3283, %v3281
      %v3390 = vpack.c.bf16 %v3288, %v3286
      %v3391 = vpack.c.bf16 %v3293, %v3291
      %v3392 = vpack.c.bf16 %v3298, %v3296
      %v3393 = vpack.c.bf16 %v3303, %v3301
      %v3394 = vpack.c.bf16 %v3308, %v3306
      %v3395 = vpack.c.bf16 %v3313, %v3311
      %v3396 = vpack.c.bf16 %v3318, %v3316
      %v3397 = vpack.c.bf16 %v3323, %v3321
      %v3398 = vpack.c.bf16 %v3328, %v3326
      %v3399 = vpack.c.bf16 %v3333, %v3331
      %v3400 = vpack.c.bf16 %v3338, %v3336
      %v3401 = vpack.c.bf16 %v3343, %v3341
      %v3402 = vpack.c.bf16 %v3348, %v3346
      %v3403 = vpack.c.bf16 %v3353, %v3351
      %v3404 = vld [vmem:[%s4] sm:$0xf]
      %v3405 = vld [vmem:[%s4 + $0x4] sm:$0xf]
      %v3406 = vld [vmem:[%s4 + $0x8] sm:$0xf]
      %v3407 = vld [vmem:[%s4 + $0xc] sm:$0xf]
      %v3408 = vld [vmem:[%s4 + $0x10] sm:$0xf]
      %v3409 = vld [vmem:[%s4 + $0x14] sm:$0xf]
      %v3410 = vld [vmem:[%s4 + $0x18] sm:$0xf]
      %v3411 = vld [vmem:[%s4 + $0x1c] sm:$0xf]
      %v3412 = vld [vmem:[%s4 + $0x20] sm:$0xf]
      %v3413 = vld [vmem:[%s4 + $0x24] sm:$0xf]
      %v3414 = vld [vmem:[%s4 + $0x28] sm:$0xf]
      %v3415 = vld [vmem:[%s4 + $0x2c] sm:$0xf]
      %v3416 = vld [vmem:[%s4 + $0x30] sm:$0xf]
      %v3417 = vld [vmem:[%s4 + $0x34] sm:$0xf]
      %v3418 = vld [vmem:[%s4 + $0x38] sm:$0xf]
      %v3419 = vld [vmem:[%s4 + $0x3c] sm:$0xf]
      %v3436 = vunpack.c.l.b16 %v3404
      %v3437 = vunpack.c.l.b16 %v3405
      %v3438 = vunpack.c.l.b16 %v3406
      %v3439 = vunpack.c.l.b16 %v3407
      %v3440 = vunpack.c.l.b16 %v3408
      %v3441 = vunpack.c.l.b16 %v3409
      %v3442 = vunpack.c.l.b16 %v3410
      %v3443 = vunpack.c.l.b16 %v3411
      %v3444 = vunpack.c.l.b16 %v3412
      %v3445 = vunpack.c.l.b16 %v3413
      %v3446 = vunpack.c.l.b16 %v3414
      %v3447 = vunpack.c.l.b16 %v3415
      %v3448 = vunpack.c.l.b16 %v3416
      %v3449 = vunpack.c.l.b16 %v3417
      %v3450 = vunpack.c.l.b16 %v3418
      %v3451 = vunpack.c.l.b16 %v3419
      %v3452 = vpack.c.b16 %v3437, %v3436
      %v3453 = vpack.c.b16 %v3439, %v3438
      %v3454 = vpack.c.b16 %v3441, %v3440
      %v3455 = vpack.c.b16 %v3443, %v3442
      %v3456 = vpack.c.b16 %v3445, %v3444
      %v3457 = vpack.c.b16 %v3447, %v3446
      %v3458 = vpack.c.b16 %v3449, %v3448
      %v3459 = vpack.c.b16 %v3451, %v3450
      %3468 = vmatpush.bf16.msra.mxu0 %v3459
      %3469 = vmatpush.bf16.msra.mxu0 %v3458
      %3470 = vmatpush.bf16.msra.mxu0 %v3457
      %3471 = vmatpush.bf16.msra.mxu0 %v3456
      %3472 = vmatpush.bf16.msra.mxu0 %v3455
      %3473 = vmatpush.bf16.msra.mxu0 %v3454
      %3474 = vmatpush.bf16.msra.mxu0 %v3453
      %3475 = vmatpush.bf16.msra.mxu0 %v3452
      %3476 = vmatmul.bf16.gmra.mxu0 %v3388
      %v3477 = vpop.f32.mrf.mxu0
      %v3478 = vadd.f32 0.0, %v3477
      %v3479 = vpop.f32.mrf.mxu0
      %v3480 = vadd.f32 0.0, %v3479
      %3481 = vmatmul.bf16.gmra.mxu0 %v3389
      %v3482 = vpop.f32.mrf.mxu0
      %v3483 = vadd.f32 0.0, %v3482
      %v3484 = vpop.f32.mrf.mxu0
      %v3485 = vadd.f32 0.0, %v3484
      %3486 = vmatmul.bf16.gmra.mxu0 %v3390
      %v3487 = vpop.f32.mrf.mxu0
      %v3488 = vadd.f32 0.0, %v3487
      %v3489 = vpop.f32.mrf.mxu0
      %v3490 = vadd.f32 0.0, %v3489
      %3491 = vmatmul.bf16.gmra.mxu0 %v3391
      %v3492 = vpop.f32.mrf.mxu0
      %v3493 = vadd.f32 0.0, %v3492
      %v3494 = vpop.f32.mrf.mxu0
      %v3495 = vadd.f32 0.0, %v3494
      %3496 = vmatmul.bf16.gmra.mxu0 %v3392
      %v3497 = vpop.f32.mrf.mxu0
      %v3498 = vadd.f32 0.0, %v3497
      %v3499 = vpop.f32.mrf.mxu0
      %v3500 = vadd.f32 0.0, %v3499
      %3501 = vmatmul.bf16.gmra.mxu0 %v3393
      %v3502 = vpop.f32.mrf.mxu0
      %v3503 = vadd.f32 0.0, %v3502
      %v3504 = vpop.f32.mrf.mxu0
      %v3505 = vadd.f32 0.0, %v3504
      %3506 = vmatmul.bf16.gmra.mxu0 %v3394
      %v3507 = vpop.f32.mrf.mxu0
      %v3508 = vadd.f32 0.0, %v3507
      %v3509 = vpop.f32.mrf.mxu0
      %v3510 = vadd.f32 0.0, %v3509
      %3511 = vmatmul.bf16.gmra.mxu0 %v3395
      %v3512 = vpop.f32.mrf.mxu0
      %v3513 = vadd.f32 0.0, %v3512
      %v3514 = vpop.f32.mrf.mxu0
      %v3515 = vadd.f32 0.0, %v3514
      %3516 = vmatmul.bf16.gmra.mxu0 %v3396
      %v3517 = vpop.f32.mrf.mxu0
      %v3518 = vadd.f32 0.0, %v3517
      %v3519 = vpop.f32.mrf.mxu0
      %v3520 = vadd.f32 0.0, %v3519
      %3521 = vmatmul.bf16.gmra.mxu0 %v3397
      %v3522 = vpop.f32.mrf.mxu0
      %v3523 = vadd.f32 0.0, %v3522
      %v3524 = vpop.f32.mrf.mxu0
      %v3525 = vadd.f32 0.0, %v3524
      %3526 = vmatmul.bf16.gmra.mxu0 %v3398
      %v3527 = vpop.f32.mrf.mxu0
      %v3528 = vadd.f32 0.0, %v3527
      %v3529 = vpop.f32.mrf.mxu0
      %v3530 = vadd.f32 0.0, %v3529
      %3531 = vmatmul.bf16.gmra.mxu0 %v3399
      %v3532 = vpop.f32.mrf.mxu0
      %v3533 = vadd.f32 0.0, %v3532
      %v3534 = vpop.f32.mrf.mxu0
      %v3535 = vadd.f32 0.0, %v3534
      %3536 = vmatmul.bf16.gmra.mxu0 %v3400
      %v3537 = vpop.f32.mrf.mxu0
      %v3538 = vadd.f32 0.0, %v3537
      %v3539 = vpop.f32.mrf.mxu0
      %v3540 = vadd.f32 0.0, %v3539
      %3541 = vmatmul.bf16.gmra.mxu0 %v3401
      %v3542 = vpop.f32.mrf.mxu0
      %v3543 = vadd.f32 0.0, %v3542
      %v3544 = vpop.f32.mrf.mxu0
      %v3545 = vadd.f32 0.0, %v3544
      %3546 = vmatmul.bf16.gmra.mxu0 %v3402
      %v3547 = vpop.f32.mrf.mxu0
      %v3548 = vadd.f32 0.0, %v3547
      %v3549 = vpop.f32.mrf.mxu0
      %v3550 = vadd.f32 0.0, %v3549
      %3551 = vmatmul.bf16.gmra.mxu0 %v3403
      %v3552 = vpop.f32.mrf.mxu0
      %v3553 = vadd.f32 0.0, %v3552
      %v3554 = vpop.f32.mrf.mxu0
      %v3555 = vadd.f32 0.0, %v3554
      %3556 = vdwg.mxu0
      %3558 = vset.pattern.permute.xlu0 0
      %3559 = vperm.xlu0 %3558, %v3356
      %v3560 = vpop.permute.xlu0 %3559
      %3563 = vset.pattern.permute.xlu0 0
      %3564 = vperm.xlu0 %3563, %v3357
      %v3565 = vpop.permute.xlu0 %3564
      %3568 = vset.pattern.permute.xlu0 0
      %3569 = vperm.xlu0 %3568, %v3358
      %v3570 = vpop.permute.xlu0 %3569
      %3573 = vset.pattern.permute.xlu0 0
      %3574 = vperm.xlu0 %3573, %v3359
      %v3575 = vpop.permute.xlu0 %3574
      %3578 = vset.pattern.permute.xlu0 0
      %3579 = vperm.xlu0 %3578, %v3360
      %v3580 = vpop.permute.xlu0 %3579
      %3583 = vset.pattern.permute.xlu0 0
      %3584 = vperm.xlu0 %3583, %v3361
      %v3585 = vpop.permute.xlu0 %3584
      %3588 = vset.pattern.permute.xlu0 0
      %3589 = vperm.xlu0 %3588, %v3362
      %v3590 = vpop.permute.xlu0 %3589
      %3593 = vset.pattern.permute.xlu0 0
      %3594 = vperm.xlu0 %3593, %v3363
      %v3595 = vpop.permute.xlu0 %3594
      %3598 = vset.pattern.permute.xlu0 0
      %3599 = vperm.xlu0 %3598, %v3364
      %v3600 = vpop.permute.xlu0 %3599
      %3603 = vset.pattern.permute.xlu0 0
      %3604 = vperm.xlu0 %3603, %v3365
      %v3605 = vpop.permute.xlu0 %3604
      %3608 = vset.pattern.permute.xlu0 0
      %3609 = vperm.xlu0 %3608, %v3366
      %v3610 = vpop.permute.xlu0 %3609
      %3613 = vset.pattern.permute.xlu0 0
      %3614 = vperm.xlu0 %3613, %v3367
      %v3615 = vpop.permute.xlu0 %3614
      %3618 = vset.pattern.permute.xlu0 0
      %3619 = vperm.xlu0 %3618, %v3368
      %v3620 = vpop.permute.xlu0 %3619
      %3623 = vset.pattern.permute.xlu0 0
      %3624 = vperm.xlu0 %3623, %v3369
      %v3625 = vpop.permute.xlu0 %3624
      %3628 = vset.pattern.permute.xlu0 0
      %3629 = vperm.xlu0 %3628, %v3370
      %v3630 = vpop.permute.xlu0 %3629
      %3633 = vset.pattern.permute.xlu0 0
      %3634 = vperm.xlu0 %3633, %v3371
      %v3635 = vpop.permute.xlu0 %3634
      %3638 = vset.pattern.permute.xlu0 0
      %3639 = vperm.xlu0 %3638, %v3372
      %v3640 = vpop.permute.xlu0 %3639
      %3643 = vset.pattern.permute.xlu0 0
      %3644 = vperm.xlu0 %3643, %v3373
      %v3645 = vpop.permute.xlu0 %3644
      %3648 = vset.pattern.permute.xlu0 0
      %3649 = vperm.xlu0 %3648, %v3374
      %v3650 = vpop.permute.xlu0 %3649
      %3653 = vset.pattern.permute.xlu0 0
      %3654 = vperm.xlu0 %3653, %v3375
      %v3655 = vpop.permute.xlu0 %3654
      %3658 = vset.pattern.permute.xlu0 0
      %3659 = vperm.xlu0 %3658, %v3376
      %v3660 = vpop.permute.xlu0 %3659
      %3663 = vset.pattern.permute.xlu0 0
      %3664 = vperm.xlu0 %3663, %v3377
      %v3665 = vpop.permute.xlu0 %3664
      %3668 = vset.pattern.permute.xlu0 0
      %3669 = vperm.xlu0 %3668, %v3378
      %v3670 = vpop.permute.xlu0 %3669
      %3673 = vset.pattern.permute.xlu0 0
      %3674 = vperm.xlu0 %3673, %v3379
      %v3675 = vpop.permute.xlu0 %3674
      %3678 = vset.pattern.permute.xlu0 0
      %3679 = vperm.xlu0 %3678, %v3380
      %v3680 = vpop.permute.xlu0 %3679
      %3683 = vset.pattern.permute.xlu0 0
      %3684 = vperm.xlu0 %3683, %v3381
      %v3685 = vpop.permute.xlu0 %3684
      %3688 = vset.pattern.permute.xlu0 0
      %3689 = vperm.xlu0 %3688, %v3382
      %v3690 = vpop.permute.xlu0 %3689
      %3693 = vset.pattern.permute.xlu0 0
      %3694 = vperm.xlu0 %3693, %v3383
      %v3695 = vpop.permute.xlu0 %3694
      %3698 = vset.pattern.permute.xlu0 0
      %3699 = vperm.xlu0 %3698, %v3384
      %v3700 = vpop.permute.xlu0 %3699
      %3703 = vset.pattern.permute.xlu0 0
      %3704 = vperm.xlu0 %3703, %v3385
      %v3705 = vpop.permute.xlu0 %3704
      %3708 = vset.pattern.permute.xlu0 0
      %3709 = vperm.xlu0 %3708, %v3386
      %v3710 = vpop.permute.xlu0 %3709
      %3713 = vset.pattern.permute.xlu0 0
      %3714 = vperm.xlu0 %3713, %v3387
      %v3715 = vpop.permute.xlu0 %3714
      %v3717 = vmul.f32 %v3560, %v3478
      %v3718 = vmul.f32 %v3565, %v3480
      %v3719 = vmul.f32 %v3570, %v3483
      %v3720 = vmul.f32 %v3575, %v3485
      %v3721 = vmul.f32 %v3580, %v3488
      %v3722 = vmul.f32 %v3585, %v3490
      %v3723 = vmul.f32 %v3590, %v3493
      %v3724 = vmul.f32 %v3595, %v3495
      %v3725 = vmul.f32 %v3600, %v3498
      %v3726 = vmul.f32 %v3605, %v3500
      %v3727 = vmul.f32 %v3610, %v3503
      %v3728 = vmul.f32 %v3615, %v3505
      %v3729 = vmul.f32 %v3620, %v3508
      %v3730 = vmul.f32 %v3625, %v3510
      %v3731 = vmul.f32 %v3630, %v3513
      %v3732 = vmul.f32 %v3635, %v3515
      %v3733 = vmul.f32 %v3640, %v3518
      %v3734 = vmul.f32 %v3645, %v3520
      %v3735 = vmul.f32 %v3650, %v3523
      %v3736 = vmul.f32 %v3655, %v3525
      %v3737 = vmul.f32 %v3660, %v3528
      %v3738 = vmul.f32 %v3665, %v3530
      %v3739 = vmul.f32 %v3670, %v3533
      %v3740 = vmul.f32 %v3675, %v3535
      %v3741 = vmul.f32 %v3680, %v3538
      %v3742 = vmul.f32 %v3685, %v3540
      %v3743 = vmul.f32 %v3690, %v3543
      %v3744 = vmul.f32 %v3695, %v3545
      %v3745 = vmul.f32 %v3700, %v3548
      %v3746 = vmul.f32 %v3705, %v3550
      %v3747 = vmul.f32 %v3710, %v3553
      %v3748 = vmul.f32 %v3715, %v3555
      %v3749 = vld [vmem:[%s5] sm:$0x1]
      %v3751 = vperm.slane %v3749, 0
      %v3753 = vadd.f32 %v3717, %v3751
      %v3754 = vadd.f32 %v3718, %v3751
      %v3755 = vadd.f32 %v3719, %v3751
      %v3756 = vadd.f32 %v3720, %v3751
      %v3757 = vadd.f32 %v3721, %v3751
      %v3758 = vadd.f32 %v3722, %v3751
      %v3759 = vadd.f32 %v3723, %v3751
      %v3760 = vadd.f32 %v3724, %v3751
      %v3761 = vadd.f32 %v3725, %v3751
      %v3762 = vadd.f32 %v3726, %v3751
      %v3763 = vadd.f32 %v3727, %v3751
      %v3764 = vadd.f32 %v3728, %v3751
      %v3765 = vadd.f32 %v3729, %v3751
      %v3766 = vadd.f32 %v3730, %v3751
      %v3767 = vadd.f32 %v3731, %v3751
      %v3768 = vadd.f32 %v3732, %v3751
      %v3769 = vadd.f32 %v3733, %v3751
      %v3770 = vadd.f32 %v3734, %v3751
      %v3771 = vadd.f32 %v3735, %v3751
      %v3772 = vadd.f32 %v3736, %v3751
      %v3773 = vadd.f32 %v3737, %v3751
      %v3774 = vadd.f32 %v3738, %v3751
      %v3775 = vadd.f32 %v3739, %v3751
      %v3776 = vadd.f32 %v3740, %v3751
      %v3777 = vadd.f32 %v3741, %v3751
      %v3778 = vadd.f32 %v3742, %v3751
      %v3779 = vadd.f32 %v3743, %v3751
      %v3780 = vadd.f32 %v3744, %v3751
      %v3781 = vadd.f32 %v3745, %v3751
      %v3782 = vadd.f32 %v3746, %v3751
      %v3783 = vadd.f32 %v3747, %v3751
      %v3784 = vadd.f32 %v3748, %v3751
      %v3785 = vlaneseq
      %v3786 = vand.u32 %v3785, 127
      %vm3787 = vcmp.lt.s32.totalorder %v3786, 8
      %v3788 = vsel %vm3787, %v3753, -inf
      %v3789 = vsel %vm3787, %v3754, -inf
      %v3790 = vsel %vm3787, %v3755, -inf
      %v3791 = vsel %vm3787, %v3756, -inf
      %v3792 = vsel %vm3787, %v3757, -inf
      %v3793 = vsel %vm3787, %v3758, -inf
      %v3794 = vsel %vm3787, %v3759, -inf
      %v3795 = vsel %vm3787, %v3760, -inf
      %v3796 = vsel %vm3787, %v3761, -inf
      %v3797 = vsel %vm3787, %v3762, -inf
      %v3798 = vsel %vm3787, %v3763, -inf
      %v3799 = vsel %vm3787, %v3764, -inf
      %v3800 = vsel %vm3787, %v3765, -inf
      %v3801 = vsel %vm3787, %v3766, -inf
      %v3802 = vsel %vm3787, %v3767, -inf
      %v3803 = vsel %vm3787, %v3768, -inf
      %v3804 = vsel %vm3787, %v3769, -inf
      %v3805 = vsel %vm3787, %v3770, -inf
      %v3806 = vsel %vm3787, %v3771, -inf
      %v3807 = vsel %vm3787, %v3772, -inf
      %v3808 = vsel %vm3787, %v3773, -inf
      %v3809 = vsel %vm3787, %v3774, -inf
      %v3810 = vsel %vm3787, %v3775, -inf
      %v3811 = vsel %vm3787, %v3776, -inf
      %v3812 = vsel %vm3787, %v3777, -inf
      %v3813 = vsel %vm3787, %v3778, -inf
      %v3814 = vsel %vm3787, %v3779, -inf
      %v3815 = vsel %vm3787, %v3780, -inf
      %v3816 = vsel %vm3787, %v3781, -inf
      %v3817 = vsel %vm3787, %v3782, -inf
      %v3818 = vsel %vm3787, %v3783, -inf
      %v3819 = vsel %vm3787, %v3784, -inf
      %3820 = vmax.xlane.f32.xlu0 %v3788
      %v3821 = vpop.xlane.xlu0 %3820
      %3822 = vmax.xlane.f32.xlu0 %v3789
      %v3823 = vpop.xlane.xlu0 %3822
      %3824 = vmax.xlane.f32.xlu0 %v3790
      %v3825 = vpop.xlane.xlu0 %3824
      %3826 = vmax.xlane.f32.xlu0 %v3791
      %v3827 = vpop.xlane.xlu0 %3826
      %3828 = vmax.xlane.f32.xlu0 %v3792
      %v3829 = vpop.xlane.xlu0 %3828
      %3830 = vmax.xlane.f32.xlu0 %v3793
      %v3831 = vpop.xlane.xlu0 %3830
      %3832 = vmax.xlane.f32.xlu0 %v3794
      %v3833 = vpop.xlane.xlu0 %3832
      %3834 = vmax.xlane.f32.xlu0 %v3795
      %v3835 = vpop.xlane.xlu0 %3834
      %3836 = vmax.xlane.f32.xlu0 %v3796
      %v3837 = vpop.xlane.xlu0 %3836
      %3838 = vmax.xlane.f32.xlu0 %v3797
      %v3839 = vpop.xlane.xlu0 %3838
      %3840 = vmax.xlane.f32.xlu0 %v3798
      %v3841 = vpop.xlane.xlu0 %3840
      %3842 = vmax.xlane.f32.xlu0 %v3799
      %v3843 = vpop.xlane.xlu0 %3842
      %3844 = vmax.xlane.f32.xlu0 %v3800
      %v3845 = vpop.xlane.xlu0 %3844
      %3846 = vmax.xlane.f32.xlu0 %v3801
      %v3847 = vpop.xlane.xlu0 %3846
      %3848 = vmax.xlane.f32.xlu0 %v3802
      %v3849 = vpop.xlane.xlu0 %3848
      %3850 = vmax.xlane.f32.xlu0 %v3803
      %v3851 = vpop.xlane.xlu0 %3850
      %3852 = vmax.xlane.f32.xlu0 %v3804
      %v3853 = vpop.xlane.xlu0 %3852
      %3854 = vmax.xlane.f32.xlu0 %v3805
      %v3855 = vpop.xlane.xlu0 %3854
      %3856 = vmax.xlane.f32.xlu0 %v3806
      %v3857 = vpop.xlane.xlu0 %3856
      %3858 = vmax.xlane.f32.xlu0 %v3807
      %v3859 = vpop.xlane.xlu0 %3858
      %3860 = vmax.xlane.f32.xlu0 %v3808
      %v3861 = vpop.xlane.xlu0 %3860
      %3862 = vmax.xlane.f32.xlu0 %v3809
      %v3863 = vpop.xlane.xlu0 %3862
      %3864 = vmax.xlane.f32.xlu0 %v3810
      %v3865 = vpop.xlane.xlu0 %3864
      %3866 = vmax.xlane.f32.xlu0 %v3811
      %v3867 = vpop.xlane.xlu0 %3866
      %3868 = vmax.xlane.f32.xlu0 %v3812
      %v3869 = vpop.xlane.xlu0 %3868
      %3870 = vmax.xlane.f32.xlu0 %v3813
      %v3871 = vpop.xlane.xlu0 %3870
      %3872 = vmax.xlane.f32.xlu0 %v3814
      %v3873 = vpop.xlane.xlu0 %3872
      %3874 = vmax.xlane.f32.xlu0 %v3815
      %v3875 = vpop.xlane.xlu0 %3874
      %3876 = vmax.xlane.f32.xlu0 %v3816
      %v3877 = vpop.xlane.xlu0 %3876
      %3878 = vmax.xlane.f32.xlu0 %v3817
      %v3879 = vpop.xlane.xlu0 %3878
      %3880 = vmax.xlane.f32.xlu0 %v3818
      %v3881 = vpop.xlane.xlu0 %3880
      %3882 = vmax.xlane.f32.xlu0 %v3819
      %v3883 = vpop.xlane.xlu0 %3882
      %v3884 = vsub.f32 %v3788, %v3821
      %v3885 = vsub.f32 %v3789, %v3823
      %v3886 = vsub.f32 %v3790, %v3825
      %v3887 = vsub.f32 %v3791, %v3827
      %v3888 = vsub.f32 %v3792, %v3829
      %v3889 = vsub.f32 %v3793, %v3831
      %v3890 = vsub.f32 %v3794, %v3833
      %v3891 = vsub.f32 %v3795, %v3835
      %v3892 = vsub.f32 %v3796, %v3837
      %v3893 = vsub.f32 %v3797, %v3839
      %v3894 = vsub.f32 %v3798, %v3841
      %v3895 = vsub.f32 %v3799, %v3843
      %v3896 = vsub.f32 %v3800, %v3845
      %v3897 = vsub.f32 %v3801, %v3847
      %v3898 = vsub.f32 %v3802, %v3849
      %v3899 = vsub.f32 %v3803, %v3851
      %v3900 = vsub.f32 %v3804, %v3853
      %v3901 = vsub.f32 %v3805, %v3855
      %v3902 = vsub.f32 %v3806, %v3857
      %v3903 = vsub.f32 %v3807, %v3859
      %v3904 = vsub.f32 %v3808, %v3861
      %v3905 = vsub.f32 %v3809, %v3863
      %v3906 = vsub.f32 %v3810, %v3865
      %v3907 = vsub.f32 %v3811, %v3867
      %v3908 = vsub.f32 %v3812, %v3869
      %v3909 = vsub.f32 %v3813, %v3871
      %v3910 = vsub.f32 %v3814, %v3873
      %v3911 = vsub.f32 %v3815, %v3875
      %v3912 = vsub.f32 %v3816, %v3877
      %v3913 = vsub.f32 %v3817, %v3879
      %v3914 = vsub.f32 %v3818, %v3881
      %v3915 = vsub.f32 %v3819, %v3883
      %v3916 = vmul.f32 %v3884, 1.442695
      %v3917 = vpow.pop %v3916
      %v3918 = vmul.f32 %v3885, 1.442695
      %v3919 = vpow.pop %v3918
      %v3920 = vmul.f32 %v3886, 1.442695
      %v3921 = vpow.pop %v3920
      %v3922 = vmul.f32 %v3887, 1.442695
      %v3923 = vpow.pop %v3922
      %v3924 = vmul.f32 %v3888, 1.442695
      %v3925 = vpow.pop %v3924
      %v3926 = vmul.f32 %v3889, 1.442695
      %v3927 = vpow.pop %v3926
      %v3928 = vmul.f32 %v3890, 1.442695
      %v3929 = vpow.pop %v3928
      %v3930 = vmul.f32 %v3891, 1.442695
      %v3931 = vpow.pop %v3930
      %v3932 = vmul.f32 %v3892, 1.442695
      %v3933 = vpow.pop %v3932
      %v3934 = vmul.f32 %v3893, 1.442695
      %v3935 = vpow.pop %v3934
      %v3936 = vmul.f32 %v3894, 1.442695
      %v3937 = vpow.pop %v3936
      %v3938 = vmul.f32 %v3895, 1.442695
      %v3939 = vpow.pop %v3938
      %v3940 = vmul.f32 %v3896, 1.442695
      %v3941 = vpow.pop %v3940
      %v3942 = vmul.f32 %v3897, 1.442695
      %v3943 = vpow.pop %v3942
      %v3944 = vmul.f32 %v3898, 1.442695
      %v3945 = vpow.pop %v3944
      %v3946 = vmul.f32 %v3899, 1.442695
      %v3947 = vpow.pop %v3946
      %v3948 = vmul.f32 %v3900, 1.442695
      %v3949 = vpow.pop %v3948
      %v3950 = vmul.f32 %v3901, 1.442695
      %v3951 = vpow.pop %v3950
      %v3952 = vmul.f32 %v3902, 1.442695
      %v3953 = vpow.pop %v3952
      %v3954 = vmul.f32 %v3903, 1.442695
      %v3955 = vpow.pop %v3954
      %v3956 = vmul.f32 %v3904, 1.442695
      %v3957 = vpow.pop %v3956
      %v3958 = vmul.f32 %v3905, 1.442695
      %v3959 = vpow.pop %v3958
      %v3960 = vmul.f32 %v3906, 1.442695
      %v3961 = vpow.pop %v3960
      %v3962 = vmul.f32 %v3907, 1.442695
      %v3963 = vpow.pop %v3962
      %v3964 = vmul.f32 %v3908, 1.442695
      %v3965 = vpow.pop %v3964
      %v3966 = vmul.f32 %v3909, 1.442695
      %v3967 = vpow.pop %v3966
      %v3968 = vmul.f32 %v3910, 1.442695
      %v3969 = vpow.pop %v3968
      %v3970 = vmul.f32 %v3911, 1.442695
      %v3971 = vpow.pop %v3970
      %v3972 = vmul.f32 %v3912, 1.442695
      %v3973 = vpow.pop %v3972
      %v3974 = vmul.f32 %v3913, 1.442695
      %v3975 = vpow.pop %v3974
      %v3976 = vmul.f32 %v3914, 1.442695
      %v3977 = vpow.pop %v3976
      %v3978 = vmul.f32 %v3915, 1.442695
      %v3979 = vpow.pop %v3978
      %3980 = vadd.xlane.f32.xlu0 %v3917
      %v3981 = vpop.xlane.xlu0 %3980
      %3982 = vadd.xlane.f32.xlu0 %v3919
      %v3983 = vpop.xlane.xlu0 %3982
      %3984 = vadd.xlane.f32.xlu0 %v3921
      %v3985 = vpop.xlane.xlu0 %3984
      %3986 = vadd.xlane.f32.xlu0 %v3923
      %v3987 = vpop.xlane.xlu0 %3986
      %3988 = vadd.xlane.f32.xlu0 %v3925
      %v3989 = vpop.xlane.xlu0 %3988
      %3990 = vadd.xlane.f32.xlu0 %v3927
      %v3991 = vpop.xlane.xlu0 %3990
      %3992 = vadd.xlane.f32.xlu0 %v3929
      %v3993 = vpop.xlane.xlu0 %3992
      %3994 = vadd.xlane.f32.xlu0 %v3931
      %v3995 = vpop.xlane.xlu0 %3994
      %3996 = vadd.xlane.f32.xlu0 %v3933
      %v3997 = vpop.xlane.xlu0 %3996
      %3998 = vadd.xlane.f32.xlu0 %v3935
      %v3999 = vpop.xlane.xlu0 %3998
      %4000 = vadd.xlane.f32.xlu0 %v3937
      %v4001 = vpop.xlane.xlu0 %4000
      %4002 = vadd.xlane.f32.xlu0 %v3939
      %v4003 = vpop.xlane.xlu0 %4002
      %4004 = vadd.xlane.f32.xlu0 %v3941
      %v4005 = vpop.xlane.xlu0 %4004
      %4006 = vadd.xlane.f32.xlu0 %v3943
      %v4007 = vpop.xlane.xlu0 %4006
      %4008 = vadd.xlane.f32.xlu0 %v3945
      %v4009 = vpop.xlane.xlu0 %4008
      %4010 = vadd.xlane.f32.xlu0 %v3947
      %v4011 = vpop.xlane.xlu0 %4010
      %4012 = vadd.xlane.f32.xlu0 %v3949
      %v4013 = vpop.xlane.xlu0 %4012
      %4014 = vadd.xlane.f32.xlu0 %v3951
      %v4015 = vpop.xlane.xlu0 %4014
      %4016 = vadd.xlane.f32.xlu0 %v3953
      %v4017 = vpop.xlane.xlu0 %4016
      %4018 = vadd.xlane.f32.xlu0 %v3955
      %v4019 = vpop.xlane.xlu0 %4018
      %4020 = vadd.xlane.f32.xlu0 %v3957
      %v4021 = vpop.xlane.xlu0 %4020
      %4022 = vadd.xlane.f32.xlu0 %v3959
      %v4023 = vpop.xlane.xlu0 %4022
      %4024 = vadd.xlane.f32.xlu0 %v3961
      %v4025 = vpop.xlane.xlu0 %4024
      %4026 = vadd.xlane.f32.xlu0 %v3963
      %v4027 = vpop.xlane.xlu0 %4026
      %4028 = vadd.xlane.f32.xlu0 %v3965
      %v4029 = vpop.xlane.xlu0 %4028
      %4030 = vadd.xlane.f32.xlu0 %v3967
      %v4031 = vpop.xlane.xlu0 %4030
      %4032 = vadd.xlane.f32.xlu0 %v3969
      %v4033 = vpop.xlane.xlu0 %4032
      %4034 = vadd.xlane.f32.xlu0 %v3971
      %v4035 = vpop.xlane.xlu0 %4034
      %4036 = vadd.xlane.f32.xlu0 %v3973
      %v4037 = vpop.xlane.xlu0 %4036
      %4038 = vadd.xlane.f32.xlu0 %v3975
      %v4039 = vpop.xlane.xlu0 %4038
      %4040 = vadd.xlane.f32.xlu0 %v3977
      %v4041 = vpop.xlane.xlu0 %4040
      %4042 = vadd.xlane.f32.xlu0 %v3979
      %v4043 = vpop.xlane.xlu0 %4042
      %v4044 = vlog2.pop %v3981
      %v4045 = vmul.f32 %v4044, 0.6931472
      %v4046 = vlog2.pop %v3983
      %v4047 = vmul.f32 %v4046, 0.6931472
      %v4048 = vlog2.pop %v3985
      %v4049 = vmul.f32 %v4048, 0.6931472
      %v4050 = vlog2.pop %v3987
      %v4051 = vmul.f32 %v4050, 0.6931472
      %v4052 = vlog2.pop %v3989
      %v4053 = vmul.f32 %v4052, 0.6931472
      %v4054 = vlog2.pop %v3991
      %v4055 = vmul.f32 %v4054, 0.6931472
      %v4056 = vlog2.pop %v3993
      %v4057 = vmul.f32 %v4056, 0.6931472
      %v4058 = vlog2.pop %v3995
      %v4059 = vmul.f32 %v4058, 0.6931472
      %v4060 = vlog2.pop %v3997
      %v4061 = vmul.f32 %v4060, 0.6931472
      %v4062 = vlog2.pop %v3999
      %v4063 = vmul.f32 %v4062, 0.6931472
      %v4064 = vlog2.pop %v4001
      %v4065 = vmul.f32 %v4064, 0.6931472
      %v4066 = vlog2.pop %v4003
      %v4067 = vmul.f32 %v4066, 0.6931472
      %v4068 = vlog2.pop %v4005
      %v4069 = vmul.f32 %v4068, 0.6931472
      %v4070 = vlog2.pop %v4007
      %v4071 = vmul.f32 %v4070, 0.6931472
      %v4072 = vlog2.pop %v4009
      %v4073 = vmul.f32 %v4072, 0.6931472
      %v4074 = vlog2.pop %v4011
      %v4075 = vmul.f32 %v4074, 0.6931472
      %v4076 = vlog2.pop %v4013
      %v4077 = vmul.f32 %v4076, 0.6931472
      %v4078 = vlog2.pop %v4015
      %v4079 = vmul.f32 %v4078, 0.6931472
      %v4080 = vlog2.pop %v4017
      %v4081 = vmul.f32 %v4080, 0.6931472
      %v4082 = vlog2.pop %v4019
      %v4083 = vmul.f32 %v4082, 0.6931472
      %v4084 = vlog2.pop %v4021
      %v4085 = vmul.f32 %v4084, 0.6931472
      %v4086 = vlog2.pop %v4023
      %v4087 = vmul.f32 %v4086, 0.6931472
      %v4088 = vlog2.pop %v4025
      %v4089 = vmul.f32 %v4088, 0.6931472
      %v4090 = vlog2.pop %v4027
      %v4091 = vmul.f32 %v4090, 0.6931472
      %v4092 = vlog2.pop %v4029
      %v4093 = vmul.f32 %v4092, 0.6931472
      %v4094 = vlog2.pop %v4031
      %v4095 = vmul.f32 %v4094, 0.6931472
      %v4096 = vlog2.pop %v4033
      %v4097 = vmul.f32 %v4096, 0.6931472
      %v4098 = vlog2.pop %v4035
      %v4099 = vmul.f32 %v4098, 0.6931472
      %v4100 = vlog2.pop %v4037
      %v4101 = vmul.f32 %v4100, 0.6931472
      %v4102 = vlog2.pop %v4039
      %v4103 = vmul.f32 %v4102, 0.6931472
      %v4104 = vlog2.pop %v4041
      %v4105 = vmul.f32 %v4104, 0.6931472
      %v4106 = vlog2.pop %v4043
      %v4107 = vmul.f32 %v4106, 0.6931472
      %v4108 = vsub.f32 %v3884, %v4045
      %v4109 = vsub.f32 %v3885, %v4047
      %v4110 = vsub.f32 %v3886, %v4049
      %v4111 = vsub.f32 %v3887, %v4051
      %v4112 = vsub.f32 %v3888, %v4053
      %v4113 = vsub.f32 %v3889, %v4055
      %v4114 = vsub.f32 %v3890, %v4057
      %v4115 = vsub.f32 %v3891, %v4059
      %v4116 = vsub.f32 %v3892, %v4061
      %v4117 = vsub.f32 %v3893, %v4063
      %v4118 = vsub.f32 %v3894, %v4065
      %v4119 = vsub.f32 %v3895, %v4067
      %v4120 = vsub.f32 %v3896, %v4069
      %v4121 = vsub.f32 %v3897, %v4071
      %v4122 = vsub.f32 %v3898, %v4073
      %v4123 = vsub.f32 %v3899, %v4075
      %v4124 = vsub.f32 %v3900, %v4077
      %v4125 = vsub.f32 %v3901, %v4079
      %v4126 = vsub.f32 %v3902, %v4081
      %v4127 = vsub.f32 %v3903, %v4083
      %v4128 = vsub.f32 %v3904, %v4085
      %v4129 = vsub.f32 %v3905, %v4087
      %v4130 = vsub.f32 %v3906, %v4089
      %v4131 = vsub.f32 %v3907, %v4091
      %v4132 = vsub.f32 %v3908, %v4093
      %v4133 = vsub.f32 %v3909, %v4095
      %v4134 = vsub.f32 %v3910, %v4097
      %v4135 = vsub.f32 %v3911, %v4099
      %v4136 = vsub.f32 %v3912, %v4101
      %v4137 = vsub.f32 %v3913, %v4103
      %v4138 = vsub.f32 %v3914, %v4105
      %v4139 = vsub.f32 %v3915, %v4107
      %4140 = vst [vmem:[%s231] sm:$0xff] %v4108
      %4141 = vst [vmem:[%s231 + $0x8] sm:$0xff] %v4109
      %4142 = vst [vmem:[%s231 + $0x10] sm:$0xff] %v4110
      %4143 = vst [vmem:[%s231 + $0x18] sm:$0xff] %v4111
      %4144 = vst [vmem:[%s231 + $0x20] sm:$0xff] %v4112
      %4145 = vst [vmem:[%s231 + $0x28] sm:$0xff] %v4113
      %4146 = vst [vmem:[%s231 + $0x30] sm:$0xff] %v4114
      %4147 = vst [vmem:[%s231 + $0x38] sm:$0xff] %v4115
      %4148 = vst [vmem:[%s231 + $0x40] sm:$0xff] %v4116
      %4149 = vst [vmem:[%s231 + $0x48] sm:$0xff] %v4117
      %4150 = vst [vmem:[%s231 + $0x50] sm:$0xff] %v4118
      %4151 = vst [vmem:[%s231 + $0x58] sm:$0xff] %v4119
      %4152 = vst [vmem:[%s231 + $0x60] sm:$0xff] %v4120
      %4153 = vst [vmem:[%s231 + $0x68] sm:$0xff] %v4121
      %4154 = vst [vmem:[%s231 + $0x70] sm:$0xff] %v4122
      %4155 = vst [vmem:[%s231 + $0x78] sm:$0xff] %v4123
      %4156 = vst [vmem:[%s231 + $0x80] sm:$0xff] %v4124
      %4157 = vst [vmem:[%s231 + $0x88] sm:$0xff] %v4125
      %4158 = vst [vmem:[%s231 + $0x90] sm:$0xff] %v4126
      %4159 = vst [vmem:[%s231 + $0x98] sm:$0xff] %v4127
      %4160 = vst [vmem:[%s231 + $0xa0] sm:$0xff] %v4128
      %4161 = vst [vmem:[%s231 + $0xa8] sm:$0xff] %v4129
      %4162 = vst [vmem:[%s231 + $0xb0] sm:$0xff] %v4130
      %4163 = vst [vmem:[%s231 + $0xb8] sm:$0xff] %v4131
      %4164 = vst [vmem:[%s231 + $0xc0] sm:$0xff] %v4132
      %4165 = vst [vmem:[%s231 + $0xc8] sm:$0xff] %v4133
      %4166 = vst [vmem:[%s231 + $0xd0] sm:$0xff] %v4134
      %4167 = vst [vmem:[%s231 + $0xd8] sm:$0xff] %v4135
      %4168 = vst [vmem:[%s231 + $0xe0] sm:$0xff] %v4136
      %4169 = vst [vmem:[%s231 + $0xe8] sm:$0xff] %v4137
      %4170 = vst [vmem:[%s231 + $0xf0] sm:$0xff] %v4138
      %4171 = vst [vmem:[%s231 + $0xf8] sm:$0xff] %v4139
      %s4172 = smul.u32 32, %s17
      %p4173 = scmp.lt.s32.totalorder %s4172, 63
      %s4174 = scalar_select %p4173, %s4172, 63
      %s4175 = smul.addr %s4174, 8
      %s4176 = scalar_lea.vmem %s6, %s4175
      // Predicated region
      $region45: #{gcn_forward.1} parent=43 // pred_check
        %p4177 = pneg %p161
      $region46: #{gcn_forward.1} parent=43 // pred_check_branch
        %4179 = sbr.rel (%p4177) target = $region48
      $region47: #{gcn_forward.1} parent=43 // pred_region
        %s4180 = smul.u32 32, %s17
      $region48: #{gcn_forward.1} parent=43 // pred_fallthru
        _
    $region44: #{gcn_forward.1} parent=5 // pred_fallthru
      _
    %p4181 = scmp.le.s32.totalorder 2, %s12
    // Predicated region
    $region49: #{gcn_forward.1} parent=5 // pred_check
      %p4182 = pneg %p4181
    $region50: #{gcn_forward.1} parent=5 // pred_check_branch
      %4184 = sbr.rel (%p4182) target = $region52
    $region51: #{gcn_forward.1} parent=5 // pred_region
      %s4185 = ssub.s32 %s12, 2
      // Predicated region
      $region53: #{gcn_forward.1} parent=51 // pred_check
        %p4186 = pneg %p167
      $region54: #{gcn_forward.1} parent=51 // pred_check_branch
        %4188 = sbr.rel (%p4186) target = $region56
      $region55: #{gcn_forward.1} parent=51 // pred_region
        %s4189 = smul.u32 32, %s18
        %p4190 = scmp.lt.s32.totalorder %s4189, 63
        %s4191 = scalar_select %p4190, %s4189, 63
        %s4192 = smul.addr %s4191, 8
        %s4193 = scalar_lea.vmem %s6, %s4192
      $region56: #{gcn_forward.1} parent=51 // pred_fallthru
        _
    $region52: #{gcn_forward.1} parent=5 // pred_fallthru
      _
  $region6: #{gcn_forward.1} parent=0 // loop_footer
    %s16 = sadd.s32 1, %s12
  $region7: #{gcn_forward.1} parent=0 // loop_footer_branch
    %11 = sbr.rel target = $region3
  $region8: #{gcn_forward.1} parent=0 // loop_exit
    _

</llo_original>
